<compile_context>
chip_gen: v5e
topology: v5e:2x2
jax: 0.10.0
libtpu: 0.0.40
codegen_flags: <defaults>
</compile_context>

<pallas_src>
import jax
import jax.numpy as jnp
from jax.experimental import pallas as pl
from jax.experimental.pallas import tpu as pltpu

# ------------------------- model hyper-parameters -------------------------
VOCAB = 64
D_MODEL = 32
N_HEADS = 4
D_K = D_MODEL // N_HEADS
D_FF = 64
N_LAYERS = 2
MAX_LEN = 16          # max_len of RelativePositionEmbedding
SEQ = 8
BATCH = 2
LN_EPS = 1e-5

_PARAMS_PER_BLOCK = 12   # wqkv, bqkv, wo, bo, g1, be1, w1, bf1, w2, bf2, g2, be2


# ------------------------------ kernel helpers ------------------------------
def _layer_norm(z, gamma, beta):
    mu = jnp.mean(z, axis=-1, keepdims=True)
    var = jnp.mean((z - mu) ** 2, axis=-1, keepdims=True)
    return (z - mu) * jax.lax.rsqrt(var + LN_EPS) * gamma + beta


def _xl_block(x, rel, wqkv, bqkv, wo, bo, g1, be1, w1, bf1, w2, bf2, g2, be2):
    """One TransformerXLBlock on a (B*S, D) slab.  rel is (H, S, S, d_k).

    NOTE: the K columns of wqkv/bqkv are pre-scaled by 1/sqrt(d_k) in the wrapper,
    so the content score below needs no extra scaling (rel term is unaffected).
    """
    # Fused QKV projection: one (B*S, D) @ (D, 3D) MXU matmul.
    qkv = jnp.dot(x, wqkv, preferred_element_type=jnp.float32) + bqkv        # (B*S, 3D)
    qkv3 = qkv.reshape(BATCH, SEQ, 3 * D_MODEL)                              # single sublane regroup

    head_outs = []
    for h in range(N_HEADS):                                                 # static unroll (4)
        q_h = qkv3[:, :, h * D_K:(h + 1) * D_K]                              # (B, S, d_k)
        k_h = qkv3[:, :, D_MODEL + h * D_K:D_MODEL + (h + 1) * D_K]          # pre-scaled by 1/sqrt(d_k)
        v_h = qkv3[:, :, 2 * D_MODEL + h * D_K:2 * D_MODEL + (h + 1) * D_K]
        rel_h = rel[h]                                                       # (S, S, d_k)

        # Content term (already scaled, see note above), batched over B on the MXU.
        scores = jnp.einsum('bld,brd->blr', q_h, k_h,
                            preferred_element_type=jnp.float32)              # (B, S, S)
        # Relative-position term: scores[b,l,r] += sum_d q_h[b,l,d] * rel_h[l,r,d]
        scores = scores + jnp.sum(q_h[:, :, None, :] * rel_h[None, :, :, :], axis=-1)

        scores = scores - jnp.max(scores, axis=-1, keepdims=True)
        p = jnp.exp(scores)
        p = p * pl.reciprocal(jnp.sum(p, axis=-1, keepdims=True), approx=True)
        o_h = jnp.einsum('blr,brd->bld', p, v_h,
                         preferred_element_type=jnp.float32)                 # (B, S, d_k)
        head_outs.append(o_h.reshape(BATCH * SEQ, D_K))

    attn = jnp.concatenate(head_outs, axis=-1)                               # (B*S, D)
    attn = jnp.dot(attn, wo, preferred_element_type=jnp.float32) + bo

    y1 = _layer_norm(attn + x, g1, be1)
    h1 = jnp.maximum(jnp.dot(y1, w1, preferred_element_type=jnp.float32) + bf1, 0.0)
    ff = jnp.dot(h1, w2, preferred_element_type=jnp.float32) + bf2
    return _layer_norm(ff + y1, g2, be2)


def fused_forward_kernel(*refs):
    """Entire forward (N_LAYERS TransformerXL blocks + final linear), one call.

    refs = (x2d, rel, <12 params per block> * N_LAYERS, w_out, b_out, out).
    """
    x_ref, rel_ref = refs[0], refs[1]
    out_ref = refs[-1]

    x = x_ref[...]                                                           # (B*S, D)
    rel = rel_ref[...]                                                       # (H, S, S, d_k)

    idx = 2
    for _ in range(N_LAYERS):
        block_params = [r[...] for r in refs[idx:idx + _PARAMS_PER_BLOCK]]
        x = _xl_block(x, rel, *block_params)
        idx += _PARAMS_PER_BLOCK

    w_out = refs[idx][...]
    b_out = refs[idx + 1][...]
    out_ref[...] = jnp.dot(x, w_out, preferred_element_type=jnp.float32) + b_out


# ---------------------------- parameter setup -------------------------------
def init_params(key):
    def nrm(k, shape, scale=0.02):
        return (scale * jax.random.normal(k, shape)).astype(jnp.float32)

    keys = jax.random.split(key, 4 + N_LAYERS)
    params = {
        "embed": nrm(keys[0], (VOCAB, D_MODEL)),
        "rel_embed": nrm(keys[1], (2 * MAX_LEN - 1, D_MODEL)),
        "w_out": nrm(keys[2], (D_MODEL, VOCAB)),
        "b_out": jnp.zeros((1, VOCAB), jnp.float32),
        "blocks": [],
    }
    for i in range(N_LAYERS):
        bk = jax.random.split(keys[4 + i], 8)
        params["blocks"].append({
            "wq": nrm(bk[0], (D_MODEL, D_MODEL)), "bq": jnp.zeros((1, D_MODEL), jnp.float32),
            "wk": nrm(bk[1], (D_MODEL, D_MODEL)), "bk": jnp.zeros((1, D_MODEL), jnp.float32),
            "wv": nrm(bk[2], (D_MODEL, D_MODEL)), "bv": jnp.zeros((1, D_MODEL), jnp.float32),
            "wo": nrm(bk[3], (D_MODEL, D_MODEL)), "bo": jnp.zeros((1, D_MODEL), jnp.float32),
            "g1": jnp.ones((1, D_MODEL), jnp.float32), "be1": jnp.zeros((1, D_MODEL), jnp.float32),
            "w1": nrm(bk[4], (D_MODEL, D_FF)), "bf1": jnp.zeros((1, D_FF), jnp.float32),
            "w2": nrm(bk[5], (D_FF, D_MODEL)), "bf2": jnp.zeros((1, D_MODEL), jnp.float32),
            "g2": jnp.ones((1, D_MODEL), jnp.float32), "be2": jnp.zeros((1, D_MODEL), jnp.float32),
        })
    return params


# ------------------------------ full forward ---------------------------------
@jax.jit
def transformer_xl_forward(tokens, params):
    B, S = tokens.shape
    # glue: embedding gathers (no clean Pallas gather needed at this size)
    emb = params["embed"][tokens].astype(jnp.float32)                       # (B, S, D)

    r = jnp.arange(S)
    dist = r[None, :] - r[:, None]
    idx = jnp.clip(dist, -MAX_LEN + 1, MAX_LEN - 1) + MAX_LEN - 1
    rel = params["rel_embed"][idx]                                          # (S, S, D)
    rel = rel.reshape(S, S, N_HEADS, D_K).transpose(2, 0, 1, 3)             # (H, S, S, d_k)
    rel = jnp.asarray(rel, jnp.float32)

    # Flatten parameters, fusing Wq/Wk/Wv (and biases) per block.  The K slice is
    # pre-scaled by 1/sqrt(d_k): mathematically identical to scaling q.k post-dot,
    # and leaves the relative-position term (which only uses Q) untouched.
    inv_sqrt_dk = jnp.float32(1.0 / (D_K ** 0.5))
    flat = []
    for blk in params["blocks"]:
        wqkv = jnp.concatenate([blk["wq"], blk["wk"] * inv_sqrt_dk, blk["wv"]], axis=1)  # (D, 3D)
        bqkv = jnp.concatenate([blk["bq"], blk["bk"] * inv_sqrt_dk, blk["bv"]], axis=1)  # (1, 3D)
        flat += [wqkv, bqkv, blk["wo"], blk["bo"], blk["g1"], blk["be1"],
                 blk["w1"], blk["bf1"], blk["w2"], blk["bf2"], blk["g2"], blk["be2"]]
    flat += [params["w_out"], params["b_out"]]

    x2d = emb.reshape(B * S, D_MODEL)                                       # batch folded into rows

    logits2d = pl.pallas_call(
        fused_forward_kernel,
        out_shape=jax.ShapeDtypeStruct((B * S, VOCAB), jnp.float32),
        compiler_params=pltpu.CompilerParams(vmem_limit_bytes=32 * 1024 * 1024),
    )(x2d, rel, *flat)

    logits = logits2d.reshape(B, S, VOCAB)
    # mems=None case of the reference -> empty new memories per layer.
    new_mems = [jnp.zeros((B, 0, D_MODEL), jnp.float32) for _ in range(N_LAYERS)]
    return logits, new_mems


# ---------------------------------- main --------------------------------------
if __name__ == "__main__":
    key = jax.random.PRNGKey(0)
    k_param, k_tok = jax.random.split(key)
    params = init_params(k_param)
    tokens = jax.random.randint(k_tok, (BATCH, SEQ), 0, VOCAB, dtype=jnp.int32)

    logits, new_mems = transformer_xl_forward(tokens, params)
    logits = jax.block_until_ready(logits)

    assert logits.shape == (BATCH, SEQ, VOCAB), logits.shape
    assert all(m.shape == (BATCH, 0, D_MODEL) for m in new_mems)
    assert bool(jnp.all(jnp.isfinite(logits)))
    print("KERNEL_OK")
</pallas_src>

<mosaic_0001>
module attributes {stable_mosaic.version = 11 : i64} {
  func.func @fused_forward_kernel(%arg0: memref<16x32xf32, #tpu.memory_space<vmem>>, %arg1: memref<4x8x8x8xf32, #tpu.memory_space<vmem>>, %arg2: memref<32x96xf32, #tpu.memory_space<vmem>>, %arg3: memref<1x96xf32, #tpu.memory_space<vmem>>, %arg4: memref<32x32xf32, #tpu.memory_space<vmem>>, %arg5: memref<1x32xf32, #tpu.memory_space<vmem>>, %arg6: memref<1x32xf32, #tpu.memory_space<vmem>>, %arg7: memref<1x32xf32, #tpu.memory_space<vmem>>, %arg8: memref<32x64xf32, #tpu.memory_space<vmem>>, %arg9: memref<1x64xf32, #tpu.memory_space<vmem>>, %arg10: memref<64x32xf32, #tpu.memory_space<vmem>>, %arg11: memref<1x32xf32, #tpu.memory_space<vmem>>, %arg12: memref<1x32xf32, #tpu.memory_space<vmem>>, %arg13: memref<1x32xf32, #tpu.memory_space<vmem>>, %arg14: memref<32x96xf32, #tpu.memory_space<vmem>>, %arg15: memref<1x96xf32, #tpu.memory_space<vmem>>, %arg16: memref<32x32xf32, #tpu.memory_space<vmem>>, %arg17: memref<1x32xf32, #tpu.memory_space<vmem>>, %arg18: memref<1x32xf32, #tpu.memory_space<vmem>>, %arg19: memref<1x32xf32, #tpu.memory_space<vmem>>, %arg20: memref<32x64xf32, #tpu.memory_space<vmem>>, %arg21: memref<1x64xf32, #tpu.memory_space<vmem>>, %arg22: memref<64x32xf32, #tpu.memory_space<vmem>>, %arg23: memref<1x32xf32, #tpu.memory_space<vmem>>, %arg24: memref<1x32xf32, #tpu.memory_space<vmem>>, %arg25: memref<1x32xf32, #tpu.memory_space<vmem>>, %arg26: memref<32x64xf32, #tpu.memory_space<vmem>>, %arg27: memref<1x64xf32, #tpu.memory_space<vmem>>, %arg28: memref<16x64xf32, #tpu.memory_space<vmem>>) attributes {dimension_semantics = [], scalar_prefetch = 0 : i64, scratch_operands = 0 : i64, tpu.core_type = #tpu.core_type<tc>} {
    %c0 = arith.constant 0 : index
    %c0_0 = arith.constant 0 : index
    %0 = vector.load %arg0[%c0, %c0_0] : memref<16x32xf32, #tpu.memory_space<vmem>>, vector<16x32xf32>
    %c0_1 = arith.constant 0 : index
    %c0_2 = arith.constant 0 : index
    %c0_3 = arith.constant 0 : index
    %c0_4 = arith.constant 0 : index
    %1 = vector.load %arg1[%c0_1, %c0_2, %c0_3, %c0_4] : memref<4x8x8x8xf32, #tpu.memory_space<vmem>>, vector<4x8x8x8xf32>
    %c0_5 = arith.constant 0 : index
    %c0_6 = arith.constant 0 : index
    %2 = vector.load %arg2[%c0_5, %c0_6] : memref<32x96xf32, #tpu.memory_space<vmem>>, vector<32x96xf32>
    %c0_7 = arith.constant 0 : index
    %c0_8 = arith.constant 0 : index
    %3 = vector.load %arg3[%c0_7, %c0_8] : memref<1x96xf32, #tpu.memory_space<vmem>>, vector<1x96xf32>
    %c0_9 = arith.constant 0 : index
    %c0_10 = arith.constant 0 : index
    %4 = vector.load %arg4[%c0_9, %c0_10] : memref<32x32xf32, #tpu.memory_space<vmem>>, vector<32x32xf32>
    %c0_11 = arith.constant 0 : index
    %c0_12 = arith.constant 0 : index
    %5 = vector.load %arg5[%c0_11, %c0_12] : memref<1x32xf32, #tpu.memory_space<vmem>>, vector<1x32xf32>
    %c0_13 = arith.constant 0 : index
    %c0_14 = arith.constant 0 : index
    %6 = vector.load %arg6[%c0_13, %c0_14] : memref<1x32xf32, #tpu.memory_space<vmem>>, vector<1x32xf32>
    %c0_15 = arith.constant 0 : index
    %c0_16 = arith.constant 0 : index
    %7 = vector.load %arg7[%c0_15, %c0_16] : memref<1x32xf32, #tpu.memory_space<vmem>>, vector<1x32xf32>
    %c0_17 = arith.constant 0 : index
    %c0_18 = arith.constant 0 : index
    %8 = vector.load %arg8[%c0_17, %c0_18] : memref<32x64xf32, #tpu.memory_space<vmem>>, vector<32x64xf32>
    %c0_19 = arith.constant 0 : index
    %c0_20 = arith.constant 0 : index
    %9 = vector.load %arg9[%c0_19, %c0_20] : memref<1x64xf32, #tpu.memory_space<vmem>>, vector<1x64xf32>
    %c0_21 = arith.constant 0 : index
    %c0_22 = arith.constant 0 : index
    %10 = vector.load %arg10[%c0_21, %c0_22] : memref<64x32xf32, #tpu.memory_space<vmem>>, vector<64x32xf32>
    %c0_23 = arith.constant 0 : index
    %c0_24 = arith.constant 0 : index
    %11 = vector.load %arg11[%c0_23, %c0_24] : memref<1x32xf32, #tpu.memory_space<vmem>>, vector<1x32xf32>
    %c0_25 = arith.constant 0 : index
    %c0_26 = arith.constant 0 : index
    %12 = vector.load %arg12[%c0_25, %c0_26] : memref<1x32xf32, #tpu.memory_space<vmem>>, vector<1x32xf32>
    %c0_27 = arith.constant 0 : index
    %c0_28 = arith.constant 0 : index
    %13 = vector.load %arg13[%c0_27, %c0_28] : memref<1x32xf32, #tpu.memory_space<vmem>>, vector<1x32xf32>
    %cst = arith.constant dense<0.000000e+00> : vector<16x96xf32>
    %14 = tpu.matmul %0, %2, %cst {dimension_numbers = #tpu.dot_dimension_numbers<[1], [0], [0], [1], [0, 0, 1, 1], [], []>} : vector<16x32xf32>, vector<32x96xf32>, vector<16x96xf32> -> vector<16x96xf32>
    %15 = vector.broadcast %3 : vector<1x96xf32> to vector<16x96xf32>
    %16 = arith.addf %14, %15 : vector<16x96xf32>
    %17 = vector.shape_cast %16 : vector<16x96xf32> to vector<2x8x96xf32>
    %18 = vector.extract_strided_slice %17 {offsets = [0, 0, 0], sizes = [2, 8, 8], strides = [1, 1, 1]} : vector<2x8x96xf32> to vector<2x8x8xf32>
    %19 = vector.extract_strided_slice %17 {offsets = [0, 0, 32], sizes = [2, 8, 8], strides = [1, 1, 1]} : vector<2x8x96xf32> to vector<2x8x8xf32>
    %20 = vector.extract_strided_slice %17 {offsets = [0, 0, 64], sizes = [2, 8, 8], strides = [1, 1, 1]} : vector<2x8x96xf32> to vector<2x8x8xf32>
    %21 = vector.extract_strided_slice %1 {offsets = [0, 0, 0, 0], sizes = [1, 8, 8, 8], strides = [1, 1, 1, 1]} : vector<4x8x8x8xf32> to vector<1x8x8x8xf32>
    %22 = vector.shape_cast %21 : vector<1x8x8x8xf32> to vector<8x8x8xf32>
    "tpu.trace_start"() <{level = 10 : i32, message = "bld,brd->blr"}> : () -> ()
    %cst_29 = arith.constant dense<0.000000e+00> : vector<2x8x8xf32>
    %23 = tpu.matmul %18, %19, %cst_29 {dimension_numbers = #tpu.dot_dimension_numbers<[2], [2], [1], [1], [0, 0, 0, 1, 1, 1], [0], [0]>} : vector<2x8x8xf32>, vector<2x8x8xf32>, vector<2x8x8xf32> -> vector<2x8x8xf32>
    "tpu.trace_stop"() : () -> ()
    %24 = vector.shape_cast %18 : vector<2x8x8xf32> to vector<2x8x1x8xf32>
    %25 = vector.shape_cast %22 : vector<8x8x8xf32> to vector<1x8x8x8xf32>
    %26 = vector.broadcast %24 : vector<2x8x1x8xf32> to vector<2x8x8x8xf32>
    %27 = vector.broadcast %25 : vector<1x8x8x8xf32> to vector<2x8x8x8xf32>
    %28 = arith.mulf %26, %27 : vector<2x8x8x8xf32>
    %cst_30 = arith.constant dense<0.000000e+00> : vector<2x8x8xf32>
    %29 = vector.multi_reduction <add>, %28, %cst_30 [3] : vector<2x8x8x8xf32> to vector<2x8x8xf32>
    %30 = arith.addf %23, %29 : vector<2x8x8xf32>
    %cst_31 = arith.constant dense<0xFF800000> : vector<2x8xf32>
    %31 = vector.multi_reduction <maximumf>, %30, %cst_31 [2] : vector<2x8x8xf32> to vector<2x8xf32>
    %32 = vector.shape_cast %31 : vector<2x8xf32> to vector<2x8x1xf32>
    %33 = vector.broadcast %32 : vector<2x8x1xf32> to vector<2x8x8xf32>
    %34 = arith.subf %30, %33 : vector<2x8x8xf32>
    %35 = math.exp %34 : vector<2x8x8xf32>
    %cst_32 = arith.constant dense<0.000000e+00> : vector<2x8xf32>
    %36 = vector.multi_reduction <add>, %35, %cst_32 [2] : vector<2x8x8xf32> to vector<2x8xf32>
    %37 = vector.shape_cast %36 : vector<2x8xf32> to vector<2x8x1xf32>
    %38 = tpu.reciprocal %37 {approx = true} : vector<2x8x1xf32> -> vector<2x8x1xf32>
    %39 = vector.broadcast %38 : vector<2x8x1xf32> to vector<2x8x8xf32>
    %40 = arith.mulf %35, %39 : vector<2x8x8xf32>
    "tpu.trace_start"() <{level = 10 : i32, message = "blr,brd->bld"}> : () -> ()
    %cst_33 = arith.constant dense<0.000000e+00> : vector<2x8x8xf32>
    %41 = tpu.matmul %40, %20, %cst_33 {dimension_numbers = #tpu.dot_dimension_numbers<[2], [1], [1], [2], [0, 0, 0, 1, 1, 2], [0], [0]>} : vector<2x8x8xf32>, vector<2x8x8xf32>, vector<2x8x8xf32> -> vector<2x8x8xf32>
    "tpu.trace_stop"() : () -> ()
    %42 = vector.shape_cast %41 : vector<2x8x8xf32> to vector<16x8xf32>
    %43 = vector.extract_strided_slice %17 {offsets = [0, 0, 8], sizes = [2, 8, 8], strides = [1, 1, 1]} : vector<2x8x96xf32> to vector<2x8x8xf32>
    %44 = vector.extract_strided_slice %17 {offsets = [0, 0, 40], sizes = [2, 8, 8], strides = [1, 1, 1]} : vector<2x8x96xf32> to vector<2x8x8xf32>
    %45 = vector.extract_strided_slice %17 {offsets = [0, 0, 72], sizes = [2, 8, 8], strides = [1, 1, 1]} : vector<2x8x96xf32> to vector<2x8x8xf32>
    %46 = vector.extract_strided_slice %1 {offsets = [1, 0, 0, 0], sizes = [1, 8, 8, 8], strides = [1, 1, 1, 1]} : vector<4x8x8x8xf32> to vector<1x8x8x8xf32>
    %47 = vector.shape_cast %46 : vector<1x8x8x8xf32> to vector<8x8x8xf32>
    "tpu.trace_start"() <{level = 10 : i32, message = "bld,brd->blr"}> : () -> ()
    %cst_34 = arith.constant dense<0.000000e+00> : vector<2x8x8xf32>
    %48 = tpu.matmul %43, %44, %cst_34 {dimension_numbers = #tpu.dot_dimension_numbers<[2], [2], [1], [1], [0, 0, 0, 1, 1, 1], [0], [0]>} : vector<2x8x8xf32>, vector<2x8x8xf32>, vector<2x8x8xf32> -> vector<2x8x8xf32>
    "tpu.trace_stop"() : () -> ()
    %49 = vector.shape_cast %43 : vector<2x8x8xf32> to vector<2x8x1x8xf32>
    %50 = vector.shape_cast %47 : vector<8x8x8xf32> to vector<1x8x8x8xf32>
    %51 = vector.broadcast %49 : vector<2x8x1x8xf32> to vector<2x8x8x8xf32>
    %52 = vector.broadcast %50 : vector<1x8x8x8xf32> to vector<2x8x8x8xf32>
    %53 = arith.mulf %51, %52 : vector<2x8x8x8xf32>
    %cst_35 = arith.constant dense<0.000000e+00> : vector<2x8x8xf32>
    %54 = vector.multi_reduction <add>, %53, %cst_35 [3] : vector<2x8x8x8xf32> to vector<2x8x8xf32>
    %55 = arith.addf %48, %54 : vector<2x8x8xf32>
    %cst_36 = arith.constant dense<0xFF800000> : vector<2x8xf32>
    %56 = vector.multi_reduction <maximumf>, %55, %cst_36 [2] : vector<2x8x8xf32> to vector<2x8xf32>
    %57 = vector.shape_cast %56 : vector<2x8xf32> to vector<2x8x1xf32>
    %58 = vector.broadcast %57 : vector<2x8x1xf32> to vector<2x8x8xf32>
    %59 = arith.subf %55, %58 : vector<2x8x8xf32>
    %60 = math.exp %59 : vector<2x8x8xf32>
    %cst_37 = arith.constant dense<0.000000e+00> : vector<2x8xf32>
    %61 = vector.multi_reduction <add>, %60, %cst_37 [2] : vector<2x8x8xf32> to vector<2x8xf32>
    %62 = vector.shape_cast %61 : vector<2x8xf32> to vector<2x8x1xf32>
    %63 = tpu.reciprocal %62 {approx = true} : vector<2x8x1xf32> -> vector<2x8x1xf32>
    %64 = vector.broadcast %63 : vector<2x8x1xf32> to vector<2x8x8xf32>
    %65 = arith.mulf %60, %64 : vector<2x8x8xf32>
    "tpu.trace_start"() <{level = 10 : i32, message = "blr,brd->bld"}> : () -> ()
    %cst_38 = arith.constant dense<0.000000e+00> : vector<2x8x8xf32>
    %66 = tpu.matmul %65, %45, %cst_38 {dimension_numbers = #tpu.dot_dimension_numbers<[2], [1], [1], [2], [0, 0, 0, 1, 1, 2], [0], [0]>} : vector<2x8x8xf32>, vector<2x8x8xf32>, vector<2x8x8xf32> -> vector<2x8x8xf32>
    "tpu.trace_stop"() : () -> ()
    %67 = vector.shape_cast %66 : vector<2x8x8xf32> to vector<16x8xf32>
    %68 = vector.extract_strided_slice %17 {offsets = [0, 0, 16], sizes = [2, 8, 8], strides = [1, 1, 1]} : vector<2x8x96xf32> to vector<2x8x8xf32>
    %69 = vector.extract_strided_slice %17 {offsets = [0, 0, 48], sizes = [2, 8, 8], strides = [1, 1, 1]} : vector<2x8x96xf32> to vector<2x8x8xf32>
    %70 = vector.extract_strided_slice %17 {offsets = [0, 0, 80], sizes = [2, 8, 8], strides = [1, 1, 1]} : vector<2x8x96xf32> to vector<2x8x8xf32>
    %71 = vector.extract_strided_slice %1 {offsets = [2, 0, 0, 0], sizes = [1, 8, 8, 8], strides = [1, 1, 1, 1]} : vector<4x8x8x8xf32> to vector<1x8x8x8xf32>
    %72 = vector.shape_cast %71 : vector<1x8x8x8xf32> to vector<8x8x8xf32>
    "tpu.trace_start"() <{level = 10 : i32, message = "bld,brd->blr"}> : () -> ()
    %cst_39 = arith.constant dense<0.000000e+00> : vector<2x8x8xf32>
    %73 = tpu.matmul %68, %69, %cst_39 {dimension_numbers = #tpu.dot_dimension_numbers<[2], [2], [1], [1], [0, 0, 0, 1, 1, 1], [0], [0]>} : vector<2x8x8xf32>, vector<2x8x8xf32>, vector<2x8x8xf32> -> vector<2x8x8xf32>
    "tpu.trace_stop"() : () -> ()
    %74 = vector.shape_cast %68 : vector<2x8x8xf32> to vector<2x8x1x8xf32>
    %75 = vector.shape_cast %72 : vector<8x8x8xf32> to vector<1x8x8x8xf32>
    %76 = vector.broadcast %74 : vector<2x8x1x8xf32> to vector<2x8x8x8xf32>
    %77 = vector.broadcast %75 : vector<1x8x8x8xf32> to vector<2x8x8x8xf32>
    %78 = arith.mulf %76, %77 : vector<2x8x8x8xf32>
    %cst_40 = arith.constant dense<0.000000e+00> : vector<2x8x8xf32>
    %79 = vector.multi_reduction <add>, %78, %cst_40 [3] : vector<2x8x8x8xf32> to vector<2x8x8xf32>
    %80 = arith.addf %73, %79 : vector<2x8x8xf32>
    %cst_41 = arith.constant dense<0xFF800000> : vector<2x8xf32>
    %81 = vector.multi_reduction <maximumf>, %80, %cst_41 [2] : vector<2x8x8xf32> to vector<2x8xf32>
    %82 = vector.shape_cast %81 : vector<2x8xf32> to vector<2x8x1xf32>
    %83 = vector.broadcast %82 : vector<2x8x1xf32> to vector<2x8x8xf32>
    %84 = arith.subf %80, %83 : vector<2x8x8xf32>
    %85 = math.exp %84 : vector<2x8x8xf32>
    %cst_42 = arith.constant dense<0.000000e+00> : vector<2x8xf32>
    %86 = vector.multi_reduction <add>, %85, %cst_42 [2] : vector<2x8x8xf32> to vector<2x8xf32>
    %87 = vector.shape_cast %86 : vector<2x8xf32> to vector<2x8x1xf32>
    %88 = tpu.reciprocal %87 {approx = true} : vector<2x8x1xf32> -> vector<2x8x1xf32>
    %89 = vector.broadcast %88 : vector<2x8x1xf32> to vector<2x8x8xf32>
    %90 = arith.mulf %85, %89 : vector<2x8x8xf32>
    "tpu.trace_start"() <{level = 10 : i32, message = "blr,brd->bld"}> : () -> ()
    %cst_43 = arith.constant dense<0.000000e+00> : vector<2x8x8xf32>
    %91 = tpu.matmul %90, %70, %cst_43 {dimension_numbers = #tpu.dot_dimension_numbers<[2], [1], [1], [2], [0, 0, 0, 1, 1, 2], [0], [0]>} : vector<2x8x8xf32>, vector<2x8x8xf32>, vector<2x8x8xf32> -> vector<2x8x8xf32>
    "tpu.trace_stop"() : () -> ()
    %92 = vector.shape_cast %91 : vector<2x8x8xf32> to vector<16x8xf32>
    %93 = vector.extract_strided_slice %17 {offsets = [0, 0, 24], sizes = [2, 8, 8], strides = [1, 1, 1]} : vector<2x8x96xf32> to vector<2x8x8xf32>
    %94 = vector.extract_strided_slice %17 {offsets = [0, 0, 56], sizes = [2, 8, 8], strides = [1, 1, 1]} : vector<2x8x96xf32> to vector<2x8x8xf32>
    %95 = vector.extract_strided_slice %17 {offsets = [0, 0, 88], sizes = [2, 8, 8], strides = [1, 1, 1]} : vector<2x8x96xf32> to vector<2x8x8xf32>
    %96 = vector.extract_strided_slice %1 {offsets = [3, 0, 0, 0], sizes = [1, 8, 8, 8], strides = [1, 1, 1, 1]} : vector<4x8x8x8xf32> to vector<1x8x8x8xf32>
    %97 = vector.shape_cast %96 : vector<1x8x8x8xf32> to vector<8x8x8xf32>
    "tpu.trace_start"() <{level = 10 : i32, message = "bld,brd->blr"}> : () -> ()
    %cst_44 = arith.constant dense<0.000000e+00> : vector<2x8x8xf32>
    %98 = tpu.matmul %93, %94, %cst_44 {dimension_numbers = #tpu.dot_dimension_numbers<[2], [2], [1], [1], [0, 0, 0, 1, 1, 1], [0], [0]>} : vector<2x8x8xf32>, vector<2x8x8xf32>, vector<2x8x8xf32> -> vector<2x8x8xf32>
    "tpu.trace_stop"() : () -> ()
    %99 = vector.shape_cast %93 : vector<2x8x8xf32> to vector<2x8x1x8xf32>
    %100 = vector.shape_cast %97 : vector<8x8x8xf32> to vector<1x8x8x8xf32>
    %101 = vector.broadcast %99 : vector<2x8x1x8xf32> to vector<2x8x8x8xf32>
    %102 = vector.broadcast %100 : vector<1x8x8x8xf32> to vector<2x8x8x8xf32>
    %103 = arith.mulf %101, %102 : vector<2x8x8x8xf32>
    %cst_45 = arith.constant dense<0.000000e+00> : vector<2x8x8xf32>
    %104 = vector.multi_reduction <add>, %103, %cst_45 [3] : vector<2x8x8x8xf32> to vector<2x8x8xf32>
    %105 = arith.addf %98, %104 : vector<2x8x8xf32>
    %cst_46 = arith.constant dense<0xFF800000> : vector<2x8xf32>
    %106 = vector.multi_reduction <maximumf>, %105, %cst_46 [2] : vector<2x8x8xf32> to vector<2x8xf32>
    %107 = vector.shape_cast %106 : vector<2x8xf32> to vector<2x8x1xf32>
    %108 = vector.broadcast %107 : vector<2x8x1xf32> to vector<2x8x8xf32>
    %109 = arith.subf %105, %108 : vector<2x8x8xf32>
    %110 = math.exp %109 : vector<2x8x8xf32>
    %cst_47 = arith.constant dense<0.000000e+00> : vector<2x8xf32>
    %111 = vector.multi_reduction <add>, %110, %cst_47 [2] : vector<2x8x8xf32> to vector<2x8xf32>
    %112 = vector.shape_cast %111 : vector<2x8xf32> to vector<2x8x1xf32>
    %113 = tpu.reciprocal %112 {approx = true} : vector<2x8x1xf32> -> vector<2x8x1xf32>
    %114 = vector.broadcast %113 : vector<2x8x1xf32> to vector<2x8x8xf32>
    %115 = arith.mulf %110, %114 : vector<2x8x8xf32>
    "tpu.trace_start"() <{level = 10 : i32, message = "blr,brd->bld"}> : () -> ()
    %cst_48 = arith.constant dense<0.000000e+00> : vector<2x8x8xf32>
    %116 = tpu.matmul %115, %95, %cst_48 {dimension_numbers = #tpu.dot_dimension_numbers<[2], [1], [1], [2], [0, 0, 0, 1, 1, 2], [0], [0]>} : vector<2x8x8xf32>, vector<2x8x8xf32>, vector<2x8x8xf32> -> vector<2x8x8xf32>
    "tpu.trace_stop"() : () -> ()
    %117 = vector.shape_cast %116 : vector<2x8x8xf32> to vector<16x8xf32>
    %118 = tpu.concatenate %42, %67, %92, %117 in 1 : vector<16x8xf32>, vector<16x8xf32>, vector<16x8xf32>, vector<16x8xf32> -> vector<16x32xf32>
    %cst_49 = arith.constant dense<0.000000e+00> : vector<16x32xf32>
    %119 = tpu.matmul %118, %4, %cst_49 {dimension_numbers = #tpu.dot_dimension_numbers<[1], [0], [0], [1], [0, 0, 1, 1], [], []>} : vector<16x32xf32>, vector<32x32xf32>, vector<16x32xf32> -> vector<16x32xf32>
    %120 = vector.broadcast %5 : vector<1x32xf32> to vector<16x32xf32>
    %121 = arith.addf %119, %120 : vector<16x32xf32>
    %122 = arith.addf %121, %0 : vector<16x32xf32>
    %cst_50 = arith.constant dense<0.000000e+00> : vector<16xf32>
    %123 = vector.multi_reduction <add>, %122, %cst_50 [1] : vector<16x32xf32> to vector<16xf32>
    %124 = vector.shape_cast %123 : vector<16xf32> to vector<16x1xf32>
    %cst_51 = arith.constant 3.200000e+01 : f32
    %125 = vector.broadcast %cst_51 : f32 to vector<16x1xf32>
    %126 = arith.divf %124, %125 : vector<16x1xf32>
    %127 = vector.broadcast %126 : vector<16x1xf32> to vector<16x32xf32>
    %128 = arith.subf %122, %127 : vector<16x32xf32>
    %129 = arith.mulf %128, %128 : vector<16x32xf32>
    %cst_52 = arith.constant dense<0.000000e+00> : vector<16xf32>
    %130 = vector.multi_reduction <add>, %129, %cst_52 [1] : vector<16x32xf32> to vector<16xf32>
    %131 = vector.shape_cast %130 : vector<16xf32> to vector<16x1xf32>
    %cst_53 = arith.constant 3.200000e+01 : f32
    %132 = vector.broadcast %cst_53 : f32 to vector<16x1xf32>
    %133 = arith.divf %131, %132 : vector<16x1xf32>
    %134 = vector.broadcast %126 : vector<16x1xf32> to vector<16x32xf32>
    %135 = arith.subf %122, %134 : vector<16x32xf32>
    %cst_54 = arith.constant 9.99999974E-6 : f32
    %136 = vector.broadcast %cst_54 : f32 to vector<16x1xf32>
    %137 = arith.addf %133, %136 : vector<16x1xf32>
    %138 = math.rsqrt %137 : vector<16x1xf32>
    %139 = vector.broadcast %138 : vector<16x1xf32> to vector<16x32xf32>
    %140 = arith.mulf %135, %139 : vector<16x32xf32>
    %141 = vector.broadcast %6 : vector<1x32xf32> to vector<16x32xf32>
    %142 = arith.mulf %140, %141 : vector<16x32xf32>
    %143 = vector.broadcast %7 : vector<1x32xf32> to vector<16x32xf32>
    %144 = arith.addf %142, %143 : vector<16x32xf32>
    %cst_55 = arith.constant dense<0.000000e+00> : vector<16x64xf32>
    %145 = tpu.matmul %144, %8, %cst_55 {dimension_numbers = #tpu.dot_dimension_numbers<[1], [0], [0], [1], [0, 0, 1, 1], [], []>} : vector<16x32xf32>, vector<32x64xf32>, vector<16x64xf32> -> vector<16x64xf32>
    %146 = vector.broadcast %9 : vector<1x64xf32> to vector<16x64xf32>
    %147 = arith.addf %145, %146 : vector<16x64xf32>
    %cst_56 = arith.constant 0.000000e+00 : f32
    %148 = vector.broadcast %cst_56 : f32 to vector<16x64xf32>
    %149 = arith.maximumf %147, %148 : vector<16x64xf32>
    %cst_57 = arith.constant dense<0.000000e+00> : vector<16x32xf32>
    %150 = tpu.matmul %149, %10, %cst_57 {dimension_numbers = #tpu.dot_dimension_numbers<[1], [0], [0], [1], [0, 0, 1, 1], [], []>} : vector<16x64xf32>, vector<64x32xf32>, vector<16x32xf32> -> vector<16x32xf32>
    %151 = vector.broadcast %11 : vector<1x32xf32> to vector<16x32xf32>
    %152 = arith.addf %150, %151 : vector<16x32xf32>
    %153 = arith.addf %152, %144 : vector<16x32xf32>
    %cst_58 = arith.constant dense<0.000000e+00> : vector<16xf32>
    %154 = vector.multi_reduction <add>, %153, %cst_58 [1] : vector<16x32xf32> to vector<16xf32>
    %155 = vector.shape_cast %154 : vector<16xf32> to vector<16x1xf32>
    %cst_59 = arith.constant 3.200000e+01 : f32
    %156 = vector.broadcast %cst_59 : f32 to vector<16x1xf32>
    %157 = arith.divf %155, %156 : vector<16x1xf32>
    %158 = vector.broadcast %157 : vector<16x1xf32> to vector<16x32xf32>
    %159 = arith.subf %153, %158 : vector<16x32xf32>
    %160 = arith.mulf %159, %159 : vector<16x32xf32>
    %cst_60 = arith.constant dense<0.000000e+00> : vector<16xf32>
    %161 = vector.multi_reduction <add>, %160, %cst_60 [1] : vector<16x32xf32> to vector<16xf32>
    %162 = vector.shape_cast %161 : vector<16xf32> to vector<16x1xf32>
    %cst_61 = arith.constant 3.200000e+01 : f32
    %163 = vector.broadcast %cst_61 : f32 to vector<16x1xf32>
    %164 = arith.divf %162, %163 : vector<16x1xf32>
    %165 = vector.broadcast %157 : vector<16x1xf32> to vector<16x32xf32>
    %166 = arith.subf %153, %165 : vector<16x32xf32>
    %cst_62 = arith.constant 9.99999974E-6 : f32
    %167 = vector.broadcast %cst_62 : f32 to vector<16x1xf32>
    %168 = arith.addf %164, %167 : vector<16x1xf32>
    %169 = math.rsqrt %168 : vector<16x1xf32>
    %170 = vector.broadcast %169 : vector<16x1xf32> to vector<16x32xf32>
    %171 = arith.mulf %166, %170 : vector<16x32xf32>
    %172 = vector.broadcast %12 : vector<1x32xf32> to vector<16x32xf32>
    %173 = arith.mulf %171, %172 : vector<16x32xf32>
    %174 = vector.broadcast %13 : vector<1x32xf32> to vector<16x32xf32>
    %175 = arith.addf %173, %174 : vector<16x32xf32>
    %c0_63 = arith.constant 0 : index
    %c0_64 = arith.constant 0 : index
    %176 = vector.load %arg14[%c0_63, %c0_64] : memref<32x96xf32, #tpu.memory_space<vmem>>, vector<32x96xf32>
    %c0_65 = arith.constant 0 : index
    %c0_66 = arith.constant 0 : index
    %177 = vector.load %arg15[%c0_65, %c0_66] : memref<1x96xf32, #tpu.memory_space<vmem>>, vector<1x96xf32>
    %c0_67 = arith.constant 0 : index
    %c0_68 = arith.constant 0 : index
    %178 = vector.load %arg16[%c0_67, %c0_68] : memref<32x32xf32, #tpu.memory_space<vmem>>, vector<32x32xf32>
    %c0_69 = arith.constant 0 : index
    %c0_70 = arith.constant 0 : index
    %179 = vector.load %arg17[%c0_69, %c0_70] : memref<1x32xf32, #tpu.memory_space<vmem>>, vector<1x32xf32>
    %c0_71 = arith.constant 0 : index
    %c0_72 = arith.constant 0 : index
    %180 = vector.load %arg18[%c0_71, %c0_72] : memref<1x32xf32, #tpu.memory_space<vmem>>, vector<1x32xf32>
    %c0_73 = arith.constant 0 : index
    %c0_74 = arith.constant 0 : index
    %181 = vector.load %arg19[%c0_73, %c0_74] : memref<1x32xf32, #tpu.memory_space<vmem>>, vector<1x32xf32>
    %c0_75 = arith.constant 0 : index
    %c0_76 = arith.constant 0 : index
    %182 = vector.load %arg20[%c0_75, %c0_76] : memref<32x64xf32, #tpu.memory_space<vmem>>, vector<32x64xf32>
    %c0_77 = arith.constant 0 : index
    %c0_78 = arith.constant 0 : index
    %183 = vector.load %arg21[%c0_77, %c0_78] : memref<1x64xf32, #tpu.memory_space<vmem>>, vector<1x64xf32>
    %c0_79 = arith.constant 0 : index
    %c0_80 = arith.constant 0 : index
    %184 = vector.load %arg22[%c0_79, %c0_80] : memref<64x32xf32, #tpu.memory_space<vmem>>, vector<64x32xf32>
    %c0_81 = arith.constant 0 : index
    %c0_82 = arith.constant 0 : index
    %185 = vector.load %arg23[%c0_81, %c0_82] : memref<1x32xf32, #tpu.memory_space<vmem>>, vector<1x32xf32>
    %c0_83 = arith.constant 0 : index
    %c0_84 = arith.constant 0 : index
    %186 = vector.load %arg24[%c0_83, %c0_84] : memref<1x32xf32, #tpu.memory_space<vmem>>, vector<1x32xf32>
    %c0_85 = arith.constant 0 : index
    %c0_86 = arith.constant 0 : index
    %187 = vector.load %arg25[%c0_85, %c0_86] : memref<1x32xf32, #tpu.memory_space<vmem>>, vector<1x32xf32>
    %cst_87 = arith.constant dense<0.000000e+00> : vector<16x96xf32>
    %188 = tpu.matmul %175, %176, %cst_87 {dimension_numbers = #tpu.dot_dimension_numbers<[1], [0], [0], [1], [0, 0, 1, 1], [], []>} : vector<16x32xf32>, vector<32x96xf32>, vector<16x96xf32> -> vector<16x96xf32>
    %189 = vector.broadcast %177 : vector<1x96xf32> to vector<16x96xf32>
    %190 = arith.addf %188, %189 : vector<16x96xf32>
    %191 = vector.shape_cast %190 : vector<16x96xf32> to vector<2x8x96xf32>
    %192 = vector.extract_strided_slice %191 {offsets = [0, 0, 0], sizes = [2, 8, 8], strides = [1, 1, 1]} : vector<2x8x96xf32> to vector<2x8x8xf32>
    %193 = vector.extract_strided_slice %191 {offsets = [0, 0, 32], sizes = [2, 8, 8], strides = [1, 1, 1]} : vector<2x8x96xf32> to vector<2x8x8xf32>
    %194 = vector.extract_strided_slice %191 {offsets = [0, 0, 64], sizes = [2, 8, 8], strides = [1, 1, 1]} : vector<2x8x96xf32> to vector<2x8x8xf32>
    %195 = vector.extract_strided_slice %1 {offsets = [0, 0, 0, 0], sizes = [1, 8, 8, 8], strides = [1, 1, 1, 1]} : vector<4x8x8x8xf32> to vector<1x8x8x8xf32>
    %196 = vector.shape_cast %195 : vector<1x8x8x8xf32> to vector<8x8x8xf32>
    "tpu.trace_start"() <{level = 10 : i32, message = "bld,brd->blr"}> : () -> ()
    %cst_88 = arith.constant dense<0.000000e+00> : vector<2x8x8xf32>
    %197 = tpu.matmul %192, %193, %cst_88 {dimension_numbers = #tpu.dot_dimension_numbers<[2], [2], [1], [1], [0, 0, 0, 1, 1, 1], [0], [0]>} : vector<2x8x8xf32>, vector<2x8x8xf32>, vector<2x8x8xf32> -> vector<2x8x8xf32>
    "tpu.trace_stop"() : () -> ()
    %198 = vector.shape_cast %192 : vector<2x8x8xf32> to vector<2x8x1x8xf32>
    %199 = vector.shape_cast %196 : vector<8x8x8xf32> to vector<1x8x8x8xf32>
    %200 = vector.broadcast %198 : vector<2x8x1x8xf32> to vector<2x8x8x8xf32>
    %201 = vector.broadcast %199 : vector<1x8x8x8xf32> to vector<2x8x8x8xf32>
    %202 = arith.mulf %200, %201 : vector<2x8x8x8xf32>
    %cst_89 = arith.constant dense<0.000000e+00> : vector<2x8x8xf32>
    %203 = vector.multi_reduction <add>, %202, %cst_89 [3] : vector<2x8x8x8xf32> to vector<2x8x8xf32>
    %204 = arith.addf %197, %203 : vector<2x8x8xf32>
    %cst_90 = arith.constant dense<0xFF800000> : vector<2x8xf32>
    %205 = vector.multi_reduction <maximumf>, %204, %cst_90 [2] : vector<2x8x8xf32> to vector<2x8xf32>
    %206 = vector.shape_cast %205 : vector<2x8xf32> to vector<2x8x1xf32>
    %207 = vector.broadcast %206 : vector<2x8x1xf32> to vector<2x8x8xf32>
    %208 = arith.subf %204, %207 : vector<2x8x8xf32>
    %209 = math.exp %208 : vector<2x8x8xf32>
    %cst_91 = arith.constant dense<0.000000e+00> : vector<2x8xf32>
    %210 = vector.multi_reduction <add>, %209, %cst_91 [2] : vector<2x8x8xf32> to vector<2x8xf32>
    %211 = vector.shape_cast %210 : vector<2x8xf32> to vector<2x8x1xf32>
    %212 = tpu.reciprocal %211 {approx = true} : vector<2x8x1xf32> -> vector<2x8x1xf32>
    %213 = vector.broadcast %212 : vector<2x8x1xf32> to vector<2x8x8xf32>
    %214 = arith.mulf %209, %213 : vector<2x8x8xf32>
    "tpu.trace_start"() <{level = 10 : i32, message = "blr,brd->bld"}> : () -> ()
    %cst_92 = arith.constant dense<0.000000e+00> : vector<2x8x8xf32>
    %215 = tpu.matmul %214, %194, %cst_92 {dimension_numbers = #tpu.dot_dimension_numbers<[2], [1], [1], [2], [0, 0, 0, 1, 1, 2], [0], [0]>} : vector<2x8x8xf32>, vector<2x8x8xf32>, vector<2x8x8xf32> -> vector<2x8x8xf32>
    "tpu.trace_stop"() : () -> ()
    %216 = vector.shape_cast %215 : vector<2x8x8xf32> to vector<16x8xf32>
    %217 = vector.extract_strided_slice %191 {offsets = [0, 0, 8], sizes = [2, 8, 8], strides = [1, 1, 1]} : vector<2x8x96xf32> to vector<2x8x8xf32>
    %218 = vector.extract_strided_slice %191 {offsets = [0, 0, 40], sizes = [2, 8, 8], strides = [1, 1, 1]} : vector<2x8x96xf32> to vector<2x8x8xf32>
    %219 = vector.extract_strided_slice %191 {offsets = [0, 0, 72], sizes = [2, 8, 8], strides = [1, 1, 1]} : vector<2x8x96xf32> to vector<2x8x8xf32>
    %220 = vector.extract_strided_slice %1 {offsets = [1, 0, 0, 0], sizes = [1, 8, 8, 8], strides = [1, 1, 1, 1]} : vector<4x8x8x8xf32> to vector<1x8x8x8xf32>
    %221 = vector.shape_cast %220 : vector<1x8x8x8xf32> to vector<8x8x8xf32>
    "tpu.trace_start"() <{level = 10 : i32, message = "bld,brd->blr"}> : () -> ()
    %cst_93 = arith.constant dense<0.000000e+00> : vector<2x8x8xf32>
    %222 = tpu.matmul %217, %218, %cst_93 {dimension_numbers = #tpu.dot_dimension_numbers<[2], [2], [1], [1], [0, 0, 0, 1, 1, 1], [0], [0]>} : vector<2x8x8xf32>, vector<2x8x8xf32>, vector<2x8x8xf32> -> vector<2x8x8xf32>
    "tpu.trace_stop"() : () -> ()
    %223 = vector.shape_cast %217 : vector<2x8x8xf32> to vector<2x8x1x8xf32>
    %224 = vector.shape_cast %221 : vector<8x8x8xf32> to vector<1x8x8x8xf32>
    %225 = vector.broadcast %223 : vector<2x8x1x8xf32> to vector<2x8x8x8xf32>
    %226 = vector.broadcast %224 : vector<1x8x8x8xf32> to vector<2x8x8x8xf32>
    %227 = arith.mulf %225, %226 : vector<2x8x8x8xf32>
    %cst_94 = arith.constant dense<0.000000e+00> : vector<2x8x8xf32>
    %228 = vector.multi_reduction <add>, %227, %cst_94 [3] : vector<2x8x8x8xf32> to vector<2x8x8xf32>
    %229 = arith.addf %222, %228 : vector<2x8x8xf32>
    %cst_95 = arith.constant dense<0xFF800000> : vector<2x8xf32>
    %230 = vector.multi_reduction <maximumf>, %229, %cst_95 [2] : vector<2x8x8xf32> to vector<2x8xf32>
    %231 = vector.shape_cast %230 : vector<2x8xf32> to vector<2x8x1xf32>
    %232 = vector.broadcast %231 : vector<2x8x1xf32> to vector<2x8x8xf32>
    %233 = arith.subf %229, %232 : vector<2x8x8xf32>
    %234 = math.exp %233 : vector<2x8x8xf32>
    %cst_96 = arith.constant dense<0.000000e+00> : vector<2x8xf32>
    %235 = vector.multi_reduction <add>, %234, %cst_96 [2] : vector<2x8x8xf32> to vector<2x8xf32>
    %236 = vector.shape_cast %235 : vector<2x8xf32> to vector<2x8x1xf32>
    %237 = tpu.reciprocal %236 {approx = true} : vector<2x8x1xf32> -> vector<2x8x1xf32>
    %238 = vector.broadcast %237 : vector<2x8x1xf32> to vector<2x8x8xf32>
    %239 = arith.mulf %234, %238 : vector<2x8x8xf32>
    "tpu.trace_start"() <{level = 10 : i32, message = "blr,brd->bld"}> : () -> ()
    %cst_97 = arith.constant dense<0.000000e+00> : vector<2x8x8xf32>
    %240 = tpu.matmul %239, %219, %cst_97 {dimension_numbers = #tpu.dot_dimension_numbers<[2], [1], [1], [2], [0, 0, 0, 1, 1, 2], [0], [0]>} : vector<2x8x8xf32>, vector<2x8x8xf32>, vector<2x8x8xf32> -> vector<2x8x8xf32>
    "tpu.trace_stop"() : () -> ()
    %241 = vector.shape_cast %240 : vector<2x8x8xf32> to vector<16x8xf32>
    %242 = vector.extract_strided_slice %191 {offsets = [0, 0, 16], sizes = [2, 8, 8], strides = [1, 1, 1]} : vector<2x8x96xf32> to vector<2x8x8xf32>
    %243 = vector.extract_strided_slice %191 {offsets = [0, 0, 48], sizes = [2, 8, 8], strides = [1, 1, 1]} : vector<2x8x96xf32> to vector<2x8x8xf32>
    %244 = vector.extract_strided_slice %191 {offsets = [0, 0, 80], sizes = [2, 8, 8], strides = [1, 1, 1]} : vector<2x8x96xf32> to vector<2x8x8xf32>
    %245 = vector.extract_strided_slice %1 {offsets = [2, 0, 0, 0], sizes = [1, 8, 8, 8], strides = [1, 1, 1, 1]} : vector<4x8x8x8xf32> to vector<1x8x8x8xf32>
    %246 = vector.shape_cast %245 : vector<1x8x8x8xf32> to vector<8x8x8xf32>
    "tpu.trace_start"() <{level = 10 : i32, message = "bld,brd->blr"}> : () -> ()
    %cst_98 = arith.constant dense<0.000000e+00> : vector<2x8x8xf32>
    %247 = tpu.matmul %242, %243, %cst_98 {dimension_numbers = #tpu.dot_dimension_numbers<[2], [2], [1], [1], [0, 0, 0, 1, 1, 1], [0], [0]>} : vector<2x8x8xf32>, vector<2x8x8xf32>, vector<2x8x8xf32> -> vector<2x8x8xf32>
    "tpu.trace_stop"() : () -> ()
    %248 = vector.shape_cast %242 : vector<2x8x8xf32> to vector<2x8x1x8xf32>
    %249 = vector.shape_cast %246 : vector<8x8x8xf32> to vector<1x8x8x8xf32>
    %250 = vector.broadcast %248 : vector<2x8x1x8xf32> to vector<2x8x8x8xf32>
    %251 = vector.broadcast %249 : vector<1x8x8x8xf32> to vector<2x8x8x8xf32>
    %252 = arith.mulf %250, %251 : vector<2x8x8x8xf32>
    %cst_99 = arith.constant dense<0.000000e+00> : vector<2x8x8xf32>
    %253 = vector.multi_reduction <add>, %252, %cst_99 [3] : vector<2x8x8x8xf32> to vector<2x8x8xf32>
    %254 = arith.addf %247, %253 : vector<2x8x8xf32>
    %cst_100 = arith.constant dense<0xFF800000> : vector<2x8xf32>
    %255 = vector.multi_reduction <maximumf>, %254, %cst_100 [2] : vector<2x8x8xf32> to vector<2x8xf32>
    %256 = vector.shape_cast %255 : vector<2x8xf32> to vector<2x8x1xf32>
    %257 = vector.broadcast %256 : vector<2x8x1xf32> to vector<2x8x8xf32>
    %258 = arith.subf %254, %257 : vector<2x8x8xf32>
    %259 = math.exp %258 : vector<2x8x8xf32>
    %cst_101 = arith.constant dense<0.000000e+00> : vector<2x8xf32>
    %260 = vector.multi_reduction <add>, %259, %cst_101 [2] : vector<2x8x8xf32> to vector<2x8xf32>
    %261 = vector.shape_cast %260 : vector<2x8xf32> to vector<2x8x1xf32>
    %262 = tpu.reciprocal %261 {approx = true} : vector<2x8x1xf32> -> vector<2x8x1xf32>
    %263 = vector.broadcast %262 : vector<2x8x1xf32> to vector<2x8x8xf32>
    %264 = arith.mulf %259, %263 : vector<2x8x8xf32>
    "tpu.trace_start"() <{level = 10 : i32, message = "blr,brd->bld"}> : () -> ()
    %cst_102 = arith.constant dense<0.000000e+00> : vector<2x8x8xf32>
    %265 = tpu.matmul %264, %244, %cst_102 {dimension_numbers = #tpu.dot_dimension_numbers<[2], [1], [1], [2], [0, 0, 0, 1, 1, 2], [0], [0]>} : vector<2x8x8xf32>, vector<2x8x8xf32>, vector<2x8x8xf32> -> vector<2x8x8xf32>
    "tpu.trace_stop"() : () -> ()
    %266 = vector.shape_cast %265 : vector<2x8x8xf32> to vector<16x8xf32>
    %267 = vector.extract_strided_slice %191 {offsets = [0, 0, 24], sizes = [2, 8, 8], strides = [1, 1, 1]} : vector<2x8x96xf32> to vector<2x8x8xf32>
    %268 = vector.extract_strided_slice %191 {offsets = [0, 0, 56], sizes = [2, 8, 8], strides = [1, 1, 1]} : vector<2x8x96xf32> to vector<2x8x8xf32>
    %269 = vector.extract_strided_slice %191 {offsets = [0, 0, 88], sizes = [2, 8, 8], strides = [1, 1, 1]} : vector<2x8x96xf32> to vector<2x8x8xf32>
    %270 = vector.extract_strided_slice %1 {offsets = [3, 0, 0, 0], sizes = [1, 8, 8, 8], strides = [1, 1, 1, 1]} : vector<4x8x8x8xf32> to vector<1x8x8x8xf32>
    %271 = vector.shape_cast %270 : vector<1x8x8x8xf32> to vector<8x8x8xf32>
    "tpu.trace_start"() <{level = 10 : i32, message = "bld,brd->blr"}> : () -> ()
    %cst_103 = arith.constant dense<0.000000e+00> : vector<2x8x8xf32>
    %272 = tpu.matmul %267, %268, %cst_103 {dimension_numbers = #tpu.dot_dimension_numbers<[2], [2], [1], [1], [0, 0, 0, 1, 1, 1], [0], [0]>} : vector<2x8x8xf32>, vector<2x8x8xf32>, vector<2x8x8xf32> -> vector<2x8x8xf32>
    "tpu.trace_stop"() : () -> ()
    %273 = vector.shape_cast %267 : vector<2x8x8xf32> to vector<2x8x1x8xf32>
    %274 = vector.shape_cast %271 : vector<8x8x8xf32> to vector<1x8x8x8xf32>
    %275 = vector.broadcast %273 : vector<2x8x1x8xf32> to vector<2x8x8x8xf32>
    %276 = vector.broadcast %274 : vector<1x8x8x8xf32> to vector<2x8x8x8xf32>
    %277 = arith.mulf %275, %276 : vector<2x8x8x8xf32>
    %cst_104 = arith.constant dense<0.000000e+00> : vector<2x8x8xf32>
    %278 = vector.multi_reduction <add>, %277, %cst_104 [3] : vector<2x8x8x8xf32> to vector<2x8x8xf32>
    %279 = arith.addf %272, %278 : vector<2x8x8xf32>
    %cst_105 = arith.constant dense<0xFF800000> : vector<2x8xf32>
    %280 = vector.multi_reduction <maximumf>, %279, %cst_105 [2] : vector<2x8x8xf32> to vector<2x8xf32>
    %281 = vector.shape_cast %280 : vector<2x8xf32> to vector<2x8x1xf32>
    %282 = vector.broadcast %281 : vector<2x8x1xf32> to vector<2x8x8xf32>
    %283 = arith.subf %279, %282 : vector<2x8x8xf32>
    %284 = math.exp %283 : vector<2x8x8xf32>
    %cst_106 = arith.constant dense<0.000000e+00> : vector<2x8xf32>
    %285 = vector.multi_reduction <add>, %284, %cst_106 [2] : vector<2x8x8xf32> to vector<2x8xf32>
    %286 = vector.shape_cast %285 : vector<2x8xf32> to vector<2x8x1xf32>
    %287 = tpu.reciprocal %286 {approx = true} : vector<2x8x1xf32> -> vector<2x8x1xf32>
    %288 = vector.broadcast %287 : vector<2x8x1xf32> to vector<2x8x8xf32>
    %289 = arith.mulf %284, %288 : vector<2x8x8xf32>
    "tpu.trace_start"() <{level = 10 : i32, message = "blr,brd->bld"}> : () -> ()
    %cst_107 = arith.constant dense<0.000000e+00> : vector<2x8x8xf32>
    %290 = tpu.matmul %289, %269, %cst_107 {dimension_numbers = #tpu.dot_dimension_numbers<[2], [1], [1], [2], [0, 0, 0, 1, 1, 2], [0], [0]>} : vector<2x8x8xf32>, vector<2x8x8xf32>, vector<2x8x8xf32> -> vector<2x8x8xf32>
    "tpu.trace_stop"() : () -> ()
    %291 = vector.shape_cast %290 : vector<2x8x8xf32> to vector<16x8xf32>
    %292 = tpu.concatenate %216, %241, %266, %291 in 1 : vector<16x8xf32>, vector<16x8xf32>, vector<16x8xf32>, vector<16x8xf32> -> vector<16x32xf32>
    %cst_108 = arith.constant dense<0.000000e+00> : vector<16x32xf32>
    %293 = tpu.matmul %292, %178, %cst_108 {dimension_numbers = #tpu.dot_dimension_numbers<[1], [0], [0], [1], [0, 0, 1, 1], [], []>} : vector<16x32xf32>, vector<32x32xf32>, vector<16x32xf32> -> vector<16x32xf32>
    %294 = vector.broadcast %179 : vector<1x32xf32> to vector<16x32xf32>
    %295 = arith.addf %293, %294 : vector<16x32xf32>
    %296 = arith.addf %295, %175 : vector<16x32xf32>
    %cst_109 = arith.constant dense<0.000000e+00> : vector<16xf32>
    %297 = vector.multi_reduction <add>, %296, %cst_109 [1] : vector<16x32xf32> to vector<16xf32>
    %298 = vector.shape_cast %297 : vector<16xf32> to vector<16x1xf32>
    %cst_110 = arith.constant 3.200000e+01 : f32
    %299 = vector.broadcast %cst_110 : f32 to vector<16x1xf32>
    %300 = arith.divf %298, %299 : vector<16x1xf32>
    %301 = vector.broadcast %300 : vector<16x1xf32> to vector<16x32xf32>
    %302 = arith.subf %296, %301 : vector<16x32xf32>
    %303 = arith.mulf %302, %302 : vector<16x32xf32>
    %cst_111 = arith.constant dense<0.000000e+00> : vector<16xf32>
    %304 = vector.multi_reduction <add>, %303, %cst_111 [1] : vector<16x32xf32> to vector<16xf32>
    %305 = vector.shape_cast %304 : vector<16xf32> to vector<16x1xf32>
    %cst_112 = arith.constant 3.200000e+01 : f32
    %306 = vector.broadcast %cst_112 : f32 to vector<16x1xf32>
    %307 = arith.divf %305, %306 : vector<16x1xf32>
    %308 = vector.broadcast %300 : vector<16x1xf32> to vector<16x32xf32>
    %309 = arith.subf %296, %308 : vector<16x32xf32>
    %cst_113 = arith.constant 9.99999974E-6 : f32
    %310 = vector.broadcast %cst_113 : f32 to vector<16x1xf32>
    %311 = arith.addf %307, %310 : vector<16x1xf32>
    %312 = math.rsqrt %311 : vector<16x1xf32>
    %313 = vector.broadcast %312 : vector<16x1xf32> to vector<16x32xf32>
    %314 = arith.mulf %309, %313 : vector<16x32xf32>
    %315 = vector.broadcast %180 : vector<1x32xf32> to vector<16x32xf32>
    %316 = arith.mulf %314, %315 : vector<16x32xf32>
    %317 = vector.broadcast %181 : vector<1x32xf32> to vector<16x32xf32>
    %318 = arith.addf %316, %317 : vector<16x32xf32>
    %cst_114 = arith.constant dense<0.000000e+00> : vector<16x64xf32>
    %319 = tpu.matmul %318, %182, %cst_114 {dimension_numbers = #tpu.dot_dimension_numbers<[1], [0], [0], [1], [0, 0, 1, 1], [], []>} : vector<16x32xf32>, vector<32x64xf32>, vector<16x64xf32> -> vector<16x64xf32>
    %320 = vector.broadcast %183 : vector<1x64xf32> to vector<16x64xf32>
    %321 = arith.addf %319, %320 : vector<16x64xf32>
    %cst_115 = arith.constant 0.000000e+00 : f32
    %322 = vector.broadcast %cst_115 : f32 to vector<16x64xf32>
    %323 = arith.maximumf %321, %322 : vector<16x64xf32>
    %cst_116 = arith.constant dense<0.000000e+00> : vector<16x32xf32>
    %324 = tpu.matmul %323, %184, %cst_116 {dimension_numbers = #tpu.dot_dimension_numbers<[1], [0], [0], [1], [0, 0, 1, 1], [], []>} : vector<16x64xf32>, vector<64x32xf32>, vector<16x32xf32> -> vector<16x32xf32>
    %325 = vector.broadcast %185 : vector<1x32xf32> to vector<16x32xf32>
    %326 = arith.addf %324, %325 : vector<16x32xf32>
    %327 = arith.addf %326, %318 : vector<16x32xf32>
    %cst_117 = arith.constant dense<0.000000e+00> : vector<16xf32>
    %328 = vector.multi_reduction <add>, %327, %cst_117 [1] : vector<16x32xf32> to vector<16xf32>
    %329 = vector.shape_cast %328 : vector<16xf32> to vector<16x1xf32>
    %cst_118 = arith.constant 3.200000e+01 : f32
    %330 = vector.broadcast %cst_118 : f32 to vector<16x1xf32>
    %331 = arith.divf %329, %330 : vector<16x1xf32>
    %332 = vector.broadcast %331 : vector<16x1xf32> to vector<16x32xf32>
    %333 = arith.subf %327, %332 : vector<16x32xf32>
    %334 = arith.mulf %333, %333 : vector<16x32xf32>
    %cst_119 = arith.constant dense<0.000000e+00> : vector<16xf32>
    %335 = vector.multi_reduction <add>, %334, %cst_119 [1] : vector<16x32xf32> to vector<16xf32>
    %336 = vector.shape_cast %335 : vector<16xf32> to vector<16x1xf32>
    %cst_120 = arith.constant 3.200000e+01 : f32
    %337 = vector.broadcast %cst_120 : f32 to vector<16x1xf32>
    %338 = arith.divf %336, %337 : vector<16x1xf32>
    %339 = vector.broadcast %331 : vector<16x1xf32> to vector<16x32xf32>
    %340 = arith.subf %327, %339 : vector<16x32xf32>
    %cst_121 = arith.constant 9.99999974E-6 : f32
    %341 = vector.broadcast %cst_121 : f32 to vector<16x1xf32>
    %342 = arith.addf %338, %341 : vector<16x1xf32>
    %343 = math.rsqrt %342 : vector<16x1xf32>
    %344 = vector.broadcast %343 : vector<16x1xf32> to vector<16x32xf32>
    %345 = arith.mulf %340, %344 : vector<16x32xf32>
    %346 = vector.broadcast %186 : vector<1x32xf32> to vector<16x32xf32>
    %347 = arith.mulf %345, %346 : vector<16x32xf32>
    %348 = vector.broadcast %187 : vector<1x32xf32> to vector<16x32xf32>
    %349 = arith.addf %347, %348 : vector<16x32xf32>
    %c0_122 = arith.constant 0 : index
    %c0_123 = arith.constant 0 : index
    %350 = vector.load %arg26[%c0_122, %c0_123] : memref<32x64xf32, #tpu.memory_space<vmem>>, vector<32x64xf32>
    %c0_124 = arith.constant 0 : index
    %c0_125 = arith.constant 0 : index
    %351 = vector.load %arg27[%c0_124, %c0_125] : memref<1x64xf32, #tpu.memory_space<vmem>>, vector<1x64xf32>
    %cst_126 = arith.constant dense<0.000000e+00> : vector<16x64xf32>
    %352 = tpu.matmul %349, %350, %cst_126 {dimension_numbers = #tpu.dot_dimension_numbers<[1], [0], [0], [1], [0, 0, 1, 1], [], []>} : vector<16x32xf32>, vector<32x64xf32>, vector<16x64xf32> -> vector<16x64xf32>
    %353 = vector.broadcast %351 : vector<1x64xf32> to vector<16x64xf32>
    %354 = arith.addf %352, %353 : vector<16x64xf32>
    %c0_127 = arith.constant 0 : index
    %c0_128 = arith.constant 0 : index
    %355 = vector.load %arg28[%c0_127, %c0_128] : memref<16x64xf32, #tpu.memory_space<vmem>>, vector<16x64xf32>
    tpu.vector_store %arg28[%c0_127, %c0_128], %354 {strides = array<i32>} : memref<16x64xf32, #tpu.memory_space<vmem>>, vector<16x64xf32>,
    return
  }
}

</mosaic_0001>

<llo_original>
// kernel: transformer_xl_forward.1
$region0: #{transformer_xl_forward.1}
  #allocation0 [shape = 'u32[]', space=smem, size = 0x4, offset = 0x4, fixed_abs, tag = 'smem constant byte address 0x4 - core index']
  #allocation1 [shape = 'u32[72,128]{1,0:T(1,128)}', space=vmem, size = 0x9000, scoped, tag = 'internal scratch']
  %s0 = inlined_call_operand.vmem [shape: f32[16,32], index: 0, kind: input, shape index: {}]
  %s1 = inlined_call_operand.vmem [shape: f32[4,8,8,8], index: 1, kind: input, shape index: {}]
  %s2 = inlined_call_operand.vmem [shape: f32[32,96], index: 2, kind: input, shape index: {}]
  %s3 = inlined_call_operand.vmem [shape: f32[1,96], index: 3, kind: input, shape index: {}]
  %s4 = inlined_call_operand.vmem [shape: f32[32,32], index: 4, kind: input, shape index: {}]
  %s5 = inlined_call_operand.vmem [shape: f32[1,32], index: 5, kind: input, shape index: {}]
  %s6 = inlined_call_operand.vmem [shape: f32[1,32], index: 6, kind: input, shape index: {}]
  %s7 = inlined_call_operand.vmem [shape: f32[1,32], index: 7, kind: input, shape index: {}]
  %s8 = inlined_call_operand.vmem [shape: f32[32,64], index: 8, kind: input, shape index: {}]
  %s9 = inlined_call_operand.vmem [shape: f32[1,64], index: 9, kind: input, shape index: {}]
  %s10 = inlined_call_operand.vmem [shape: f32[64,32], index: 10, kind: input, shape index: {}]
  %s11 = inlined_call_operand.vmem [shape: f32[1,32], index: 11, kind: input, shape index: {}]
  %s12 = inlined_call_operand.vmem [shape: f32[1,32], index: 12, kind: input, shape index: {}]
  %s13 = inlined_call_operand.vmem [shape: f32[1,32], index: 13, kind: input, shape index: {}]
  %s14 = inlined_call_operand.vmem [shape: f32[32,96], index: 14, kind: input, shape index: {}]
  %s15 = inlined_call_operand.vmem [shape: f32[1,96], index: 15, kind: input, shape index: {}]
  %s16 = inlined_call_operand.vmem [shape: f32[32,32], index: 16, kind: input, shape index: {}]
  %s17 = inlined_call_operand.vmem [shape: f32[1,32], index: 17, kind: input, shape index: {}]
  %s18 = inlined_call_operand.vmem [shape: f32[1,32], index: 18, kind: input, shape index: {}]
  %s19 = inlined_call_operand.vmem [shape: f32[1,32], index: 19, kind: input, shape index: {}]
  %s20 = inlined_call_operand.vmem [shape: f32[32,64], index: 20, kind: input, shape index: {}]
  %s21 = inlined_call_operand.vmem [shape: f32[1,64], index: 21, kind: input, shape index: {}]
  %s22 = inlined_call_operand.vmem [shape: f32[64,32], index: 22, kind: input, shape index: {}]
  %s23 = inlined_call_operand.vmem [shape: f32[1,32], index: 23, kind: input, shape index: {}]
  %s24 = inlined_call_operand.vmem [shape: f32[1,32], index: 24, kind: input, shape index: {}]
  %s25 = inlined_call_operand.vmem [shape: f32[1,32], index: 25, kind: input, shape index: {}]
  %s26 = inlined_call_operand.vmem [shape: f32[32,64], index: 26, kind: input, shape index: {}]
  %s27 = inlined_call_operand.vmem [shape: f32[1,64], index: 27, kind: input, shape index: {}]
  %s28 = inlined_call_operand.hbm [shape: f32[16,64], index: 28, kind: output, shape index: {}]
  %s29 = sld [smem:[#allocation0]]
  $region122: #{transformer_xl_forward.1} parent=0
    _
  %s31 = ssub.s32 1, %s29
  %s32 = scalar_select 0, %s31, %s29
  $region1: #{transformer_xl_forward.1} parent=0
    #allocation2 [shape = 'u8[8192]{0}', space=vmem, size = 0x2000, scoped, tag = 'output window, operand 0, single buffered']
    #allocation3 [shape = 's32[1]{0}', space=sflag, size = 0x4, scoped, tag = 'scoped memory for transformer_xl_forward.1']
    %33 = vsyncpa [#allocation3], 0
    // Predicated region
    $region2: #{transformer_xl_forward.1} parent=1 // pred_check
      _
    $region3: #{transformer_xl_forward.1} parent=1 // pred_check_branch
      %35 = sbr.rel (0) target = $region5
    $region4: #{transformer_xl_forward.1} parent=1 // pred_region
      _
    $region5: #{transformer_xl_forward.1} parent=1 // pred_fallthru
      _
    // Predicated region
    $region6: #{transformer_xl_forward.1} parent=1 // pred_check
      _
    $region7: #{transformer_xl_forward.1} parent=1 // pred_check_branch
      %37 = sbr.rel (0) target = $region9
    $region8: #{transformer_xl_forward.1} parent=1 // pred_region
      _
    $region9: #{transformer_xl_forward.1} parent=1 // pred_fallthru
      _
    // Predicated region
    $region10: #{transformer_xl_forward.1} parent=1 // pred_check
      _
    $region11: #{transformer_xl_forward.1} parent=1 // pred_check_branch
      %39 = sbr.rel (0) target = $region13
    $region12: #{transformer_xl_forward.1} parent=1 // pred_region
      _
    $region13: #{transformer_xl_forward.1} parent=1 // pred_fallthru
      _
    // Predicated region
    $region14: #{transformer_xl_forward.1} parent=1 // pred_check
      _
    $region15: #{transformer_xl_forward.1} parent=1 // pred_check_branch
      %41 = sbr.rel (0) target = $region17
    $region16: #{transformer_xl_forward.1} parent=1 // pred_region
      _
    $region17: #{transformer_xl_forward.1} parent=1 // pred_fallthru
      _
    // Predicated region
    $region18: #{transformer_xl_forward.1} parent=1 // pred_check
      _
    $region19: #{transformer_xl_forward.1} parent=1 // pred_check_branch
      %43 = sbr.rel (0) target = $region21
    $region20: #{transformer_xl_forward.1} parent=1 // pred_region
      _
    $region21: #{transformer_xl_forward.1} parent=1 // pred_fallthru
      _
    // Predicated region
    $region22: #{transformer_xl_forward.1} parent=1 // pred_check
      _
    $region23: #{transformer_xl_forward.1} parent=1 // pred_check_branch
      %45 = sbr.rel (0) target = $region25
    $region24: #{transformer_xl_forward.1} parent=1 // pred_region
      _
    $region25: #{transformer_xl_forward.1} parent=1 // pred_fallthru
      _
    // Predicated region
    $region26: #{transformer_xl_forward.1} parent=1 // pred_check
      _
    $region27: #{transformer_xl_forward.1} parent=1 // pred_check_branch
      %47 = sbr.rel (0) target = $region29
    $region28: #{transformer_xl_forward.1} parent=1 // pred_region
      _
    $region29: #{transformer_xl_forward.1} parent=1 // pred_fallthru
      _
    // Predicated region
    $region30: #{transformer_xl_forward.1} parent=1 // pred_check
      _
    $region31: #{transformer_xl_forward.1} parent=1 // pred_check_branch
      %49 = sbr.rel (0) target = $region33
    $region32: #{transformer_xl_forward.1} parent=1 // pred_region
      _
    $region33: #{transformer_xl_forward.1} parent=1 // pred_fallthru
      _
    // Predicated region
    $region34: #{transformer_xl_forward.1} parent=1 // pred_check
      _
    $region35: #{transformer_xl_forward.1} parent=1 // pred_check_branch
      %51 = sbr.rel (0) target = $region37
    $region36: #{transformer_xl_forward.1} parent=1 // pred_region
      _
    $region37: #{transformer_xl_forward.1} parent=1 // pred_fallthru
      _
    // Predicated region
    $region38: #{transformer_xl_forward.1} parent=1 // pred_check
      _
    $region39: #{transformer_xl_forward.1} parent=1 // pred_check_branch
      %53 = sbr.rel (0) target = $region41
    $region40: #{transformer_xl_forward.1} parent=1 // pred_region
      _
    $region41: #{transformer_xl_forward.1} parent=1 // pred_fallthru
      _
    // Predicated region
    $region42: #{transformer_xl_forward.1} parent=1 // pred_check
      _
    $region43: #{transformer_xl_forward.1} parent=1 // pred_check_branch
      %55 = sbr.rel (0) target = $region45
    $region44: #{transformer_xl_forward.1} parent=1 // pred_region
      _
    $region45: #{transformer_xl_forward.1} parent=1 // pred_fallthru
      _
    // Predicated region
    $region46: #{transformer_xl_forward.1} parent=1 // pred_check
      _
    $region47: #{transformer_xl_forward.1} parent=1 // pred_check_branch
      %57 = sbr.rel (0) target = $region49
    $region48: #{transformer_xl_forward.1} parent=1 // pred_region
      _
    $region49: #{transformer_xl_forward.1} parent=1 // pred_fallthru
      _
    // Predicated region
    $region50: #{transformer_xl_forward.1} parent=1 // pred_check
      _
    $region51: #{transformer_xl_forward.1} parent=1 // pred_check_branch
      %59 = sbr.rel (0) target = $region53
    $region52: #{transformer_xl_forward.1} parent=1 // pred_region
      _
    $region53: #{transformer_xl_forward.1} parent=1 // pred_fallthru
      _
    // Predicated region
    $region54: #{transformer_xl_forward.1} parent=1 // pred_check
      _
    $region55: #{transformer_xl_forward.1} parent=1 // pred_check_branch
      %61 = sbr.rel (0) target = $region57
    $region56: #{transformer_xl_forward.1} parent=1 // pred_region
      _
    $region57: #{transformer_xl_forward.1} parent=1 // pred_fallthru
      _
    // Predicated region
    $region58: #{transformer_xl_forward.1} parent=1 // pred_check
      _
    $region59: #{transformer_xl_forward.1} parent=1 // pred_check_branch
      %63 = sbr.rel (0) target = $region61
    $region60: #{transformer_xl_forward.1} parent=1 // pred_region
      _
    $region61: #{transformer_xl_forward.1} parent=1 // pred_fallthru
      _
    // Predicated region
    $region62: #{transformer_xl_forward.1} parent=1 // pred_check
      _
    $region63: #{transformer_xl_forward.1} parent=1 // pred_check_branch
      %65 = sbr.rel (0) target = $region65
    $region64: #{transformer_xl_forward.1} parent=1 // pred_region
      _
    $region65: #{transformer_xl_forward.1} parent=1 // pred_fallthru
      _
    // Predicated region
    $region66: #{transformer_xl_forward.1} parent=1 // pred_check
      _
    $region67: #{transformer_xl_forward.1} parent=1 // pred_check_branch
      %67 = sbr.rel (0) target = $region69
    $region68: #{transformer_xl_forward.1} parent=1 // pred_region
      _
    $region69: #{transformer_xl_forward.1} parent=1 // pred_fallthru
      _
    // Predicated region
    $region70: #{transformer_xl_forward.1} parent=1 // pred_check
      _
    $region71: #{transformer_xl_forward.1} parent=1 // pred_check_branch
      %69 = sbr.rel (0) target = $region73
    $region72: #{transformer_xl_forward.1} parent=1 // pred_region
      _
    $region73: #{transformer_xl_forward.1} parent=1 // pred_fallthru
      _
    // Predicated region
    $region74: #{transformer_xl_forward.1} parent=1 // pred_check
      _
    $region75: #{transformer_xl_forward.1} parent=1 // pred_check_branch
      %71 = sbr.rel (0) target = $region77
    $region76: #{transformer_xl_forward.1} parent=1 // pred_region
      _
    $region77: #{transformer_xl_forward.1} parent=1 // pred_fallthru
      _
    // Predicated region
    $region78: #{transformer_xl_forward.1} parent=1 // pred_check
      _
    $region79: #{transformer_xl_forward.1} parent=1 // pred_check_branch
      %73 = sbr.rel (0) target = $region81
    $region80: #{transformer_xl_forward.1} parent=1 // pred_region
      _
    $region81: #{transformer_xl_forward.1} parent=1 // pred_fallthru
      _
    // Predicated region
    $region82: #{transformer_xl_forward.1} parent=1 // pred_check
      _
    $region83: #{transformer_xl_forward.1} parent=1 // pred_check_branch
      %75 = sbr.rel (0) target = $region85
    $region84: #{transformer_xl_forward.1} parent=1 // pred_region
      _
    $region85: #{transformer_xl_forward.1} parent=1 // pred_fallthru
      _
    // Predicated region
    $region86: #{transformer_xl_forward.1} parent=1 // pred_check
      _
    $region87: #{transformer_xl_forward.1} parent=1 // pred_check_branch
      %77 = sbr.rel (0) target = $region89
    $region88: #{transformer_xl_forward.1} parent=1 // pred_region
      _
    $region89: #{transformer_xl_forward.1} parent=1 // pred_fallthru
      _
    // Predicated region
    $region90: #{transformer_xl_forward.1} parent=1 // pred_check
      _
    $region91: #{transformer_xl_forward.1} parent=1 // pred_check_branch
      %79 = sbr.rel (0) target = $region93
    $region92: #{transformer_xl_forward.1} parent=1 // pred_region
      _
    $region93: #{transformer_xl_forward.1} parent=1 // pred_fallthru
      _
    // Predicated region
    $region94: #{transformer_xl_forward.1} parent=1 // pred_check
      _
    $region95: #{transformer_xl_forward.1} parent=1 // pred_check_branch
      %81 = sbr.rel (0) target = $region97
    $region96: #{transformer_xl_forward.1} parent=1 // pred_region
      _
    $region97: #{transformer_xl_forward.1} parent=1 // pred_fallthru
      _
    // Predicated region
    $region98: #{transformer_xl_forward.1} parent=1 // pred_check
      _
    $region99: #{transformer_xl_forward.1} parent=1 // pred_check_branch
      %83 = sbr.rel (0) target = $region101
    $region100: #{transformer_xl_forward.1} parent=1 // pred_region
      _
    $region101: #{transformer_xl_forward.1} parent=1 // pred_fallthru
      _
    // Predicated region
    $region102: #{transformer_xl_forward.1} parent=1 // pred_check
      _
    $region103: #{transformer_xl_forward.1} parent=1 // pred_check_branch
      %85 = sbr.rel (0) target = $region105
    $region104: #{transformer_xl_forward.1} parent=1 // pred_region
      _
    $region105: #{transformer_xl_forward.1} parent=1 // pred_fallthru
      _
    // Predicated region
    $region106: #{transformer_xl_forward.1} parent=1 // pred_check
      _
    $region107: #{transformer_xl_forward.1} parent=1 // pred_check_branch
      %87 = sbr.rel (0) target = $region109
    $region108: #{transformer_xl_forward.1} parent=1 // pred_region
      _
    $region109: #{transformer_xl_forward.1} parent=1 // pred_fallthru
      _
    // Predicated region
    $region110: #{transformer_xl_forward.1} parent=1 // pred_check
      _
    $region111: #{transformer_xl_forward.1} parent=1 // pred_check_branch
      %89 = sbr.rel (0) target = $region113
    $region112: #{transformer_xl_forward.1} parent=1 // pred_region
      _
    $region113: #{transformer_xl_forward.1} parent=1 // pred_fallthru
      _
    %v90 = vld [vmem:[%s0] sm:$0xff]
    %v91 = vld [vmem:[%s0 + $0x8] sm:$0xff]
    %v92 = vld [vmem:[%s1] sm:$0xff]
    %v93 = vld [vmem:[%s1 + $0x8] sm:$0xff]
    %v94 = vld [vmem:[%s1 + $0x10] sm:$0xff]
    %v95 = vld [vmem:[%s1 + $0x18] sm:$0xff]
    %v96 = vld [vmem:[%s1 + $0x20] sm:$0xff]
    %v97 = vld [vmem:[%s1 + $0x28] sm:$0xff]
    %v98 = vld [vmem:[%s1 + $0x30] sm:$0xff]
    %v99 = vld [vmem:[%s1 + $0x38] sm:$0xff]
    %v100 = vld [vmem:[%s1 + $0x40] sm:$0xff]
    %v101 = vld [vmem:[%s1 + $0x48] sm:$0xff]
    %v102 = vld [vmem:[%s1 + $0x50] sm:$0xff]
    %v103 = vld [vmem:[%s1 + $0x58] sm:$0xff]
    %v104 = vld [vmem:[%s1 + $0x60] sm:$0xff]
    %v105 = vld [vmem:[%s1 + $0x68] sm:$0xff]
    %v106 = vld [vmem:[%s1 + $0x70] sm:$0xff]
    %v107 = vld [vmem:[%s1 + $0x78] sm:$0xff]
    %v108 = vld [vmem:[%s1 + $0x80] sm:$0xff]
    %v109 = vld [vmem:[%s1 + $0x88] sm:$0xff]
    %v110 = vld [vmem:[%s1 + $0x90] sm:$0xff]
    %v111 = vld [vmem:[%s1 + $0x98] sm:$0xff]
    %v112 = vld [vmem:[%s1 + $0xa0] sm:$0xff]
    %v113 = vld [vmem:[%s1 + $0xa8] sm:$0xff]
    %v114 = vld [vmem:[%s1 + $0xb0] sm:$0xff]
    %v115 = vld [vmem:[%s1 + $0xb8] sm:$0xff]
    %v116 = vld [vmem:[%s1 + $0xc0] sm:$0xff]
    %v117 = vld [vmem:[%s1 + $0xc8] sm:$0xff]
    %v118 = vld [vmem:[%s1 + $0xd0] sm:$0xff]
    %v119 = vld [vmem:[%s1 + $0xd8] sm:$0xff]
    %v120 = vld [vmem:[%s1 + $0xe0] sm:$0xff]
    %v121 = vld [vmem:[%s1 + $0xe8] sm:$0xff]
    %v122 = vld [vmem:[%s1 + $0xf0] sm:$0xff]
    %v123 = vld [vmem:[%s1 + $0xf8] sm:$0xff]
    %v124 = vld [vmem:[%s2] sm:$0xff]
    %v125 = vld [vmem:[%s2 + $0x8] sm:$0xff]
    %v126 = vld [vmem:[%s2 + $0x10] sm:$0xff]
    %v127 = vld [vmem:[%s2 + $0x18] sm:$0xff]
    %v128 = vld [vmem:[%s3] sm:$0x1]
    %v129 = vld [vmem:[%s4] sm:$0xff]
    %v130 = vld [vmem:[%s4 + $0x8] sm:$0xff]
    %v131 = vld [vmem:[%s4 + $0x10] sm:$0xff]
    %v132 = vld [vmem:[%s4 + $0x18] sm:$0xff]
    %v133 = vld [vmem:[%s5] sm:$0x1]
    %v134 = vld [vmem:[%s6] sm:$0x1]
    %v135 = vld [vmem:[%s7] sm:$0x1]
    %v136 = vld [vmem:[%s8] sm:$0xff]
    %v137 = vld [vmem:[%s8 + $0x8] sm:$0xff]
    %v138 = vld [vmem:[%s8 + $0x10] sm:$0xff]
    %v139 = vld [vmem:[%s8 + $0x18] sm:$0xff]
    %v140 = vld [vmem:[%s9] sm:$0x1]
    %v141 = vld [vmem:[%s10] sm:$0xff]
    %v142 = vld [vmem:[%s10 + $0x8] sm:$0xff]
    %v143 = vld [vmem:[%s10 + $0x10] sm:$0xff]
    %v144 = vld [vmem:[%s10 + $0x18] sm:$0xff]
    %v145 = vld [vmem:[%s10 + $0x20] sm:$0xff]
    %v146 = vld [vmem:[%s10 + $0x28] sm:$0xff]
    %v147 = vld [vmem:[%s10 + $0x30] sm:$0xff]
    %v148 = vld [vmem:[%s10 + $0x38] sm:$0xff]
    %v149 = vld [vmem:[%s11] sm:$0x1]
    %v150 = vld [vmem:[%s12] sm:$0x1]
    %v151 = vld [vmem:[%s13] sm:$0x1]
    %v153 = vperm.slane %v128, 0
    %vm155 = vcmask 261120
    %v157 = vsel %vm155, %v90, 0
    %v160 = vsel %vm155, %v91, 0
    %162 = vmatpush.msra.mxu0 0.0
    %163 = vmatpush.msra.mxu0 0.0
    %164 = vmatpush.msra.mxu0 0.0
    %165 = vmatpush.msra.mxu0 0.0
    %166 = vmatpush.msra.mxu0 0.0
    %167 = vmatpush.msra.mxu0 0.0
    %168 = vmatpush.msra.mxu0 0.0
    %169 = vmatpush.msra.mxu0 0.0
    %170 = vmatpush.msra.mxu0 0.0
    %171 = vmatpush.msra.mxu0 0.0
    %172 = vmatpush.msra.mxu0 0.0
    %173 = vmatpush.msra.mxu0 0.0
    %174 = vmatpush.msra.mxu0 %v127
    %175 = vmatpush.msra.mxu0 %v126
    %176 = vmatpush.msra.mxu0 %v125
    %177 = vmatpush.msra.mxu0 %v124
    %178 = vmatmul.f32.gmra.mxu0 %v157
    %v179 = vpop.f32.mrf.mxu0
    %v180 = vadd.f32 %v153, %v179
    %181 = vmatmul.f32.gmra.mxu0 %v160
    %v182 = vpop.f32.mrf.mxu0
    %v183 = vadd.f32 %v153, %v182
    %184 = vdwg.mxu0
    %v187 = vrot.slane %v180, 1
    %v188 = vrot.slane %v180, 2
    %v189 = vrot.slane %v180, 3
    %v190 = vrot.slane %v180, 4
    %v191 = vrot.slane %v180, 5
    %v192 = vrot.slane %v180, 6
    %v193 = vrot.slane %v180, 7
    %v194 = vrot.slane %v183, 1
    %v195 = vrot.slane %v183, 2
    %v196 = vrot.slane %v183, 3
    %v197 = vrot.slane %v183, 4
    %v198 = vrot.slane %v183, 5
    %v199 = vrot.slane %v183, 6
    %v200 = vrot.slane %v183, 7
    %v201 = vperm.slane %v180, 0
    %v202 = vperm.slane %v187, 0
    %v203 = vperm.slane %v188, 0
    %v204 = vperm.slane %v189, 0
    %v205 = vperm.slane %v190, 0
    %v206 = vperm.slane %v191, 0
    %v207 = vperm.slane %v192, 0
    %v208 = vperm.slane %v193, 0
    %v209 = vperm.slane %v183, 0
    %v210 = vperm.slane %v194, 0
    %v211 = vperm.slane %v195, 0
    %v212 = vperm.slane %v196, 0
    %v213 = vperm.slane %v197, 0
    %v214 = vperm.slane %v198, 0
    %v215 = vperm.slane %v199, 0
    %v216 = vperm.slane %v200, 0
    %v233 = vmul.f32 %v201, %v92
    %v234 = vmul.f32 %v202, %v93
    %v235 = vmul.f32 %v203, %v94
    %v236 = vmul.f32 %v204, %v95
    %v237 = vmul.f32 %v205, %v96
    %v238 = vmul.f32 %v206, %v97
    %v239 = vmul.f32 %v207, %v98
    %v240 = vmul.f32 %v208, %v99
    %v241 = vmul.f32 %v209, %v92
    %v242 = vmul.f32 %v210, %v93
    %v243 = vmul.f32 %v211, %v94
    %v244 = vmul.f32 %v212, %v95
    %v245 = vmul.f32 %v213, %v96
    %v246 = vmul.f32 %v214, %v97
    %v247 = vmul.f32 %v215, %v98
    %v248 = vmul.f32 %v216, %v99
    %vm249 = vcmask 64512
    %v250 = vsel %vm249, %v233, 0.0
    %251 = vadd.xlane.f32.xlu0 %v250
    %v252 = vpop.xlane.xlu0 %251
    %v253 = vsel %vm249, %v234, 0.0
    %254 = vadd.xlane.f32.xlu0 %v253
    %v255 = vpop.xlane.xlu0 %254
    %v256 = vsel %vm249, %v235, 0.0
    %257 = vadd.xlane.f32.xlu0 %v256
    %v258 = vpop.xlane.xlu0 %257
    %v259 = vsel %vm249, %v236, 0.0
    %260 = vadd.xlane.f32.xlu0 %v259
    %v261 = vpop.xlane.xlu0 %260
    %v262 = vsel %vm249, %v237, 0.0
    %263 = vadd.xlane.f32.xlu0 %v262
    %v264 = vpop.xlane.xlu0 %263
    %v265 = vsel %vm249, %v238, 0.0
    %266 = vadd.xlane.f32.xlu0 %v265
    %v267 = vpop.xlane.xlu0 %266
    %v268 = vsel %vm249, %v239, 0.0
    %269 = vadd.xlane.f32.xlu0 %v268
    %v270 = vpop.xlane.xlu0 %269
    %v271 = vsel %vm249, %v240, 0.0
    %272 = vadd.xlane.f32.xlu0 %v271
    %v273 = vpop.xlane.xlu0 %272
    %v274 = vsel %vm249, %v241, 0.0
    %275 = vadd.xlane.f32.xlu0 %v274
    %v276 = vpop.xlane.xlu0 %275
    %v277 = vsel %vm249, %v242, 0.0
    %278 = vadd.xlane.f32.xlu0 %v277
    %v279 = vpop.xlane.xlu0 %278
    %v280 = vsel %vm249, %v243, 0.0
    %281 = vadd.xlane.f32.xlu0 %v280
    %v282 = vpop.xlane.xlu0 %281
    %v283 = vsel %vm249, %v244, 0.0
    %284 = vadd.xlane.f32.xlu0 %v283
    %v285 = vpop.xlane.xlu0 %284
    %v286 = vsel %vm249, %v245, 0.0
    %287 = vadd.xlane.f32.xlu0 %v286
    %v288 = vpop.xlane.xlu0 %287
    %v289 = vsel %vm249, %v246, 0.0
    %290 = vadd.xlane.f32.xlu0 %v289
    %v291 = vpop.xlane.xlu0 %290
    %v292 = vsel %vm249, %v247, 0.0
    %293 = vadd.xlane.f32.xlu0 %v292
    %v294 = vpop.xlane.xlu0 %293
    %v295 = vsel %vm249, %v248, 0.0
    %296 = vadd.xlane.f32.xlu0 %v295
    %v297 = vpop.xlane.xlu0 %296
    %298 = vrot.lane.b32.xlu0 %v180, 96
    %v299 = vpop.permute.xlu0 %298
    %v308 = vlaneseq
    %v309 = vand.u32 %v308, 127
    %v310 = vperm.slane %v252, %v309
    %v311 = vperm.slane %v255, %v309
    %v312 = vperm.slane %v258, %v309
    %v313 = vperm.slane %v261, %v309
    %v314 = vperm.slane %v264, %v309
    %v315 = vperm.slane %v267, %v309
    %v316 = vperm.slane %v270, %v309
    %v317 = vperm.slane %v273, %v309
    %vm318 = vcmask 1041409
    %v319 = vsel %vm318, %v311, %v310
    %vm320 = vcmask 1042434
    %v321 = vsel %vm320, %v312, %v319
    %vm322 = vcmask 1043459
    %v323 = vsel %vm322, %v313, %v321
    %vm324 = vcmask 1044484
    %v325 = vsel %vm324, %v314, %v323
    %vm326 = vcmask 1045509
    %v327 = vsel %vm326, %v315, %v325
    %vm328 = vcmask 1046534
    %v329 = vsel %vm328, %v316, %v327
    %vm330 = vcmask 1047559
    %v331 = vsel %vm330, %v317, %v329
    %v333 = vsel %vm249, %v180, 0
    %v335 = vsel %vm249, %v299, 0
    %337 = vmatpush.xpose.msra.mxu0 0.0
    %338 = vmatpush.xpose.msra.mxu0 0.0
    %339 = vmatpush.xpose.msra.mxu0 0.0
    %340 = vmatpush.xpose.msra.mxu0 0.0
    %341 = vmatpush.xpose.msra.mxu0 0.0
    %342 = vmatpush.xpose.msra.mxu0 0.0
    %343 = vmatpush.xpose.msra.mxu0 0.0
    %344 = vmatpush.xpose.msra.mxu0 0.0
    %345 = vmatpush.xpose.msra.mxu0 0.0
    %346 = vmatpush.xpose.msra.mxu0 0.0
    %347 = vmatpush.xpose.msra.mxu0 0.0
    %348 = vmatpush.xpose.msra.mxu0 0.0
    %349 = vmatpush.xpose.msra.mxu0 0.0
    %350 = vmatpush.xpose.msra.mxu0 0.0
    %351 = vmatpush.xpose.msra.mxu0 0.0
    %352 = vmatpush.xpose.msra.mxu0 %v335
    %353 = vmatmul.f32.gmra.mxu0 %v333
    %v354 = vpop.f32.mrf.mxu0
    %v355 = vadd.f32 %v331, %v354
    %356 = vdwg.mxu0
    %357 = vrot.lane.b32.xlu0 %v183, 96
    %v358 = vpop.permute.xlu0 %357
    %v367 = vperm.slane %v276, %v309
    %v368 = vperm.slane %v279, %v309
    %v369 = vperm.slane %v282, %v309
    %v370 = vperm.slane %v285, %v309
    %v371 = vperm.slane %v288, %v309
    %v372 = vperm.slane %v291, %v309
    %v373 = vperm.slane %v294, %v309
    %v374 = vperm.slane %v297, %v309
    %v375 = vsel %vm318, %v368, %v367
    %v376 = vsel %vm320, %v369, %v375
    %v377 = vsel %vm322, %v370, %v376
    %v378 = vsel %vm324, %v371, %v377
    %v379 = vsel %vm326, %v372, %v378
    %v380 = vsel %vm328, %v373, %v379
    %v381 = vsel %vm330, %v374, %v380
    %v383 = vsel %vm249, %v183, 0
    %v385 = vsel %vm249, %v358, 0
    %387 = vmatpush.xpose.msra.mxu0 0.0
    %388 = vmatpush.xpose.msra.mxu0 0.0
    %389 = vmatpush.xpose.msra.mxu0 0.0
    %390 = vmatpush.xpose.msra.mxu0 0.0
    %391 = vmatpush.xpose.msra.mxu0 0.0
    %392 = vmatpush.xpose.msra.mxu0 0.0
    %393 = vmatpush.xpose.msra.mxu0 0.0
    %394 = vmatpush.xpose.msra.mxu0 0.0
    %395 = vmatpush.xpose.msra.mxu0 0.0
    %396 = vmatpush.xpose.msra.mxu0 0.0
    %397 = vmatpush.xpose.msra.mxu0 0.0
    %398 = vmatpush.xpose.msra.mxu0 0.0
    %399 = vmatpush.xpose.msra.mxu0 0.0
    %400 = vmatpush.xpose.msra.mxu0 0.0
    %401 = vmatpush.xpose.msra.mxu0 0.0
    %402 = vmatpush.xpose.msra.mxu0 %v385
    %403 = vmatmul.f32.gmra.mxu0 %v383
    %v404 = vpop.f32.mrf.mxu0
    %v405 = vadd.f32 %v381, %v404
    %406 = vdwg.mxu0
    %v407 = vsel %vm249, %v355, -inf
    %408 = vmax.xlane.f32.xlu0 %v407
    %v409 = vpop.xlane.xlu0 %408
    %v410 = vsel %vm249, %v405, -inf
    %411 = vmax.xlane.f32.xlu0 %v410
    %v412 = vpop.xlane.xlu0 %411
    %v413 = vsub.f32 %v355, %v409
    %v414 = vsub.f32 %v405, %v412
    %v415 = vmul.f32 %v413, 1.442695
    %v416 = vpow.pop %v415
    %v417 = vmul.f32 %v414, 1.442695
    %v418 = vpow.pop %v417
    %v419 = vsel %vm249, %v416, 0.0
    %420 = vadd.xlane.f32.xlu0 %v419
    %v421 = vpop.xlane.xlu0 %420
    %v422 = vsel %vm249, %v418, 0.0
    %423 = vadd.xlane.f32.xlu0 %v422
    %v424 = vpop.xlane.xlu0 %423
    %v425 = vrcp.pop %v421
    %v426 = vrcp.pop %v424
    %v427 = vmul.f32 %v416, %v425
    %v428 = vmul.f32 %v418, %v426
    %429 = vrot.lane.b32.xlu0 %v180, 64
    %v430 = vpop.permute.xlu0 %429
    %v433 = vsel %vm249, %v427, 0
    %435 = vmatpush.msra.mxu0 0.0
    %436 = vmatpush.msra.mxu0 0.0
    %437 = vmatpush.msra.mxu0 0.0
    %438 = vmatpush.msra.mxu0 0.0
    %439 = vmatpush.msra.mxu0 0.0
    %440 = vmatpush.msra.mxu0 0.0
    %441 = vmatpush.msra.mxu0 0.0
    %442 = vmatpush.msra.mxu0 0.0
    %443 = vmatpush.msra.mxu0 0.0
    %444 = vmatpush.msra.mxu0 0.0
    %445 = vmatpush.msra.mxu0 0.0
    %446 = vmatpush.msra.mxu0 0.0
    %447 = vmatpush.msra.mxu0 0.0
    %448 = vmatpush.msra.mxu0 0.0
    %449 = vmatpush.msra.mxu0 0.0
    %450 = vmatpush.msra.mxu0 %v430
    %451 = vmatmul.f32.gmra.mxu0 %v433
    %v452 = vpop.f32.mrf.mxu0
    %v453 = vadd.f32 0.0, %v452
    %454 = vdwg.mxu0
    %455 = vrot.lane.b32.xlu0 %v183, 64
    %v456 = vpop.permute.xlu0 %455
    %v459 = vsel %vm249, %v428, 0
    %461 = vmatpush.msra.mxu0 0.0
    %462 = vmatpush.msra.mxu0 0.0
    %463 = vmatpush.msra.mxu0 0.0
    %464 = vmatpush.msra.mxu0 0.0
    %465 = vmatpush.msra.mxu0 0.0
    %466 = vmatpush.msra.mxu0 0.0
    %467 = vmatpush.msra.mxu0 0.0
    %468 = vmatpush.msra.mxu0 0.0
    %469 = vmatpush.msra.mxu0 0.0
    %470 = vmatpush.msra.mxu0 0.0
    %471 = vmatpush.msra.mxu0 0.0
    %472 = vmatpush.msra.mxu0 0.0
    %473 = vmatpush.msra.mxu0 0.0
    %474 = vmatpush.msra.mxu0 0.0
    %475 = vmatpush.msra.mxu0 0.0
    %476 = vmatpush.msra.mxu0 %v456
    %477 = vmatmul.f32.gmra.mxu0 %v459
    %v478 = vpop.f32.mrf.mxu0
    %v479 = vadd.f32 0.0, %v478
    %480 = vdwg.mxu0
    %489 = vrot.lane.b32.xlu0 %v100, 8
    %v490 = vpop.permute.xlu0 %489
    %491 = vrot.lane.b32.xlu0 %v101, 8
    %v492 = vpop.permute.xlu0 %491
    %493 = vrot.lane.b32.xlu0 %v102, 8
    %v494 = vpop.permute.xlu0 %493
    %495 = vrot.lane.b32.xlu0 %v103, 8
    %v496 = vpop.permute.xlu0 %495
    %497 = vrot.lane.b32.xlu0 %v104, 8
    %v498 = vpop.permute.xlu0 %497
    %499 = vrot.lane.b32.xlu0 %v105, 8
    %v500 = vpop.permute.xlu0 %499
    %501 = vrot.lane.b32.xlu0 %v106, 8
    %v502 = vpop.permute.xlu0 %501
    %503 = vrot.lane.b32.xlu0 %v107, 8
    %v504 = vpop.permute.xlu0 %503
    %v513 = vmul.f32 %v201, %v490
    %v514 = vmul.f32 %v202, %v492
    %v515 = vmul.f32 %v203, %v494
    %v516 = vmul.f32 %v204, %v496
    %v517 = vmul.f32 %v205, %v498
    %v518 = vmul.f32 %v206, %v500
    %v519 = vmul.f32 %v207, %v502
    %v520 = vmul.f32 %v208, %v504
    %v521 = vmul.f32 %v209, %v490
    %v522 = vmul.f32 %v210, %v492
    %v523 = vmul.f32 %v211, %v494
    %v524 = vmul.f32 %v212, %v496
    %v525 = vmul.f32 %v213, %v498
    %v526 = vmul.f32 %v214, %v500
    %v527 = vmul.f32 %v215, %v502
    %v528 = vmul.f32 %v216, %v504
    %545 = vrot.lane.b32.xlu0 %v513, 120
    %v546 = vpop.permute.xlu0 %545
    %547 = vrot.lane.b32.xlu0 %v514, 120
    %v548 = vpop.permute.xlu0 %547
    %549 = vrot.lane.b32.xlu0 %v515, 120
    %v550 = vpop.permute.xlu0 %549
    %551 = vrot.lane.b32.xlu0 %v516, 120
    %v552 = vpop.permute.xlu0 %551
    %553 = vrot.lane.b32.xlu0 %v517, 120
    %v554 = vpop.permute.xlu0 %553
    %555 = vrot.lane.b32.xlu0 %v518, 120
    %v556 = vpop.permute.xlu0 %555
    %557 = vrot.lane.b32.xlu0 %v519, 120
    %v558 = vpop.permute.xlu0 %557
    %559 = vrot.lane.b32.xlu0 %v520, 120
    %v560 = vpop.permute.xlu0 %559
    %561 = vrot.lane.b32.xlu0 %v521, 120
    %v562 = vpop.permute.xlu0 %561
    %563 = vrot.lane.b32.xlu0 %v522, 120
    %v564 = vpop.permute.xlu0 %563
    %565 = vrot.lane.b32.xlu0 %v523, 120
    %v566 = vpop.permute.xlu0 %565
    %567 = vrot.lane.b32.xlu0 %v524, 120
    %v568 = vpop.permute.xlu0 %567
    %569 = vrot.lane.b32.xlu0 %v525, 120
    %v570 = vpop.permute.xlu0 %569
    %571 = vrot.lane.b32.xlu0 %v526, 120
    %v572 = vpop.permute.xlu0 %571
    %573 = vrot.lane.b32.xlu0 %v527, 120
    %v574 = vpop.permute.xlu0 %573
    %575 = vrot.lane.b32.xlu0 %v528, 120
    %v576 = vpop.permute.xlu0 %575
    %v593 = vsel %vm249, %v546, 0.0
    %594 = vadd.xlane.f32.xlu0 %v593
    %v595 = vpop.xlane.xlu0 %594
    %v596 = vsel %vm249, %v548, 0.0
    %597 = vadd.xlane.f32.xlu0 %v596
    %v598 = vpop.xlane.xlu0 %597
    %v599 = vsel %vm249, %v550, 0.0
    %600 = vadd.xlane.f32.xlu0 %v599
    %v601 = vpop.xlane.xlu0 %600
    %v602 = vsel %vm249, %v552, 0.0
    %603 = vadd.xlane.f32.xlu0 %v602
    %v604 = vpop.xlane.xlu0 %603
    %v605 = vsel %vm249, %v554, 0.0
    %606 = vadd.xlane.f32.xlu0 %v605
    %v607 = vpop.xlane.xlu0 %606
    %v608 = vsel %vm249, %v556, 0.0
    %609 = vadd.xlane.f32.xlu0 %v608
    %v610 = vpop.xlane.xlu0 %609
    %v611 = vsel %vm249, %v558, 0.0
    %612 = vadd.xlane.f32.xlu0 %v611
    %v613 = vpop.xlane.xlu0 %612
    %v614 = vsel %vm249, %v560, 0.0
    %615 = vadd.xlane.f32.xlu0 %v614
    %v616 = vpop.xlane.xlu0 %615
    %v617 = vsel %vm249, %v562, 0.0
    %618 = vadd.xlane.f32.xlu0 %v617
    %v619 = vpop.xlane.xlu0 %618
    %v620 = vsel %vm249, %v564, 0.0
    %621 = vadd.xlane.f32.xlu0 %v620
    %v622 = vpop.xlane.xlu0 %621
    %v623 = vsel %vm249, %v566, 0.0
    %624 = vadd.xlane.f32.xlu0 %v623
    %v625 = vpop.xlane.xlu0 %624
    %v626 = vsel %vm249, %v568, 0.0
    %627 = vadd.xlane.f32.xlu0 %v626
    %v628 = vpop.xlane.xlu0 %627
    %v629 = vsel %vm249, %v570, 0.0
    %630 = vadd.xlane.f32.xlu0 %v629
    %v631 = vpop.xlane.xlu0 %630
    %v632 = vsel %vm249, %v572, 0.0
    %633 = vadd.xlane.f32.xlu0 %v632
    %v634 = vpop.xlane.xlu0 %633
    %v635 = vsel %vm249, %v574, 0.0
    %636 = vadd.xlane.f32.xlu0 %v635
    %v637 = vpop.xlane.xlu0 %636
    %v638 = vsel %vm249, %v576, 0.0
    %639 = vadd.xlane.f32.xlu0 %v638
    %v640 = vpop.xlane.xlu0 %639
    %641 = vrot.lane.b32.xlu0 %v180, 120
    %v642 = vpop.permute.xlu0 %641
    %643 = vrot.lane.b32.xlu0 %v180, 88
    %v644 = vpop.permute.xlu0 %643
    %v653 = vperm.slane %v595, %v309
    %v654 = vperm.slane %v598, %v309
    %v655 = vperm.slane %v601, %v309
    %v656 = vperm.slane %v604, %v309
    %v657 = vperm.slane %v607, %v309
    %v658 = vperm.slane %v610, %v309
    %v659 = vperm.slane %v613, %v309
    %v660 = vperm.slane %v616, %v309
    %v661 = vsel %vm318, %v654, %v653
    %v662 = vsel %vm320, %v655, %v661
    %v663 = vsel %vm322, %v656, %v662
    %v664 = vsel %vm324, %v657, %v663
    %v665 = vsel %vm326, %v658, %v664
    %v666 = vsel %vm328, %v659, %v665
    %v667 = vsel %vm330, %v660, %v666
    %v669 = vsel %vm249, %v642, 0
    %v671 = vsel %vm249, %v644, 0
    %673 = vmatpush.xpose.msra.mxu0 0.0
    %674 = vmatpush.xpose.msra.mxu0 0.0
    %675 = vmatpush.xpose.msra.mxu0 0.0
    %676 = vmatpush.xpose.msra.mxu0 0.0
    %677 = vmatpush.xpose.msra.mxu0 0.0
    %678 = vmatpush.xpose.msra.mxu0 0.0
    %679 = vmatpush.xpose.msra.mxu0 0.0
    %680 = vmatpush.xpose.msra.mxu0 0.0
    %681 = vmatpush.xpose.msra.mxu0 0.0
    %682 = vmatpush.xpose.msra.mxu0 0.0
    %683 = vmatpush.xpose.msra.mxu0 0.0
    %684 = vmatpush.xpose.msra.mxu0 0.0
    %685 = vmatpush.xpose.msra.mxu0 0.0
    %686 = vmatpush.xpose.msra.mxu0 0.0
    %687 = vmatpush.xpose.msra.mxu0 0.0
    %688 = vmatpush.xpose.msra.mxu0 %v671
    %689 = vmatmul.f32.gmra.mxu0 %v669
    %v690 = vpop.f32.mrf.mxu0
    %v691 = vadd.f32 %v667, %v690
    %692 = vdwg.mxu0
    %693 = vrot.lane.b32.xlu0 %v183, 120
    %v694 = vpop.permute.xlu0 %693
    %695 = vrot.lane.b32.xlu0 %v183, 88
    %v696 = vpop.permute.xlu0 %695
    %v705 = vperm.slane %v619, %v309
    %v706 = vperm.slane %v622, %v309
    %v707 = vperm.slane %v625, %v309
    %v708 = vperm.slane %v628, %v309
    %v709 = vperm.slane %v631, %v309
    %v710 = vperm.slane %v634, %v309
    %v711 = vperm.slane %v637, %v309
    %v712 = vperm.slane %v640, %v309
    %v713 = vsel %vm318, %v706, %v705
    %v714 = vsel %vm320, %v707, %v713
    %v715 = vsel %vm322, %v708, %v714
    %v716 = vsel %vm324, %v709, %v715
    %v717 = vsel %vm326, %v710, %v716
    %v718 = vsel %vm328, %v711, %v717
    %v719 = vsel %vm330, %v712, %v718
    %v721 = vsel %vm249, %v694, 0
    %v723 = vsel %vm249, %v696, 0
    %725 = vmatpush.xpose.msra.mxu0 0.0
    %726 = vmatpush.xpose.msra.mxu0 0.0
    %727 = vmatpush.xpose.msra.mxu0 0.0
    %728 = vmatpush.xpose.msra.mxu0 0.0
    %729 = vmatpush.xpose.msra.mxu0 0.0
    %730 = vmatpush.xpose.msra.mxu0 0.0
    %731 = vmatpush.xpose.msra.mxu0 0.0
    %732 = vmatpush.xpose.msra.mxu0 0.0
    %733 = vmatpush.xpose.msra.mxu0 0.0
    %734 = vmatpush.xpose.msra.mxu0 0.0
    %735 = vmatpush.xpose.msra.mxu0 0.0
    %736 = vmatpush.xpose.msra.mxu0 0.0
    %737 = vmatpush.xpose.msra.mxu0 0.0
    %738 = vmatpush.xpose.msra.mxu0 0.0
    %739 = vmatpush.xpose.msra.mxu0 0.0
    %740 = vmatpush.xpose.msra.mxu0 %v723
    %741 = vmatmul.f32.gmra.mxu0 %v721
    %v742 = vpop.f32.mrf.mxu0
    %v743 = vadd.f32 %v719, %v742
    %744 = vdwg.mxu0
    %v745 = vsel %vm249, %v691, -inf
    %746 = vmax.xlane.f32.xlu0 %v745
    %v747 = vpop.xlane.xlu0 %746
    %v748 = vsel %vm249, %v743, -inf
    %749 = vmax.xlane.f32.xlu0 %v748
    %v750 = vpop.xlane.xlu0 %749
    %v751 = vsub.f32 %v691, %v747
    %v752 = vsub.f32 %v743, %v750
    %v753 = vmul.f32 %v751, 1.442695
    %v754 = vpow.pop %v753
    %v755 = vmul.f32 %v752, 1.442695
    %v756 = vpow.pop %v755
    %v757 = vsel %vm249, %v754, 0.0
    %758 = vadd.xlane.f32.xlu0 %v757
    %v759 = vpop.xlane.xlu0 %758
    %v760 = vsel %vm249, %v756, 0.0
    %761 = vadd.xlane.f32.xlu0 %v760
    %v762 = vpop.xlane.xlu0 %761
    %v763 = vrcp.pop %v759
    %v764 = vrcp.pop %v762
    %v765 = vmul.f32 %v754, %v763
    %v766 = vmul.f32 %v756, %v764
    %767 = vrot.lane.b32.xlu0 %v180, 56
    %v768 = vpop.permute.xlu0 %767
    %v771 = vsel %vm249, %v765, 0
    %773 = vmatpush.msra.mxu0 0.0
    %774 = vmatpush.msra.mxu0 0.0
    %775 = vmatpush.msra.mxu0 0.0
    %776 = vmatpush.msra.mxu0 0.0
    %777 = vmatpush.msra.mxu0 0.0
    %778 = vmatpush.msra.mxu0 0.0
    %779 = vmatpush.msra.mxu0 0.0
    %780 = vmatpush.msra.mxu0 0.0
    %781 = vmatpush.msra.mxu0 0.0
    %782 = vmatpush.msra.mxu0 0.0
    %783 = vmatpush.msra.mxu0 0.0
    %784 = vmatpush.msra.mxu0 0.0
    %785 = vmatpush.msra.mxu0 0.0
    %786 = vmatpush.msra.mxu0 0.0
    %787 = vmatpush.msra.mxu0 0.0
    %788 = vmatpush.msra.mxu0 %v768
    %789 = vmatmul.f32.gmra.mxu0 %v771
    %v790 = vpop.f32.mrf.mxu0
    %v791 = vadd.f32 0.0, %v790
    %792 = vdwg.mxu0
    %793 = vrot.lane.b32.xlu0 %v183, 56
    %v794 = vpop.permute.xlu0 %793
    %v797 = vsel %vm249, %v766, 0
    %799 = vmatpush.msra.mxu0 0.0
    %800 = vmatpush.msra.mxu0 0.0
    %801 = vmatpush.msra.mxu0 0.0
    %802 = vmatpush.msra.mxu0 0.0
    %803 = vmatpush.msra.mxu0 0.0
    %804 = vmatpush.msra.mxu0 0.0
    %805 = vmatpush.msra.mxu0 0.0
    %806 = vmatpush.msra.mxu0 0.0
    %807 = vmatpush.msra.mxu0 0.0
    %808 = vmatpush.msra.mxu0 0.0
    %809 = vmatpush.msra.mxu0 0.0
    %810 = vmatpush.msra.mxu0 0.0
    %811 = vmatpush.msra.mxu0 0.0
    %812 = vmatpush.msra.mxu0 0.0
    %813 = vmatpush.msra.mxu0 0.0
    %814 = vmatpush.msra.mxu0 %v794
    %815 = vmatmul.f32.gmra.mxu0 %v797
    %v816 = vpop.f32.mrf.mxu0
    %v817 = vadd.f32 0.0, %v816
    %818 = vdwg.mxu0
    %827 = vrot.lane.b32.xlu0 %v108, 16
    %v828 = vpop.permute.xlu0 %827
    %829 = vrot.lane.b32.xlu0 %v109, 16
    %v830 = vpop.permute.xlu0 %829
    %831 = vrot.lane.b32.xlu0 %v110, 16
    %v832 = vpop.permute.xlu0 %831
    %833 = vrot.lane.b32.xlu0 %v111, 16
    %v834 = vpop.permute.xlu0 %833
    %835 = vrot.lane.b32.xlu0 %v112, 16
    %v836 = vpop.permute.xlu0 %835
    %837 = vrot.lane.b32.xlu0 %v113, 16
    %v838 = vpop.permute.xlu0 %837
    %839 = vrot.lane.b32.xlu0 %v114, 16
    %v840 = vpop.permute.xlu0 %839
    %841 = vrot.lane.b32.xlu0 %v115, 16
    %v842 = vpop.permute.xlu0 %841
    %v851 = vmul.f32 %v201, %v828
    %v852 = vmul.f32 %v202, %v830
    %v853 = vmul.f32 %v203, %v832
    %v854 = vmul.f32 %v204, %v834
    %v855 = vmul.f32 %v205, %v836
    %v856 = vmul.f32 %v206, %v838
    %v857 = vmul.f32 %v207, %v840
    %v858 = vmul.f32 %v208, %v842
    %v859 = vmul.f32 %v209, %v828
    %v860 = vmul.f32 %v210, %v830
    %v861 = vmul.f32 %v211, %v832
    %v862 = vmul.f32 %v212, %v834
    %v863 = vmul.f32 %v213, %v836
    %v864 = vmul.f32 %v214, %v838
    %v865 = vmul.f32 %v215, %v840
    %v866 = vmul.f32 %v216, %v842
    %883 = vrot.lane.b32.xlu0 %v851, 112
    %v884 = vpop.permute.xlu0 %883
    %885 = vrot.lane.b32.xlu0 %v852, 112
    %v886 = vpop.permute.xlu0 %885
    %887 = vrot.lane.b32.xlu0 %v853, 112
    %v888 = vpop.permute.xlu0 %887
    %889 = vrot.lane.b32.xlu0 %v854, 112
    %v890 = vpop.permute.xlu0 %889
    %891 = vrot.lane.b32.xlu0 %v855, 112
    %v892 = vpop.permute.xlu0 %891
    %893 = vrot.lane.b32.xlu0 %v856, 112
    %v894 = vpop.permute.xlu0 %893
    %895 = vrot.lane.b32.xlu0 %v857, 112
    %v896 = vpop.permute.xlu0 %895
    %897 = vrot.lane.b32.xlu0 %v858, 112
    %v898 = vpop.permute.xlu0 %897
    %899 = vrot.lane.b32.xlu0 %v859, 112
    %v900 = vpop.permute.xlu0 %899
    %901 = vrot.lane.b32.xlu0 %v860, 112
    %v902 = vpop.permute.xlu0 %901
    %903 = vrot.lane.b32.xlu0 %v861, 112
    %v904 = vpop.permute.xlu0 %903
    %905 = vrot.lane.b32.xlu0 %v862, 112
    %v906 = vpop.permute.xlu0 %905
    %907 = vrot.lane.b32.xlu0 %v863, 112
    %v908 = vpop.permute.xlu0 %907
    %909 = vrot.lane.b32.xlu0 %v864, 112
    %v910 = vpop.permute.xlu0 %909
    %911 = vrot.lane.b32.xlu0 %v865, 112
    %v912 = vpop.permute.xlu0 %911
    %913 = vrot.lane.b32.xlu0 %v866, 112
    %v914 = vpop.permute.xlu0 %913
    %v931 = vsel %vm249, %v884, 0.0
    %932 = vadd.xlane.f32.xlu0 %v931
    %v933 = vpop.xlane.xlu0 %932
    %v934 = vsel %vm249, %v886, 0.0
    %935 = vadd.xlane.f32.xlu0 %v934
    %v936 = vpop.xlane.xlu0 %935
    %v937 = vsel %vm249, %v888, 0.0
    %938 = vadd.xlane.f32.xlu0 %v937
    %v939 = vpop.xlane.xlu0 %938
    %v940 = vsel %vm249, %v890, 0.0
    %941 = vadd.xlane.f32.xlu0 %v940
    %v942 = vpop.xlane.xlu0 %941
    %v943 = vsel %vm249, %v892, 0.0
    %944 = vadd.xlane.f32.xlu0 %v943
    %v945 = vpop.xlane.xlu0 %944
    %v946 = vsel %vm249, %v894, 0.0
    %947 = vadd.xlane.f32.xlu0 %v946
    %v948 = vpop.xlane.xlu0 %947
    %v949 = vsel %vm249, %v896, 0.0
    %950 = vadd.xlane.f32.xlu0 %v949
    %v951 = vpop.xlane.xlu0 %950
    %v952 = vsel %vm249, %v898, 0.0
    %953 = vadd.xlane.f32.xlu0 %v952
    %v954 = vpop.xlane.xlu0 %953
    %v955 = vsel %vm249, %v900, 0.0
    %956 = vadd.xlane.f32.xlu0 %v955
    %v957 = vpop.xlane.xlu0 %956
    %v958 = vsel %vm249, %v902, 0.0
    %959 = vadd.xlane.f32.xlu0 %v958
    %v960 = vpop.xlane.xlu0 %959
    %v961 = vsel %vm249, %v904, 0.0
    %962 = vadd.xlane.f32.xlu0 %v961
    %v963 = vpop.xlane.xlu0 %962
    %v964 = vsel %vm249, %v906, 0.0
    %965 = vadd.xlane.f32.xlu0 %v964
    %v966 = vpop.xlane.xlu0 %965
    %v967 = vsel %vm249, %v908, 0.0
    %968 = vadd.xlane.f32.xlu0 %v967
    %v969 = vpop.xlane.xlu0 %968
    %v970 = vsel %vm249, %v910, 0.0
    %971 = vadd.xlane.f32.xlu0 %v970
    %v972 = vpop.xlane.xlu0 %971
    %v973 = vsel %vm249, %v912, 0.0
    %974 = vadd.xlane.f32.xlu0 %v973
    %v975 = vpop.xlane.xlu0 %974
    %v976 = vsel %vm249, %v914, 0.0
    %977 = vadd.xlane.f32.xlu0 %v976
    %v978 = vpop.xlane.xlu0 %977
    %979 = vrot.lane.b32.xlu0 %v180, 112
    %v980 = vpop.permute.xlu0 %979
    %981 = vrot.lane.b32.xlu0 %v180, 80
    %v982 = vpop.permute.xlu0 %981
    %v991 = vperm.slane %v933, %v309
    %v992 = vperm.slane %v936, %v309
    %v993 = vperm.slane %v939, %v309
    %v994 = vperm.slane %v942, %v309
    %v995 = vperm.slane %v945, %v309
    %v996 = vperm.slane %v948, %v309
    %v997 = vperm.slane %v951, %v309
    %v998 = vperm.slane %v954, %v309
    %v999 = vsel %vm318, %v992, %v991
    %v1000 = vsel %vm320, %v993, %v999
    %v1001 = vsel %vm322, %v994, %v1000
    %v1002 = vsel %vm324, %v995, %v1001
    %v1003 = vsel %vm326, %v996, %v1002
    %v1004 = vsel %vm328, %v997, %v1003
    %v1005 = vsel %vm330, %v998, %v1004
    %v1007 = vsel %vm249, %v980, 0
    %v1009 = vsel %vm249, %v982, 0
    %1011 = vmatpush.xpose.msra.mxu0 0.0
    %1012 = vmatpush.xpose.msra.mxu0 0.0
    %1013 = vmatpush.xpose.msra.mxu0 0.0
    %1014 = vmatpush.xpose.msra.mxu0 0.0
    %1015 = vmatpush.xpose.msra.mxu0 0.0
    %1016 = vmatpush.xpose.msra.mxu0 0.0
    %1017 = vmatpush.xpose.msra.mxu0 0.0
    %1018 = vmatpush.xpose.msra.mxu0 0.0
    %1019 = vmatpush.xpose.msra.mxu0 0.0
    %1020 = vmatpush.xpose.msra.mxu0 0.0
    %1021 = vmatpush.xpose.msra.mxu0 0.0
    %1022 = vmatpush.xpose.msra.mxu0 0.0
    %1023 = vmatpush.xpose.msra.mxu0 0.0
    %1024 = vmatpush.xpose.msra.mxu0 0.0
    %1025 = vmatpush.xpose.msra.mxu0 0.0
    %1026 = vmatpush.xpose.msra.mxu0 %v1009
    %1027 = vmatmul.f32.gmra.mxu0 %v1007
    %v1028 = vpop.f32.mrf.mxu0
    %v1029 = vadd.f32 %v1005, %v1028
    %1030 = vdwg.mxu0
    %1031 = vrot.lane.b32.xlu0 %v183, 112
    %v1032 = vpop.permute.xlu0 %1031
    %1033 = vrot.lane.b32.xlu0 %v183, 80
    %v1034 = vpop.permute.xlu0 %1033
    %v1043 = vperm.slane %v957, %v309
    %v1044 = vperm.slane %v960, %v309
    %v1045 = vperm.slane %v963, %v309
    %v1046 = vperm.slane %v966, %v309
    %v1047 = vperm.slane %v969, %v309
    %v1048 = vperm.slane %v972, %v309
    %v1049 = vperm.slane %v975, %v309
    %v1050 = vperm.slane %v978, %v309
    %v1051 = vsel %vm318, %v1044, %v1043
    %v1052 = vsel %vm320, %v1045, %v1051
    %v1053 = vsel %vm322, %v1046, %v1052
    %v1054 = vsel %vm324, %v1047, %v1053
    %v1055 = vsel %vm326, %v1048, %v1054
    %v1056 = vsel %vm328, %v1049, %v1055
    %v1057 = vsel %vm330, %v1050, %v1056
    %v1059 = vsel %vm249, %v1032, 0
    %v1061 = vsel %vm249, %v1034, 0
    %1063 = vmatpush.xpose.msra.mxu0 0.0
    %1064 = vmatpush.xpose.msra.mxu0 0.0
    %1065 = vmatpush.xpose.msra.mxu0 0.0
    %1066 = vmatpush.xpose.msra.mxu0 0.0
    %1067 = vmatpush.xpose.msra.mxu0 0.0
    %1068 = vmatpush.xpose.msra.mxu0 0.0
    %1069 = vmatpush.xpose.msra.mxu0 0.0
    %1070 = vmatpush.xpose.msra.mxu0 0.0
    %1071 = vmatpush.xpose.msra.mxu0 0.0
    %1072 = vmatpush.xpose.msra.mxu0 0.0
    %1073 = vmatpush.xpose.msra.mxu0 0.0
    %1074 = vmatpush.xpose.msra.mxu0 0.0
    %1075 = vmatpush.xpose.msra.mxu0 0.0
    %1076 = vmatpush.xpose.msra.mxu0 0.0
    %1077 = vmatpush.xpose.msra.mxu0 0.0
    %1078 = vmatpush.xpose.msra.mxu0 %v1061
    %1079 = vmatmul.f32.gmra.mxu0 %v1059
    %v1080 = vpop.f32.mrf.mxu0
    %v1081 = vadd.f32 %v1057, %v1080
    %1082 = vdwg.mxu0
    %v1083 = vsel %vm249, %v1029, -inf
    %1084 = vmax.xlane.f32.xlu0 %v1083
    %v1085 = vpop.xlane.xlu0 %1084
    %v1086 = vsel %vm249, %v1081, -inf
    %1087 = vmax.xlane.f32.xlu0 %v1086
    %v1088 = vpop.xlane.xlu0 %1087
    %v1089 = vsub.f32 %v1029, %v1085
    %v1090 = vsub.f32 %v1081, %v1088
    %v1091 = vmul.f32 %v1089, 1.442695
    %v1092 = vpow.pop %v1091
    %v1093 = vmul.f32 %v1090, 1.442695
    %v1094 = vpow.pop %v1093
    %v1095 = vsel %vm249, %v1092, 0.0
    %1096 = vadd.xlane.f32.xlu0 %v1095
    %v1097 = vpop.xlane.xlu0 %1096
    %v1098 = vsel %vm249, %v1094, 0.0
    %1099 = vadd.xlane.f32.xlu0 %v1098
    %v1100 = vpop.xlane.xlu0 %1099
    %v1101 = vrcp.pop %v1097
    %v1102 = vrcp.pop %v1100
    %v1103 = vmul.f32 %v1092, %v1101
    %v1104 = vmul.f32 %v1094, %v1102
    %1105 = vrot.lane.b32.xlu0 %v180, 48
    %v1106 = vpop.permute.xlu0 %1105
    %v1109 = vsel %vm249, %v1103, 0
    %1111 = vmatpush.msra.mxu0 0.0
    %1112 = vmatpush.msra.mxu0 0.0
    %1113 = vmatpush.msra.mxu0 0.0
    %1114 = vmatpush.msra.mxu0 0.0
    %1115 = vmatpush.msra.mxu0 0.0
    %1116 = vmatpush.msra.mxu0 0.0
    %1117 = vmatpush.msra.mxu0 0.0
    %1118 = vmatpush.msra.mxu0 0.0
    %1119 = vmatpush.msra.mxu0 0.0
    %1120 = vmatpush.msra.mxu0 0.0
    %1121 = vmatpush.msra.mxu0 0.0
    %1122 = vmatpush.msra.mxu0 0.0
    %1123 = vmatpush.msra.mxu0 0.0
    %1124 = vmatpush.msra.mxu0 0.0
    %1125 = vmatpush.msra.mxu0 0.0
    %1126 = vmatpush.msra.mxu0 %v1106
    %1127 = vmatmul.f32.gmra.mxu0 %v1109
    %v1128 = vpop.f32.mrf.mxu0
    %v1129 = vadd.f32 0.0, %v1128
    %1130 = vdwg.mxu0
    %1131 = vrot.lane.b32.xlu0 %v183, 48
    %v1132 = vpop.permute.xlu0 %1131
    %v1135 = vsel %vm249, %v1104, 0
    %1137 = vmatpush.msra.mxu0 0.0
    %1138 = vmatpush.msra.mxu0 0.0
    %1139 = vmatpush.msra.mxu0 0.0
    %1140 = vmatpush.msra.mxu0 0.0
    %1141 = vmatpush.msra.mxu0 0.0
    %1142 = vmatpush.msra.mxu0 0.0
    %1143 = vmatpush.msra.mxu0 0.0
    %1144 = vmatpush.msra.mxu0 0.0
    %1145 = vmatpush.msra.mxu0 0.0
    %1146 = vmatpush.msra.mxu0 0.0
    %1147 = vmatpush.msra.mxu0 0.0
    %1148 = vmatpush.msra.mxu0 0.0
    %1149 = vmatpush.msra.mxu0 0.0
    %1150 = vmatpush.msra.mxu0 0.0
    %1151 = vmatpush.msra.mxu0 0.0
    %1152 = vmatpush.msra.mxu0 %v1132
    %1153 = vmatmul.f32.gmra.mxu0 %v1135
    %v1154 = vpop.f32.mrf.mxu0
    %v1155 = vadd.f32 0.0, %v1154
    %1156 = vdwg.mxu0
    %1165 = vrot.lane.b32.xlu0 %v116, 24
    %v1166 = vpop.permute.xlu0 %1165
    %1167 = vrot.lane.b32.xlu0 %v117, 24
    %v1168 = vpop.permute.xlu0 %1167
    %1169 = vrot.lane.b32.xlu0 %v118, 24
    %v1170 = vpop.permute.xlu0 %1169
    %1171 = vrot.lane.b32.xlu0 %v119, 24
    %v1172 = vpop.permute.xlu0 %1171
    %1173 = vrot.lane.b32.xlu0 %v120, 24
    %v1174 = vpop.permute.xlu0 %1173
    %1175 = vrot.lane.b32.xlu0 %v121, 24
    %v1176 = vpop.permute.xlu0 %1175
    %1177 = vrot.lane.b32.xlu0 %v122, 24
    %v1178 = vpop.permute.xlu0 %1177
    %1179 = vrot.lane.b32.xlu0 %v123, 24
    %v1180 = vpop.permute.xlu0 %1179
    %v1189 = vmul.f32 %v201, %v1166
    %v1190 = vmul.f32 %v202, %v1168
    %v1191 = vmul.f32 %v203, %v1170
    %v1192 = vmul.f32 %v204, %v1172
    %v1193 = vmul.f32 %v205, %v1174
    %v1194 = vmul.f32 %v206, %v1176
    %v1195 = vmul.f32 %v207, %v1178
    %v1196 = vmul.f32 %v208, %v1180
    %v1197 = vmul.f32 %v209, %v1166
    %v1198 = vmul.f32 %v210, %v1168
    %v1199 = vmul.f32 %v211, %v1170
    %v1200 = vmul.f32 %v212, %v1172
    %v1201 = vmul.f32 %v213, %v1174
    %v1202 = vmul.f32 %v214, %v1176
    %v1203 = vmul.f32 %v215, %v1178
    %v1204 = vmul.f32 %v216, %v1180
    %1221 = vrot.lane.b32.xlu0 %v1189, 104
    %v1222 = vpop.permute.xlu0 %1221
    %1223 = vrot.lane.b32.xlu0 %v1190, 104
    %v1224 = vpop.permute.xlu0 %1223
    %1225 = vrot.lane.b32.xlu0 %v1191, 104
    %v1226 = vpop.permute.xlu0 %1225
    %1227 = vrot.lane.b32.xlu0 %v1192, 104
    %v1228 = vpop.permute.xlu0 %1227
    %1229 = vrot.lane.b32.xlu0 %v1193, 104
    %v1230 = vpop.permute.xlu0 %1229
    %1231 = vrot.lane.b32.xlu0 %v1194, 104
    %v1232 = vpop.permute.xlu0 %1231
    %1233 = vrot.lane.b32.xlu0 %v1195, 104
    %v1234 = vpop.permute.xlu0 %1233
    %1235 = vrot.lane.b32.xlu0 %v1196, 104
    %v1236 = vpop.permute.xlu0 %1235
    %1237 = vrot.lane.b32.xlu0 %v1197, 104
    %v1238 = vpop.permute.xlu0 %1237
    %1239 = vrot.lane.b32.xlu0 %v1198, 104
    %v1240 = vpop.permute.xlu0 %1239
    %1241 = vrot.lane.b32.xlu0 %v1199, 104
    %v1242 = vpop.permute.xlu0 %1241
    %1243 = vrot.lane.b32.xlu0 %v1200, 104
    %v1244 = vpop.permute.xlu0 %1243
    %1245 = vrot.lane.b32.xlu0 %v1201, 104
    %v1246 = vpop.permute.xlu0 %1245
    %1247 = vrot.lane.b32.xlu0 %v1202, 104
    %v1248 = vpop.permute.xlu0 %1247
    %1249 = vrot.lane.b32.xlu0 %v1203, 104
    %v1250 = vpop.permute.xlu0 %1249
    %1251 = vrot.lane.b32.xlu0 %v1204, 104
    %v1252 = vpop.permute.xlu0 %1251
    %v1269 = vsel %vm249, %v1222, 0.0
    %1270 = vadd.xlane.f32.xlu0 %v1269
    %v1271 = vpop.xlane.xlu0 %1270
    %v1272 = vsel %vm249, %v1224, 0.0
    %1273 = vadd.xlane.f32.xlu0 %v1272
    %v1274 = vpop.xlane.xlu0 %1273
    %v1275 = vsel %vm249, %v1226, 0.0
    %1276 = vadd.xlane.f32.xlu0 %v1275
    %v1277 = vpop.xlane.xlu0 %1276
    %v1278 = vsel %vm249, %v1228, 0.0
    %1279 = vadd.xlane.f32.xlu0 %v1278
    %v1280 = vpop.xlane.xlu0 %1279
    %v1281 = vsel %vm249, %v1230, 0.0
    %1282 = vadd.xlane.f32.xlu0 %v1281
    %v1283 = vpop.xlane.xlu0 %1282
    %v1284 = vsel %vm249, %v1232, 0.0
    %1285 = vadd.xlane.f32.xlu0 %v1284
    %v1286 = vpop.xlane.xlu0 %1285
    %v1287 = vsel %vm249, %v1234, 0.0
    %1288 = vadd.xlane.f32.xlu0 %v1287
    %v1289 = vpop.xlane.xlu0 %1288
    %v1290 = vsel %vm249, %v1236, 0.0
    %1291 = vadd.xlane.f32.xlu0 %v1290
    %v1292 = vpop.xlane.xlu0 %1291
    %v1293 = vsel %vm249, %v1238, 0.0
    %1294 = vadd.xlane.f32.xlu0 %v1293
    %v1295 = vpop.xlane.xlu0 %1294
    %v1296 = vsel %vm249, %v1240, 0.0
    %1297 = vadd.xlane.f32.xlu0 %v1296
    %v1298 = vpop.xlane.xlu0 %1297
    %v1299 = vsel %vm249, %v1242, 0.0
    %1300 = vadd.xlane.f32.xlu0 %v1299
    %v1301 = vpop.xlane.xlu0 %1300
    %v1302 = vsel %vm249, %v1244, 0.0
    %1303 = vadd.xlane.f32.xlu0 %v1302
    %v1304 = vpop.xlane.xlu0 %1303
    %v1305 = vsel %vm249, %v1246, 0.0
    %1306 = vadd.xlane.f32.xlu0 %v1305
    %v1307 = vpop.xlane.xlu0 %1306
    %v1308 = vsel %vm249, %v1248, 0.0
    %1309 = vadd.xlane.f32.xlu0 %v1308
    %v1310 = vpop.xlane.xlu0 %1309
    %v1311 = vsel %vm249, %v1250, 0.0
    %1312 = vadd.xlane.f32.xlu0 %v1311
    %v1313 = vpop.xlane.xlu0 %1312
    %v1314 = vsel %vm249, %v1252, 0.0
    %1315 = vadd.xlane.f32.xlu0 %v1314
    %v1316 = vpop.xlane.xlu0 %1315
    %1317 = vrot.lane.b32.xlu0 %v180, 104
    %v1318 = vpop.permute.xlu0 %1317
    %1319 = vrot.lane.b32.xlu0 %v180, 72
    %v1320 = vpop.permute.xlu0 %1319
    %v1329 = vperm.slane %v1271, %v309
    %v1330 = vperm.slane %v1274, %v309
    %v1331 = vperm.slane %v1277, %v309
    %v1332 = vperm.slane %v1280, %v309
    %v1333 = vperm.slane %v1283, %v309
    %v1334 = vperm.slane %v1286, %v309
    %v1335 = vperm.slane %v1289, %v309
    %v1336 = vperm.slane %v1292, %v309
    %v1337 = vsel %vm318, %v1330, %v1329
    %v1338 = vsel %vm320, %v1331, %v1337
    %v1339 = vsel %vm322, %v1332, %v1338
    %v1340 = vsel %vm324, %v1333, %v1339
    %v1341 = vsel %vm326, %v1334, %v1340
    %v1342 = vsel %vm328, %v1335, %v1341
    %v1343 = vsel %vm330, %v1336, %v1342
    %v1345 = vsel %vm249, %v1318, 0
    %v1347 = vsel %vm249, %v1320, 0
    %1349 = vmatpush.xpose.msra.mxu0 0.0
    %1350 = vmatpush.xpose.msra.mxu0 0.0
    %1351 = vmatpush.xpose.msra.mxu0 0.0
    %1352 = vmatpush.xpose.msra.mxu0 0.0
    %1353 = vmatpush.xpose.msra.mxu0 0.0
    %1354 = vmatpush.xpose.msra.mxu0 0.0
    %1355 = vmatpush.xpose.msra.mxu0 0.0
    %1356 = vmatpush.xpose.msra.mxu0 0.0
    %1357 = vmatpush.xpose.msra.mxu0 0.0
    %1358 = vmatpush.xpose.msra.mxu0 0.0
    %1359 = vmatpush.xpose.msra.mxu0 0.0
    %1360 = vmatpush.xpose.msra.mxu0 0.0
    %1361 = vmatpush.xpose.msra.mxu0 0.0
    %1362 = vmatpush.xpose.msra.mxu0 0.0
    %1363 = vmatpush.xpose.msra.mxu0 0.0
    %1364 = vmatpush.xpose.msra.mxu0 %v1347
    %1365 = vmatmul.f32.gmra.mxu0 %v1345
    %v1366 = vpop.f32.mrf.mxu0
    %v1367 = vadd.f32 %v1343, %v1366
    %1368 = vdwg.mxu0
    %1369 = vrot.lane.b32.xlu0 %v183, 104
    %v1370 = vpop.permute.xlu0 %1369
    %1371 = vrot.lane.b32.xlu0 %v183, 72
    %v1372 = vpop.permute.xlu0 %1371
    %v1381 = vperm.slane %v1295, %v309
    %v1382 = vperm.slane %v1298, %v309
    %v1383 = vperm.slane %v1301, %v309
    %v1384 = vperm.slane %v1304, %v309
    %v1385 = vperm.slane %v1307, %v309
    %v1386 = vperm.slane %v1310, %v309
    %v1387 = vperm.slane %v1313, %v309
    %v1388 = vperm.slane %v1316, %v309
    %v1389 = vsel %vm318, %v1382, %v1381
    %v1390 = vsel %vm320, %v1383, %v1389
    %v1391 = vsel %vm322, %v1384, %v1390
    %v1392 = vsel %vm324, %v1385, %v1391
    %v1393 = vsel %vm326, %v1386, %v1392
    %v1394 = vsel %vm328, %v1387, %v1393
    %v1395 = vsel %vm330, %v1388, %v1394
    %v1397 = vsel %vm249, %v1370, 0
    %v1399 = vsel %vm249, %v1372, 0
    %1401 = vmatpush.xpose.msra.mxu0 0.0
    %1402 = vmatpush.xpose.msra.mxu0 0.0
    %1403 = vmatpush.xpose.msra.mxu0 0.0
    %1404 = vmatpush.xpose.msra.mxu0 0.0
    %1405 = vmatpush.xpose.msra.mxu0 0.0
    %1406 = vmatpush.xpose.msra.mxu0 0.0
    %1407 = vmatpush.xpose.msra.mxu0 0.0
    %1408 = vmatpush.xpose.msra.mxu0 0.0
    %1409 = vmatpush.xpose.msra.mxu0 0.0
    %1410 = vmatpush.xpose.msra.mxu0 0.0
    %1411 = vmatpush.xpose.msra.mxu0 0.0
    %1412 = vmatpush.xpose.msra.mxu0 0.0
    %1413 = vmatpush.xpose.msra.mxu0 0.0
    %1414 = vmatpush.xpose.msra.mxu0 0.0
    %1415 = vmatpush.xpose.msra.mxu0 0.0
    %1416 = vmatpush.xpose.msra.mxu0 %v1399
    %1417 = vmatmul.f32.gmra.mxu0 %v1397
    %v1418 = vpop.f32.mrf.mxu0
    %v1419 = vadd.f32 %v1395, %v1418
    %1420 = vdwg.mxu0
    %v1421 = vsel %vm249, %v1367, -inf
    %1422 = vmax.xlane.f32.xlu0 %v1421
    %v1423 = vpop.xlane.xlu0 %1422
    %v1424 = vsel %vm249, %v1419, -inf
    %1425 = vmax.xlane.f32.xlu0 %v1424
    %v1426 = vpop.xlane.xlu0 %1425
    %v1427 = vsub.f32 %v1367, %v1423
    %v1428 = vsub.f32 %v1419, %v1426
    %v1429 = vmul.f32 %v1427, 1.442695
    %v1430 = vpow.pop %v1429
    %v1431 = vmul.f32 %v1428, 1.442695
    %v1432 = vpow.pop %v1431
    %v1433 = vsel %vm249, %v1430, 0.0
    %1434 = vadd.xlane.f32.xlu0 %v1433
    %v1435 = vpop.xlane.xlu0 %1434
    %v1436 = vsel %vm249, %v1432, 0.0
    %1437 = vadd.xlane.f32.xlu0 %v1436
    %v1438 = vpop.xlane.xlu0 %1437
    %v1439 = vrcp.pop %v1435
    %v1440 = vrcp.pop %v1438
    %v1441 = vmul.f32 %v1430, %v1439
    %v1442 = vmul.f32 %v1432, %v1440
    %1443 = vrot.lane.b32.xlu0 %v180, 40
    %v1444 = vpop.permute.xlu0 %1443
    %v1447 = vsel %vm249, %v1441, 0
    %1449 = vmatpush.msra.mxu0 0.0
    %1450 = vmatpush.msra.mxu0 0.0
    %1451 = vmatpush.msra.mxu0 0.0
    %1452 = vmatpush.msra.mxu0 0.0
    %1453 = vmatpush.msra.mxu0 0.0
    %1454 = vmatpush.msra.mxu0 0.0
    %1455 = vmatpush.msra.mxu0 0.0
    %1456 = vmatpush.msra.mxu0 0.0
    %1457 = vmatpush.msra.mxu0 0.0
    %1458 = vmatpush.msra.mxu0 0.0
    %1459 = vmatpush.msra.mxu0 0.0
    %1460 = vmatpush.msra.mxu0 0.0
    %1461 = vmatpush.msra.mxu0 0.0
    %1462 = vmatpush.msra.mxu0 0.0
    %1463 = vmatpush.msra.mxu0 0.0
    %1464 = vmatpush.msra.mxu0 %v1444
    %1465 = vmatmul.f32.gmra.mxu0 %v1447
    %v1466 = vpop.f32.mrf.mxu0
    %v1467 = vadd.f32 0.0, %v1466
    %1468 = vdwg.mxu0
    %1469 = vrot.lane.b32.xlu0 %v183, 40
    %v1470 = vpop.permute.xlu0 %1469
    %v1473 = vsel %vm249, %v1442, 0
    %1475 = vmatpush.msra.mxu0 0.0
    %1476 = vmatpush.msra.mxu0 0.0
    %1477 = vmatpush.msra.mxu0 0.0
    %1478 = vmatpush.msra.mxu0 0.0
    %1479 = vmatpush.msra.mxu0 0.0
    %1480 = vmatpush.msra.mxu0 0.0
    %1481 = vmatpush.msra.mxu0 0.0
    %1482 = vmatpush.msra.mxu0 0.0
    %1483 = vmatpush.msra.mxu0 0.0
    %1484 = vmatpush.msra.mxu0 0.0
    %1485 = vmatpush.msra.mxu0 0.0
    %1486 = vmatpush.msra.mxu0 0.0
    %1487 = vmatpush.msra.mxu0 0.0
    %1488 = vmatpush.msra.mxu0 0.0
    %1489 = vmatpush.msra.mxu0 0.0
    %1490 = vmatpush.msra.mxu0 %v1470
    %1491 = vmatmul.f32.gmra.mxu0 %v1473
    %v1492 = vpop.f32.mrf.mxu0
    %v1493 = vadd.f32 0.0, %v1492
    %1494 = vdwg.mxu0
    %1497 = vrot.lane.b32.xlu0 %v791, 8
    %v1498 = vpop.permute.xlu0 %1497
    %1499 = vrot.lane.b32.xlu0 %v817, 8
    %v1500 = vpop.permute.xlu0 %1499
    %1505 = vrot.lane.b32.xlu0 %v1129, 16
    %v1506 = vpop.permute.xlu0 %1505
    %1507 = vrot.lane.b32.xlu0 %v1155, 16
    %v1508 = vpop.permute.xlu0 %1507
    %1513 = vrot.lane.b32.xlu0 %v1467, 24
    %v1514 = vpop.permute.xlu0 %1513
    %1515 = vrot.lane.b32.xlu0 %v1493, 24
    %v1516 = vpop.permute.xlu0 %1515
    %v1519 = vsel %vm249, %v453, %v1498
    %v1520 = vsel %vm249, %v479, %v1500
    %vm1521 = vcmask 130048
    %v1522 = vsel %vm1521, %v1519, %v1506
    %v1523 = vsel %vm1521, %v1520, %v1508
    %vm1524 = vcmask 195584
    %v1525 = vsel %vm1524, %v1522, %v1514
    %v1526 = vsel %vm1524, %v1523, %v1516
    %v1528 = vperm.slane %v133, 0
    %v1531 = vsel %vm155, %v1525, 0
    %v1534 = vsel %vm155, %v1526, 0
    %1536 = vmatpush.msra.mxu0 0.0
    %1537 = vmatpush.msra.mxu0 0.0
    %1538 = vmatpush.msra.mxu0 0.0
    %1539 = vmatpush.msra.mxu0 0.0
    %1540 = vmatpush.msra.mxu0 0.0
    %1541 = vmatpush.msra.mxu0 0.0
    %1542 = vmatpush.msra.mxu0 0.0
    %1543 = vmatpush.msra.mxu0 0.0
    %1544 = vmatpush.msra.mxu0 0.0
    %1545 = vmatpush.msra.mxu0 0.0
    %1546 = vmatpush.msra.mxu0 0.0
    %1547 = vmatpush.msra.mxu0 0.0
    %1548 = vmatpush.msra.mxu0 %v132
    %1549 = vmatpush.msra.mxu0 %v131
    %1550 = vmatpush.msra.mxu0 %v130
    %1551 = vmatpush.msra.mxu0 %v129
    %1552 = vmatmul.f32.gmra.mxu0 %v1531
    %v1553 = vpop.f32.mrf.mxu0
    %v1554 = vadd.f32 %v1528, %v1553
    %1555 = vmatmul.f32.gmra.mxu0 %v1534
    %v1556 = vpop.f32.mrf.mxu0
    %v1557 = vadd.f32 %v1528, %v1556
    %1558 = vdwg.mxu0
    %v1559 = vadd.f32 %v1554, %v90
    %v1560 = vadd.f32 %v1557, %v91
    %v1561 = vsel %vm155, %v1559, 0.0
    %1562 = vadd.xlane.f32.xlu0 %v1561
    %v1563 = vpop.xlane.xlu0 %1562
    %v1564 = vsel %vm155, %v1560, 0.0
    %1565 = vadd.xlane.f32.xlu0 %v1564
    %v1566 = vpop.xlane.xlu0 %1565
    %v1567 = vrcp.pop 32.0
    %v1568 = vmul.f32 32.0, %v1567
    %v1569 = vsub.f32 1.0, %v1568
    %v1570 = vmul.f32 %v1567, %v1569
    %v1571 = vadd.f32 %v1567, %v1570
    %vm1572 = vweird.f32 %v1567
    %v1573 = vsel %vm1572, %v1567, %v1571
    %v1574 = vmul.f32 %v1563, %v1573
    %v1575 = vmul.f32 %v1566, %v1573
    %v1576 = vsub.f32 %v1559, %v1574
    %v1577 = vsub.f32 %v1560, %v1575
    %v1578 = vmul.f32 %v1576, %v1576
    %v1579 = vmul.f32 %v1577, %v1577
    %v1580 = vsel %vm155, %v1578, 0.0
    %1581 = vadd.xlane.f32.xlu0 %v1580
    %v1582 = vpop.xlane.xlu0 %1581
    %v1583 = vsel %vm155, %v1579, 0.0
    %1584 = vadd.xlane.f32.xlu0 %v1583
    %v1585 = vpop.xlane.xlu0 %1584
    %v1586 = vmul.f32 %v1582, %v1573
    %v1587 = vmul.f32 %v1585, %v1573
    %v1588 = vadd.f32 %v1586, 1e-05
    %v1589 = vadd.f32 %v1587, 1e-05
    %v1590 = vrsqrt.pop %v1588
    %v1591 = vmul.f32 %v1590, %v1588
    %v1592 = vmul.f32 %v1591, %v1590
    %v1593 = vmul.f32 0.5, %v1592
    %v1594 = vsub.f32 1.5, %v1593
    %v1595 = vmul.f32 %v1590, %v1594
    %vm1596 = vweird.f32 %v1588
    %vm1597 = vweird.f32 %v1590
    %vm1598 = vmor %vm1596, %vm1597
    %v1599 = vsel %vm1598, %v1590, %v1595
    %v1600 = vrsqrt.pop %v1589
    %v1601 = vmul.f32 %v1600, %v1589
    %v1602 = vmul.f32 %v1601, %v1600
    %v1603 = vmul.f32 0.5, %v1602
    %v1604 = vsub.f32 1.5, %v1603
    %v1605 = vmul.f32 %v1600, %v1604
    %vm1606 = vweird.f32 %v1589
    %vm1607 = vweird.f32 %v1600
    %vm1608 = vmor %vm1606, %vm1607
    %v1609 = vsel %vm1608, %v1600, %v1605
    %v1610 = vmul.f32 %v1576, %v1599
    %v1611 = vmul.f32 %v1577, %v1609
    %v1613 = vperm.slane %v134, 0
    %v1615 = vmul.f32 %v1610, %v1613
    %v1616 = vmul.f32 %v1611, %v1613
    %v1618 = vperm.slane %v135, 0
    %v1620 = vadd.f32 %v1615, %v1618
    %v1621 = vadd.f32 %v1616, %v1618
    %v1623 = vperm.slane %v140, 0
    %v1626 = vsel %vm155, %v1620, 0
    %v1629 = vsel %vm155, %v1621, 0
    %1631 = vmatpush.msra.mxu0 0.0
    %1632 = vmatpush.msra.mxu0 0.0
    %1633 = vmatpush.msra.mxu0 0.0
    %1634 = vmatpush.msra.mxu0 0.0
    %1635 = vmatpush.msra.mxu0 0.0
    %1636 = vmatpush.msra.mxu0 0.0
    %1637 = vmatpush.msra.mxu0 0.0
    %1638 = vmatpush.msra.mxu0 0.0
    %1639 = vmatpush.msra.mxu0 0.0
    %1640 = vmatpush.msra.mxu0 0.0
    %1641 = vmatpush.msra.mxu0 0.0
    %1642 = vmatpush.msra.mxu0 0.0
    %1643 = vmatpush.msra.mxu0 %v139
    %1644 = vmatpush.msra.mxu0 %v138
    %1645 = vmatpush.msra.mxu0 %v137
    %1646 = vmatpush.msra.mxu0 %v136
    %1647 = vmatmul.f32.gmra.mxu0 %v1626
    %v1648 = vpop.f32.mrf.mxu0
    %v1649 = vadd.f32 %v1623, %v1648
    %1650 = vmatmul.f32.gmra.mxu0 %v1629
    %v1651 = vpop.f32.mrf.mxu0
    %v1652 = vadd.f32 %v1623, %v1651
    %1653 = vdwg.mxu0
    %v1654 = vmax.f32 %v1649, 0.0
    %v1655 = vmax.f32 %v1652, 0.0
    %v1657 = vperm.slane %v149, 0
    %vm1659 = vcmask 523264
    %v1661 = vsel %vm1659, %v1654, 0
    %v1664 = vsel %vm1659, %v1655, 0
    %1666 = vmatpush.msra.mxu0 0.0
    %1667 = vmatpush.msra.mxu0 0.0
    %1668 = vmatpush.msra.mxu0 0.0
    %1669 = vmatpush.msra.mxu0 0.0
    %1670 = vmatpush.msra.mxu0 0.0
    %1671 = vmatpush.msra.mxu0 0.0
    %1672 = vmatpush.msra.mxu0 0.0
    %1673 = vmatpush.msra.mxu0 0.0
    %1674 = vmatpush.msra.mxu0 %v148
    %1675 = vmatpush.msra.mxu0 %v147
    %1676 = vmatpush.msra.mxu0 %v146
    %1677 = vmatpush.msra.mxu0 %v145
    %1678 = vmatpush.msra.mxu0 %v144
    %1679 = vmatpush.msra.mxu0 %v143
    %1680 = vmatpush.msra.mxu0 %v142
    %1681 = vmatpush.msra.mxu0 %v141
    %1682 = vmatmul.f32.gmra.mxu0 %v1661
    %v1683 = vpop.f32.mrf.mxu0
    %v1684 = vadd.f32 %v1657, %v1683
    %1685 = vmatmul.f32.gmra.mxu0 %v1664
    %v1686 = vpop.f32.mrf.mxu0
    %v1687 = vadd.f32 %v1657, %v1686
    %1688 = vdwg.mxu0
    %v1689 = vadd.f32 %v1684, %v1620
    %v1690 = vadd.f32 %v1687, %v1621
    %v1691 = vsel %vm155, %v1689, 0.0
    %1692 = vadd.xlane.f32.xlu0 %v1691
    %v1693 = vpop.xlane.xlu0 %1692
    %v1694 = vsel %vm155, %v1690, 0.0
    %1695 = vadd.xlane.f32.xlu0 %v1694
    %v1696 = vpop.xlane.xlu0 %1695
    %v1697 = vmul.f32 %v1693, %v1573
    %v1698 = vmul.f32 %v1696, %v1573
    %v1699 = vsub.f32 %v1689, %v1697
    %v1700 = vsub.f32 %v1690, %v1698
    %v1701 = vmul.f32 %v1699, %v1699
    %v1702 = vmul.f32 %v1700, %v1700
    %v1703 = vsel %vm155, %v1701, 0.0
    %1704 = vadd.xlane.f32.xlu0 %v1703
    %v1705 = vpop.xlane.xlu0 %1704
    %v1706 = vsel %vm155, %v1702, 0.0
    %1707 = vadd.xlane.f32.xlu0 %v1706
    %v1708 = vpop.xlane.xlu0 %1707
    %v1709 = vmul.f32 %v1705, %v1573
    %v1710 = vmul.f32 %v1708, %v1573
    %v1711 = vadd.f32 %v1709, 1e-05
    %v1712 = vadd.f32 %v1710, 1e-05
    %v1713 = vrsqrt.pop %v1711
    %v1714 = vmul.f32 %v1713, %v1711
    %v1715 = vmul.f32 %v1714, %v1713
    %v1716 = vmul.f32 0.5, %v1715
    %v1717 = vsub.f32 1.5, %v1716
    %v1718 = vmul.f32 %v1713, %v1717
    %vm1719 = vweird.f32 %v1711
    %vm1720 = vweird.f32 %v1713
    %vm1721 = vmor %vm1719, %vm1720
    %v1722 = vsel %vm1721, %v1713, %v1718
    %v1723 = vrsqrt.pop %v1712
    %v1724 = vmul.f32 %v1723, %v1712
    %v1725 = vmul.f32 %v1724, %v1723
    %v1726 = vmul.f32 0.5, %v1725
    %v1727 = vsub.f32 1.5, %v1726
    %v1728 = vmul.f32 %v1723, %v1727
    %vm1729 = vweird.f32 %v1712
    %vm1730 = vweird.f32 %v1723
    %vm1731 = vmor %vm1729, %vm1730
    %v1732 = vsel %vm1731, %v1723, %v1728
    %v1733 = vmul.f32 %v1699, %v1722
    %v1734 = vmul.f32 %v1700, %v1732
    %v1736 = vperm.slane %v150, 0
    %v1738 = vmul.f32 %v1733, %v1736
    %v1739 = vmul.f32 %v1734, %v1736
    %v1741 = vperm.slane %v151, 0
    %v1743 = vadd.f32 %v1738, %v1741
    %v1744 = vadd.f32 %v1739, %v1741
    %v1745 = vld [vmem:[%s14] sm:$0xff]
    %v1746 = vld [vmem:[%s14 + $0x8] sm:$0xff]
    %v1747 = vld [vmem:[%s14 + $0x10] sm:$0xff]
    %v1748 = vld [vmem:[%s14 + $0x18] sm:$0xff]
    %v1749 = vld [vmem:[%s15] sm:$0x1]
    %v1750 = vld [vmem:[%s16] sm:$0xff]
    %v1751 = vld [vmem:[%s16 + $0x8] sm:$0xff]
    %v1752 = vld [vmem:[%s16 + $0x10] sm:$0xff]
    %v1753 = vld [vmem:[%s16 + $0x18] sm:$0xff]
    %v1754 = vld [vmem:[%s17] sm:$0x1]
    %v1755 = vld [vmem:[%s18] sm:$0x1]
    %v1756 = vld [vmem:[%s19] sm:$0x1]
    %v1757 = vld [vmem:[%s20] sm:$0xff]
    %v1758 = vld [vmem:[%s20 + $0x8] sm:$0xff]
    %v1759 = vld [vmem:[%s20 + $0x10] sm:$0xff]
    %v1760 = vld [vmem:[%s20 + $0x18] sm:$0xff]
    %v1761 = vld [vmem:[%s21] sm:$0x1]
    %v1762 = vld [vmem:[%s22] sm:$0xff]
    %v1763 = vld [vmem:[%s22 + $0x8] sm:$0xff]
    %v1764 = vld [vmem:[%s22 + $0x10] sm:$0xff]
    %v1765 = vld [vmem:[%s22 + $0x18] sm:$0xff]
    %v1766 = vld [vmem:[%s22 + $0x20] sm:$0xff]
    %v1767 = vld [vmem:[%s22 + $0x28] sm:$0xff]
    %v1768 = vld [vmem:[%s22 + $0x30] sm:$0xff]
    %v1769 = vld [vmem:[%s22 + $0x38] sm:$0xff]
    %v1770 = vld [vmem:[%s23] sm:$0x1]
    %v1771 = vld [vmem:[%s24] sm:$0x1]
    %v1772 = vld [vmem:[%s25] sm:$0x1]
    %v1774 = vperm.slane %v1749, 0
    %v1777 = vsel %vm155, %v1743, 0
    %v1780 = vsel %vm155, %v1744, 0
    %1782 = vmatpush.msra.mxu0 0.0
    %1783 = vmatpush.msra.mxu0 0.0
    %1784 = vmatpush.msra.mxu0 0.0
    %1785 = vmatpush.msra.mxu0 0.0
    %1786 = vmatpush.msra.mxu0 0.0
    %1787 = vmatpush.msra.mxu0 0.0
    %1788 = vmatpush.msra.mxu0 0.0
    %1789 = vmatpush.msra.mxu0 0.0
    %1790 = vmatpush.msra.mxu0 0.0
    %1791 = vmatpush.msra.mxu0 0.0
    %1792 = vmatpush.msra.mxu0 0.0
    %1793 = vmatpush.msra.mxu0 0.0
    %1794 = vmatpush.msra.mxu0 %v1748
    %1795 = vmatpush.msra.mxu0 %v1747
    %1796 = vmatpush.msra.mxu0 %v1746
    %1797 = vmatpush.msra.mxu0 %v1745
    %1798 = vmatmul.f32.gmra.mxu0 %v1777
    %v1799 = vpop.f32.mrf.mxu0
    %v1800 = vadd.f32 %v1774, %v1799
    %1801 = vmatmul.f32.gmra.mxu0 %v1780
    %v1802 = vpop.f32.mrf.mxu0
    %v1803 = vadd.f32 %v1774, %v1802
    %1804 = vdwg.mxu0
    %v1807 = vrot.slane %v1800, 1
    %v1808 = vrot.slane %v1800, 2
    %v1809 = vrot.slane %v1800, 3
    %v1810 = vrot.slane %v1800, 4
    %v1811 = vrot.slane %v1800, 5
    %v1812 = vrot.slane %v1800, 6
    %v1813 = vrot.slane %v1800, 7
    %v1814 = vrot.slane %v1803, 1
    %v1815 = vrot.slane %v1803, 2
    %v1816 = vrot.slane %v1803, 3
    %v1817 = vrot.slane %v1803, 4
    %v1818 = vrot.slane %v1803, 5
    %v1819 = vrot.slane %v1803, 6
    %v1820 = vrot.slane %v1803, 7
    %v1821 = vperm.slane %v1800, 0
    %v1822 = vperm.slane %v1807, 0
    %v1823 = vperm.slane %v1808, 0
    %v1824 = vperm.slane %v1809, 0
    %v1825 = vperm.slane %v1810, 0
    %v1826 = vperm.slane %v1811, 0
    %v1827 = vperm.slane %v1812, 0
    %v1828 = vperm.slane %v1813, 0
    %v1829 = vperm.slane %v1803, 0
    %v1830 = vperm.slane %v1814, 0
    %v1831 = vperm.slane %v1815, 0
    %v1832 = vperm.slane %v1816, 0
    %v1833 = vperm.slane %v1817, 0
    %v1834 = vperm.slane %v1818, 0
    %v1835 = vperm.slane %v1819, 0
    %v1836 = vperm.slane %v1820, 0
    %v1853 = vmul.f32 %v1821, %v92
    %v1854 = vmul.f32 %v1822, %v93
    %v1855 = vmul.f32 %v1823, %v94
    %v1856 = vmul.f32 %v1824, %v95
    %v1857 = vmul.f32 %v1825, %v96
    %v1858 = vmul.f32 %v1826, %v97
    %v1859 = vmul.f32 %v1827, %v98
    %v1860 = vmul.f32 %v1828, %v99
    %v1861 = vmul.f32 %v1829, %v92
    %v1862 = vmul.f32 %v1830, %v93
    %v1863 = vmul.f32 %v1831, %v94
    %v1864 = vmul.f32 %v1832, %v95
    %v1865 = vmul.f32 %v1833, %v96
    %v1866 = vmul.f32 %v1834, %v97
    %v1867 = vmul.f32 %v1835, %v98
    %v1868 = vmul.f32 %v1836, %v99
    %v1869 = vsel %vm249, %v1853, 0.0
    %1870 = vadd.xlane.f32.xlu0 %v1869
    %v1871 = vpop.xlane.xlu0 %1870
    %v1872 = vsel %vm249, %v1854, 0.0
    %1873 = vadd.xlane.f32.xlu0 %v1872
    %v1874 = vpop.xlane.xlu0 %1873
    %v1875 = vsel %vm249, %v1855, 0.0
    %1876 = vadd.xlane.f32.xlu0 %v1875
    %v1877 = vpop.xlane.xlu0 %1876
    %v1878 = vsel %vm249, %v1856, 0.0
    %1879 = vadd.xlane.f32.xlu0 %v1878
    %v1880 = vpop.xlane.xlu0 %1879
    %v1881 = vsel %vm249, %v1857, 0.0
    %1882 = vadd.xlane.f32.xlu0 %v1881
    %v1883 = vpop.xlane.xlu0 %1882
    %v1884 = vsel %vm249, %v1858, 0.0
    %1885 = vadd.xlane.f32.xlu0 %v1884
    %v1886 = vpop.xlane.xlu0 %1885
    %v1887 = vsel %vm249, %v1859, 0.0
    %1888 = vadd.xlane.f32.xlu0 %v1887
    %v1889 = vpop.xlane.xlu0 %1888
    %v1890 = vsel %vm249, %v1860, 0.0
    %1891 = vadd.xlane.f32.xlu0 %v1890
    %v1892 = vpop.xlane.xlu0 %1891
    %v1893 = vsel %vm249, %v1861, 0.0
    %1894 = vadd.xlane.f32.xlu0 %v1893
    %v1895 = vpop.xlane.xlu0 %1894
    %v1896 = vsel %vm249, %v1862, 0.0
    %1897 = vadd.xlane.f32.xlu0 %v1896
    %v1898 = vpop.xlane.xlu0 %1897
    %v1899 = vsel %vm249, %v1863, 0.0
    %1900 = vadd.xlane.f32.xlu0 %v1899
    %v1901 = vpop.xlane.xlu0 %1900
    %v1902 = vsel %vm249, %v1864, 0.0
    %1903 = vadd.xlane.f32.xlu0 %v1902
    %v1904 = vpop.xlane.xlu0 %1903
    %v1905 = vsel %vm249, %v1865, 0.0
    %1906 = vadd.xlane.f32.xlu0 %v1905
    %v1907 = vpop.xlane.xlu0 %1906
    %v1908 = vsel %vm249, %v1866, 0.0
    %1909 = vadd.xlane.f32.xlu0 %v1908
    %v1910 = vpop.xlane.xlu0 %1909
    %v1911 = vsel %vm249, %v1867, 0.0
    %1912 = vadd.xlane.f32.xlu0 %v1911
    %v1913 = vpop.xlane.xlu0 %1912
    %v1914 = vsel %vm249, %v1868, 0.0
    %1915 = vadd.xlane.f32.xlu0 %v1914
    %v1916 = vpop.xlane.xlu0 %1915
    %1917 = vrot.lane.b32.xlu0 %v1800, 96
    %v1918 = vpop.permute.xlu0 %1917
    %v1927 = vperm.slane %v1871, %v309
    %v1928 = vperm.slane %v1874, %v309
    %v1929 = vperm.slane %v1877, %v309
    %v1930 = vperm.slane %v1880, %v309
    %v1931 = vperm.slane %v1883, %v309
    %v1932 = vperm.slane %v1886, %v309
    %v1933 = vperm.slane %v1889, %v309
    %v1934 = vperm.slane %v1892, %v309
    %v1935 = vsel %vm318, %v1928, %v1927
    %v1936 = vsel %vm320, %v1929, %v1935
    %v1937 = vsel %vm322, %v1930, %v1936
    %v1938 = vsel %vm324, %v1931, %v1937
    %v1939 = vsel %vm326, %v1932, %v1938
    %v1940 = vsel %vm328, %v1933, %v1939
    %v1941 = vsel %vm330, %v1934, %v1940
    %v1943 = vsel %vm249, %v1800, 0
    %v1945 = vsel %vm249, %v1918, 0
    %1947 = vmatpush.xpose.msra.mxu0 0.0
    %1948 = vmatpush.xpose.msra.mxu0 0.0
    %1949 = vmatpush.xpose.msra.mxu0 0.0
    %1950 = vmatpush.xpose.msra.mxu0 0.0
    %1951 = vmatpush.xpose.msra.mxu0 0.0
    %1952 = vmatpush.xpose.msra.mxu0 0.0
    %1953 = vmatpush.xpose.msra.mxu0 0.0
    %1954 = vmatpush.xpose.msra.mxu0 0.0
    %1955 = vmatpush.xpose.msra.mxu0 0.0
    %1956 = vmatpush.xpose.msra.mxu0 0.0
    %1957 = vmatpush.xpose.msra.mxu0 0.0
    %1958 = vmatpush.xpose.msra.mxu0 0.0
    %1959 = vmatpush.xpose.msra.mxu0 0.0
    %1960 = vmatpush.xpose.msra.mxu0 0.0
    %1961 = vmatpush.xpose.msra.mxu0 0.0
    %1962 = vmatpush.xpose.msra.mxu0 %v1945
    %1963 = vmatmul.f32.gmra.mxu0 %v1943
    %v1964 = vpop.f32.mrf.mxu0
    %v1965 = vadd.f32 %v1941, %v1964
    %1966 = vdwg.mxu0
    %1967 = vrot.lane.b32.xlu0 %v1803, 96
    %v1968 = vpop.permute.xlu0 %1967
    %v1977 = vperm.slane %v1895, %v309
    %v1978 = vperm.slane %v1898, %v309
    %v1979 = vperm.slane %v1901, %v309
    %v1980 = vperm.slane %v1904, %v309
    %v1981 = vperm.slane %v1907, %v309
    %v1982 = vperm.slane %v1910, %v309
    %v1983 = vperm.slane %v1913, %v309
    %v1984 = vperm.slane %v1916, %v309
    %v1985 = vsel %vm318, %v1978, %v1977
    %v1986 = vsel %vm320, %v1979, %v1985
    %v1987 = vsel %vm322, %v1980, %v1986
    %v1988 = vsel %vm324, %v1981, %v1987
    %v1989 = vsel %vm326, %v1982, %v1988
    %v1990 = vsel %vm328, %v1983, %v1989
    %v1991 = vsel %vm330, %v1984, %v1990
    %v1993 = vsel %vm249, %v1803, 0
    %v1995 = vsel %vm249, %v1968, 0
    %1997 = vmatpush.xpose.msra.mxu0 0.0
    %1998 = vmatpush.xpose.msra.mxu0 0.0
    %1999 = vmatpush.xpose.msra.mxu0 0.0
    %2000 = vmatpush.xpose.msra.mxu0 0.0
    %2001 = vmatpush.xpose.msra.mxu0 0.0
    %2002 = vmatpush.xpose.msra.mxu0 0.0
    %2003 = vmatpush.xpose.msra.mxu0 0.0
    %2004 = vmatpush.xpose.msra.mxu0 0.0
    %2005 = vmatpush.xpose.msra.mxu0 0.0
    %2006 = vmatpush.xpose.msra.mxu0 0.0
    %2007 = vmatpush.xpose.msra.mxu0 0.0
    %2008 = vmatpush.xpose.msra.mxu0 0.0
    %2009 = vmatpush.xpose.msra.mxu0 0.0
    %2010 = vmatpush.xpose.msra.mxu0 0.0
    %2011 = vmatpush.xpose.msra.mxu0 0.0
    %2012 = vmatpush.xpose.msra.mxu0 %v1995
    %2013 = vmatmul.f32.gmra.mxu0 %v1993
    %v2014 = vpop.f32.mrf.mxu0
    %v2015 = vadd.f32 %v1991, %v2014
    %2016 = vdwg.mxu0
    %v2017 = vsel %vm249, %v1965, -inf
    %2018 = vmax.xlane.f32.xlu0 %v2017
    %v2019 = vpop.xlane.xlu0 %2018
    %v2020 = vsel %vm249, %v2015, -inf
    %2021 = vmax.xlane.f32.xlu0 %v2020
    %v2022 = vpop.xlane.xlu0 %2021
    %v2023 = vsub.f32 %v1965, %v2019
    %v2024 = vsub.f32 %v2015, %v2022
    %v2025 = vmul.f32 %v2023, 1.442695
    %v2026 = vpow.pop %v2025
    %v2027 = vmul.f32 %v2024, 1.442695
    %v2028 = vpow.pop %v2027
    %v2029 = vsel %vm249, %v2026, 0.0
    %2030 = vadd.xlane.f32.xlu0 %v2029
    %v2031 = vpop.xlane.xlu0 %2030
    %v2032 = vsel %vm249, %v2028, 0.0
    %2033 = vadd.xlane.f32.xlu0 %v2032
    %v2034 = vpop.xlane.xlu0 %2033
    %v2035 = vrcp.pop %v2031
    %v2036 = vrcp.pop %v2034
    %v2037 = vmul.f32 %v2026, %v2035
    %v2038 = vmul.f32 %v2028, %v2036
    %2039 = vrot.lane.b32.xlu0 %v1800, 64
    %v2040 = vpop.permute.xlu0 %2039
    %v2043 = vsel %vm249, %v2037, 0
    %2045 = vmatpush.msra.mxu0 0.0
    %2046 = vmatpush.msra.mxu0 0.0
    %2047 = vmatpush.msra.mxu0 0.0
    %2048 = vmatpush.msra.mxu0 0.0
    %2049 = vmatpush.msra.mxu0 0.0
    %2050 = vmatpush.msra.mxu0 0.0
    %2051 = vmatpush.msra.mxu0 0.0
    %2052 = vmatpush.msra.mxu0 0.0
    %2053 = vmatpush.msra.mxu0 0.0
    %2054 = vmatpush.msra.mxu0 0.0
    %2055 = vmatpush.msra.mxu0 0.0
    %2056 = vmatpush.msra.mxu0 0.0
    %2057 = vmatpush.msra.mxu0 0.0
    %2058 = vmatpush.msra.mxu0 0.0
    %2059 = vmatpush.msra.mxu0 0.0
    %2060 = vmatpush.msra.mxu0 %v2040
    %2061 = vmatmul.f32.gmra.mxu0 %v2043
    %v2062 = vpop.f32.mrf.mxu0
    %v2063 = vadd.f32 0.0, %v2062
    %2064 = vdwg.mxu0
    %2065 = vrot.lane.b32.xlu0 %v1803, 64
    %v2066 = vpop.permute.xlu0 %2065
    %v2069 = vsel %vm249, %v2038, 0
    %2071 = vmatpush.msra.mxu0 0.0
    %2072 = vmatpush.msra.mxu0 0.0
    %2073 = vmatpush.msra.mxu0 0.0
    %2074 = vmatpush.msra.mxu0 0.0
    %2075 = vmatpush.msra.mxu0 0.0
    %2076 = vmatpush.msra.mxu0 0.0
    %2077 = vmatpush.msra.mxu0 0.0
    %2078 = vmatpush.msra.mxu0 0.0
    %2079 = vmatpush.msra.mxu0 0.0
    %2080 = vmatpush.msra.mxu0 0.0
    %2081 = vmatpush.msra.mxu0 0.0
    %2082 = vmatpush.msra.mxu0 0.0
    %2083 = vmatpush.msra.mxu0 0.0
    %2084 = vmatpush.msra.mxu0 0.0
    %2085 = vmatpush.msra.mxu0 0.0
    %2086 = vmatpush.msra.mxu0 %v2066
    %2087 = vmatmul.f32.gmra.mxu0 %v2069
    %v2088 = vpop.f32.mrf.mxu0
    %v2089 = vadd.f32 0.0, %v2088
    %2090 = vdwg.mxu0
    %v2091 = vmul.f32 %v1821, %v490
    %v2092 = vmul.f32 %v1822, %v492
    %v2093 = vmul.f32 %v1823, %v494
    %v2094 = vmul.f32 %v1824, %v496
    %v2095 = vmul.f32 %v1825, %v498
    %v2096 = vmul.f32 %v1826, %v500
    %v2097 = vmul.f32 %v1827, %v502
    %v2098 = vmul.f32 %v1828, %v504
    %v2099 = vmul.f32 %v1829, %v490
    %v2100 = vmul.f32 %v1830, %v492
    %v2101 = vmul.f32 %v1831, %v494
    %v2102 = vmul.f32 %v1832, %v496
    %v2103 = vmul.f32 %v1833, %v498
    %v2104 = vmul.f32 %v1834, %v500
    %v2105 = vmul.f32 %v1835, %v502
    %v2106 = vmul.f32 %v1836, %v504
    %2123 = vrot.lane.b32.xlu0 %v2091, 120
    %v2124 = vpop.permute.xlu0 %2123
    %2125 = vrot.lane.b32.xlu0 %v2092, 120
    %v2126 = vpop.permute.xlu0 %2125
    %2127 = vrot.lane.b32.xlu0 %v2093, 120
    %v2128 = vpop.permute.xlu0 %2127
    %2129 = vrot.lane.b32.xlu0 %v2094, 120
    %v2130 = vpop.permute.xlu0 %2129
    %2131 = vrot.lane.b32.xlu0 %v2095, 120
    %v2132 = vpop.permute.xlu0 %2131
    %2133 = vrot.lane.b32.xlu0 %v2096, 120
    %v2134 = vpop.permute.xlu0 %2133
    %2135 = vrot.lane.b32.xlu0 %v2097, 120
    %v2136 = vpop.permute.xlu0 %2135
    %2137 = vrot.lane.b32.xlu0 %v2098, 120
    %v2138 = vpop.permute.xlu0 %2137
    %2139 = vrot.lane.b32.xlu0 %v2099, 120
    %v2140 = vpop.permute.xlu0 %2139
    %2141 = vrot.lane.b32.xlu0 %v2100, 120
    %v2142 = vpop.permute.xlu0 %2141
    %2143 = vrot.lane.b32.xlu0 %v2101, 120
    %v2144 = vpop.permute.xlu0 %2143
    %2145 = vrot.lane.b32.xlu0 %v2102, 120
    %v2146 = vpop.permute.xlu0 %2145
    %2147 = vrot.lane.b32.xlu0 %v2103, 120
    %v2148 = vpop.permute.xlu0 %2147
    %2149 = vrot.lane.b32.xlu0 %v2104, 120
    %v2150 = vpop.permute.xlu0 %2149
    %2151 = vrot.lane.b32.xlu0 %v2105, 120
    %v2152 = vpop.permute.xlu0 %2151
    %2153 = vrot.lane.b32.xlu0 %v2106, 120
    %v2154 = vpop.permute.xlu0 %2153
    %v2171 = vsel %vm249, %v2124, 0.0
    %2172 = vadd.xlane.f32.xlu0 %v2171
    %v2173 = vpop.xlane.xlu0 %2172
    %v2174 = vsel %vm249, %v2126, 0.0
    %2175 = vadd.xlane.f32.xlu0 %v2174
    %v2176 = vpop.xlane.xlu0 %2175
    %v2177 = vsel %vm249, %v2128, 0.0
    %2178 = vadd.xlane.f32.xlu0 %v2177
    %v2179 = vpop.xlane.xlu0 %2178
    %v2180 = vsel %vm249, %v2130, 0.0
    %2181 = vadd.xlane.f32.xlu0 %v2180
    %v2182 = vpop.xlane.xlu0 %2181
    %v2183 = vsel %vm249, %v2132, 0.0
    %2184 = vadd.xlane.f32.xlu0 %v2183
    %v2185 = vpop.xlane.xlu0 %2184
    %v2186 = vsel %vm249, %v2134, 0.0
    %2187 = vadd.xlane.f32.xlu0 %v2186
    %v2188 = vpop.xlane.xlu0 %2187
    %v2189 = vsel %vm249, %v2136, 0.0
    %2190 = vadd.xlane.f32.xlu0 %v2189
    %v2191 = vpop.xlane.xlu0 %2190
    %v2192 = vsel %vm249, %v2138, 0.0
    %2193 = vadd.xlane.f32.xlu0 %v2192
    %v2194 = vpop.xlane.xlu0 %2193
    %v2195 = vsel %vm249, %v2140, 0.0
    %2196 = vadd.xlane.f32.xlu0 %v2195
    %v2197 = vpop.xlane.xlu0 %2196
    %v2198 = vsel %vm249, %v2142, 0.0
    %2199 = vadd.xlane.f32.xlu0 %v2198
    %v2200 = vpop.xlane.xlu0 %2199
    %v2201 = vsel %vm249, %v2144, 0.0
    %2202 = vadd.xlane.f32.xlu0 %v2201
    %v2203 = vpop.xlane.xlu0 %2202
    %v2204 = vsel %vm249, %v2146, 0.0
    %2205 = vadd.xlane.f32.xlu0 %v2204
    %v2206 = vpop.xlane.xlu0 %2205
    %v2207 = vsel %vm249, %v2148, 0.0
    %2208 = vadd.xlane.f32.xlu0 %v2207
    %v2209 = vpop.xlane.xlu0 %2208
    %v2210 = vsel %vm249, %v2150, 0.0
    %2211 = vadd.xlane.f32.xlu0 %v2210
    %v2212 = vpop.xlane.xlu0 %2211
    %v2213 = vsel %vm249, %v2152, 0.0
    %2214 = vadd.xlane.f32.xlu0 %v2213
    %v2215 = vpop.xlane.xlu0 %2214
    %v2216 = vsel %vm249, %v2154, 0.0
    %2217 = vadd.xlane.f32.xlu0 %v2216
    %v2218 = vpop.xlane.xlu0 %2217
    %2219 = vrot.lane.b32.xlu0 %v1800, 120
    %v2220 = vpop.permute.xlu0 %2219
    %2221 = vrot.lane.b32.xlu0 %v1800, 88
    %v2222 = vpop.permute.xlu0 %2221
    %v2231 = vperm.slane %v2173, %v309
    %v2232 = vperm.slane %v2176, %v309
    %v2233 = vperm.slane %v2179, %v309
    %v2234 = vperm.slane %v2182, %v309
    %v2235 = vperm.slane %v2185, %v309
    %v2236 = vperm.slane %v2188, %v309
    %v2237 = vperm.slane %v2191, %v309
    %v2238 = vperm.slane %v2194, %v309
    %v2239 = vsel %vm318, %v2232, %v2231
    %v2240 = vsel %vm320, %v2233, %v2239
    %v2241 = vsel %vm322, %v2234, %v2240
    %v2242 = vsel %vm324, %v2235, %v2241
    %v2243 = vsel %vm326, %v2236, %v2242
    %v2244 = vsel %vm328, %v2237, %v2243
    %v2245 = vsel %vm330, %v2238, %v2244
    %v2247 = vsel %vm249, %v2220, 0
    %v2249 = vsel %vm249, %v2222, 0
    %2251 = vmatpush.xpose.msra.mxu0 0.0
    %2252 = vmatpush.xpose.msra.mxu0 0.0
    %2253 = vmatpush.xpose.msra.mxu0 0.0
    %2254 = vmatpush.xpose.msra.mxu0 0.0
    %2255 = vmatpush.xpose.msra.mxu0 0.0
    %2256 = vmatpush.xpose.msra.mxu0 0.0
    %2257 = vmatpush.xpose.msra.mxu0 0.0
    %2258 = vmatpush.xpose.msra.mxu0 0.0
    %2259 = vmatpush.xpose.msra.mxu0 0.0
    %2260 = vmatpush.xpose.msra.mxu0 0.0
    %2261 = vmatpush.xpose.msra.mxu0 0.0
    %2262 = vmatpush.xpose.msra.mxu0 0.0
    %2263 = vmatpush.xpose.msra.mxu0 0.0
    %2264 = vmatpush.xpose.msra.mxu0 0.0
    %2265 = vmatpush.xpose.msra.mxu0 0.0
    %2266 = vmatpush.xpose.msra.mxu0 %v2249
    %2267 = vmatmul.f32.gmra.mxu0 %v2247
    %v2268 = vpop.f32.mrf.mxu0
    %v2269 = vadd.f32 %v2245, %v2268
    %2270 = vdwg.mxu0
    %2271 = vrot.lane.b32.xlu0 %v1803, 120
    %v2272 = vpop.permute.xlu0 %2271
    %2273 = vrot.lane.b32.xlu0 %v1803, 88
    %v2274 = vpop.permute.xlu0 %2273
    %v2283 = vperm.slane %v2197, %v309
    %v2284 = vperm.slane %v2200, %v309
    %v2285 = vperm.slane %v2203, %v309
    %v2286 = vperm.slane %v2206, %v309
    %v2287 = vperm.slane %v2209, %v309
    %v2288 = vperm.slane %v2212, %v309
    %v2289 = vperm.slane %v2215, %v309
    %v2290 = vperm.slane %v2218, %v309
    %v2291 = vsel %vm318, %v2284, %v2283
    %v2292 = vsel %vm320, %v2285, %v2291
    %v2293 = vsel %vm322, %v2286, %v2292
    %v2294 = vsel %vm324, %v2287, %v2293
    %v2295 = vsel %vm326, %v2288, %v2294
    %v2296 = vsel %vm328, %v2289, %v2295
    %v2297 = vsel %vm330, %v2290, %v2296
    %v2299 = vsel %vm249, %v2272, 0
    %v2301 = vsel %vm249, %v2274, 0
    %2303 = vmatpush.xpose.msra.mxu0 0.0
    %2304 = vmatpush.xpose.msra.mxu0 0.0
    %2305 = vmatpush.xpose.msra.mxu0 0.0
    %2306 = vmatpush.xpose.msra.mxu0 0.0
    %2307 = vmatpush.xpose.msra.mxu0 0.0
    %2308 = vmatpush.xpose.msra.mxu0 0.0
    %2309 = vmatpush.xpose.msra.mxu0 0.0
    %2310 = vmatpush.xpose.msra.mxu0 0.0
    %2311 = vmatpush.xpose.msra.mxu0 0.0
    %2312 = vmatpush.xpose.msra.mxu0 0.0
    %2313 = vmatpush.xpose.msra.mxu0 0.0
    %2314 = vmatpush.xpose.msra.mxu0 0.0
    %2315 = vmatpush.xpose.msra.mxu0 0.0
    %2316 = vmatpush.xpose.msra.mxu0 0.0
    %2317 = vmatpush.xpose.msra.mxu0 0.0
    %2318 = vmatpush.xpose.msra.mxu0 %v2301
    %2319 = vmatmul.f32.gmra.mxu0 %v2299
    %v2320 = vpop.f32.mrf.mxu0
    %v2321 = vadd.f32 %v2297, %v2320
    %2322 = vdwg.mxu0
    %v2323 = vsel %vm249, %v2269, -inf
    %2324 = vmax.xlane.f32.xlu0 %v2323
    %v2325 = vpop.xlane.xlu0 %2324
    %v2326 = vsel %vm249, %v2321, -inf
    %2327 = vmax.xlane.f32.xlu0 %v2326
    %v2328 = vpop.xlane.xlu0 %2327
    %v2329 = vsub.f32 %v2269, %v2325
    %v2330 = vsub.f32 %v2321, %v2328
    %v2331 = vmul.f32 %v2329, 1.442695
    %v2332 = vpow.pop %v2331
    %v2333 = vmul.f32 %v2330, 1.442695
    %v2334 = vpow.pop %v2333
    %v2335 = vsel %vm249, %v2332, 0.0
    %2336 = vadd.xlane.f32.xlu0 %v2335
    %v2337 = vpop.xlane.xlu0 %2336
    %v2338 = vsel %vm249, %v2334, 0.0
    %2339 = vadd.xlane.f32.xlu0 %v2338
    %v2340 = vpop.xlane.xlu0 %2339
    %v2341 = vrcp.pop %v2337
    %v2342 = vrcp.pop %v2340
    %v2343 = vmul.f32 %v2332, %v2341
    %v2344 = vmul.f32 %v2334, %v2342
    %2345 = vrot.lane.b32.xlu0 %v1800, 56
    %v2346 = vpop.permute.xlu0 %2345
    %v2349 = vsel %vm249, %v2343, 0
    %2351 = vmatpush.msra.mxu0 0.0
    %2352 = vmatpush.msra.mxu0 0.0
    %2353 = vmatpush.msra.mxu0 0.0
    %2354 = vmatpush.msra.mxu0 0.0
    %2355 = vmatpush.msra.mxu0 0.0
    %2356 = vmatpush.msra.mxu0 0.0
    %2357 = vmatpush.msra.mxu0 0.0
    %2358 = vmatpush.msra.mxu0 0.0
    %2359 = vmatpush.msra.mxu0 0.0
    %2360 = vmatpush.msra.mxu0 0.0
    %2361 = vmatpush.msra.mxu0 0.0
    %2362 = vmatpush.msra.mxu0 0.0
    %2363 = vmatpush.msra.mxu0 0.0
    %2364 = vmatpush.msra.mxu0 0.0
    %2365 = vmatpush.msra.mxu0 0.0
    %2366 = vmatpush.msra.mxu0 %v2346
    %2367 = vmatmul.f32.gmra.mxu0 %v2349
    %v2368 = vpop.f32.mrf.mxu0
    %v2369 = vadd.f32 0.0, %v2368
    %2370 = vdwg.mxu0
    %2371 = vrot.lane.b32.xlu0 %v1803, 56
    %v2372 = vpop.permute.xlu0 %2371
    %v2375 = vsel %vm249, %v2344, 0
    %2377 = vmatpush.msra.mxu0 0.0
    %2378 = vmatpush.msra.mxu0 0.0
    %2379 = vmatpush.msra.mxu0 0.0
    %2380 = vmatpush.msra.mxu0 0.0
    %2381 = vmatpush.msra.mxu0 0.0
    %2382 = vmatpush.msra.mxu0 0.0
    %2383 = vmatpush.msra.mxu0 0.0
    %2384 = vmatpush.msra.mxu0 0.0
    %2385 = vmatpush.msra.mxu0 0.0
    %2386 = vmatpush.msra.mxu0 0.0
    %2387 = vmatpush.msra.mxu0 0.0
    %2388 = vmatpush.msra.mxu0 0.0
    %2389 = vmatpush.msra.mxu0 0.0
    %2390 = vmatpush.msra.mxu0 0.0
    %2391 = vmatpush.msra.mxu0 0.0
    %2392 = vmatpush.msra.mxu0 %v2372
    %2393 = vmatmul.f32.gmra.mxu0 %v2375
    %v2394 = vpop.f32.mrf.mxu0
    %v2395 = vadd.f32 0.0, %v2394
    %2396 = vdwg.mxu0
    %v2397 = vmul.f32 %v1821, %v828
    %v2398 = vmul.f32 %v1822, %v830
    %v2399 = vmul.f32 %v1823, %v832
    %v2400 = vmul.f32 %v1824, %v834
    %v2401 = vmul.f32 %v1825, %v836
    %v2402 = vmul.f32 %v1826, %v838
    %v2403 = vmul.f32 %v1827, %v840
    %v2404 = vmul.f32 %v1828, %v842
    %v2405 = vmul.f32 %v1829, %v828
    %v2406 = vmul.f32 %v1830, %v830
    %v2407 = vmul.f32 %v1831, %v832
    %v2408 = vmul.f32 %v1832, %v834
    %v2409 = vmul.f32 %v1833, %v836
    %v2410 = vmul.f32 %v1834, %v838
    %v2411 = vmul.f32 %v1835, %v840
    %v2412 = vmul.f32 %v1836, %v842
    %2429 = vrot.lane.b32.xlu0 %v2397, 112
    %v2430 = vpop.permute.xlu0 %2429
    %2431 = vrot.lane.b32.xlu0 %v2398, 112
    %v2432 = vpop.permute.xlu0 %2431
    %2433 = vrot.lane.b32.xlu0 %v2399, 112
    %v2434 = vpop.permute.xlu0 %2433
    %2435 = vrot.lane.b32.xlu0 %v2400, 112
    %v2436 = vpop.permute.xlu0 %2435
    %2437 = vrot.lane.b32.xlu0 %v2401, 112
    %v2438 = vpop.permute.xlu0 %2437
    %2439 = vrot.lane.b32.xlu0 %v2402, 112
    %v2440 = vpop.permute.xlu0 %2439
    %2441 = vrot.lane.b32.xlu0 %v2403, 112
    %v2442 = vpop.permute.xlu0 %2441
    %2443 = vrot.lane.b32.xlu0 %v2404, 112
    %v2444 = vpop.permute.xlu0 %2443
    %2445 = vrot.lane.b32.xlu0 %v2405, 112
    %v2446 = vpop.permute.xlu0 %2445
    %2447 = vrot.lane.b32.xlu0 %v2406, 112
    %v2448 = vpop.permute.xlu0 %2447
    %2449 = vrot.lane.b32.xlu0 %v2407, 112
    %v2450 = vpop.permute.xlu0 %2449
    %2451 = vrot.lane.b32.xlu0 %v2408, 112
    %v2452 = vpop.permute.xlu0 %2451
    %2453 = vrot.lane.b32.xlu0 %v2409, 112
    %v2454 = vpop.permute.xlu0 %2453
    %2455 = vrot.lane.b32.xlu0 %v2410, 112
    %v2456 = vpop.permute.xlu0 %2455
    %2457 = vrot.lane.b32.xlu0 %v2411, 112
    %v2458 = vpop.permute.xlu0 %2457
    %2459 = vrot.lane.b32.xlu0 %v2412, 112
    %v2460 = vpop.permute.xlu0 %2459
    %v2477 = vsel %vm249, %v2430, 0.0
    %2478 = vadd.xlane.f32.xlu0 %v2477
    %v2479 = vpop.xlane.xlu0 %2478
    %v2480 = vsel %vm249, %v2432, 0.0
    %2481 = vadd.xlane.f32.xlu0 %v2480
    %v2482 = vpop.xlane.xlu0 %2481
    %v2483 = vsel %vm249, %v2434, 0.0
    %2484 = vadd.xlane.f32.xlu0 %v2483
    %v2485 = vpop.xlane.xlu0 %2484
    %v2486 = vsel %vm249, %v2436, 0.0
    %2487 = vadd.xlane.f32.xlu0 %v2486
    %v2488 = vpop.xlane.xlu0 %2487
    %v2489 = vsel %vm249, %v2438, 0.0
    %2490 = vadd.xlane.f32.xlu0 %v2489
    %v2491 = vpop.xlane.xlu0 %2490
    %v2492 = vsel %vm249, %v2440, 0.0
    %2493 = vadd.xlane.f32.xlu0 %v2492
    %v2494 = vpop.xlane.xlu0 %2493
    %v2495 = vsel %vm249, %v2442, 0.0
    %2496 = vadd.xlane.f32.xlu0 %v2495
    %v2497 = vpop.xlane.xlu0 %2496
    %v2498 = vsel %vm249, %v2444, 0.0
    %2499 = vadd.xlane.f32.xlu0 %v2498
    %v2500 = vpop.xlane.xlu0 %2499
    %v2501 = vsel %vm249, %v2446, 0.0
    %2502 = vadd.xlane.f32.xlu0 %v2501
    %v2503 = vpop.xlane.xlu0 %2502
    %v2504 = vsel %vm249, %v2448, 0.0
    %2505 = vadd.xlane.f32.xlu0 %v2504
    %v2506 = vpop.xlane.xlu0 %2505
    %v2507 = vsel %vm249, %v2450, 0.0
    %2508 = vadd.xlane.f32.xlu0 %v2507
    %v2509 = vpop.xlane.xlu0 %2508
    %v2510 = vsel %vm249, %v2452, 0.0
    %2511 = vadd.xlane.f32.xlu0 %v2510
    %v2512 = vpop.xlane.xlu0 %2511
    %v2513 = vsel %vm249, %v2454, 0.0
    %2514 = vadd.xlane.f32.xlu0 %v2513
    %v2515 = vpop.xlane.xlu0 %2514
    %v2516 = vsel %vm249, %v2456, 0.0
    %2517 = vadd.xlane.f32.xlu0 %v2516
    %v2518 = vpop.xlane.xlu0 %2517
    %v2519 = vsel %vm249, %v2458, 0.0
    %2520 = vadd.xlane.f32.xlu0 %v2519
    %v2521 = vpop.xlane.xlu0 %2520
    %v2522 = vsel %vm249, %v2460, 0.0
    %2523 = vadd.xlane.f32.xlu0 %v2522
    %v2524 = vpop.xlane.xlu0 %2523
    %2525 = vrot.lane.b32.xlu0 %v1800, 112
    %v2526 = vpop.permute.xlu0 %2525
    %2527 = vrot.lane.b32.xlu0 %v1800, 80
    %v2528 = vpop.permute.xlu0 %2527
    %v2537 = vperm.slane %v2479, %v309
    %v2538 = vperm.slane %v2482, %v309
    %v2539 = vperm.slane %v2485, %v309
    %v2540 = vperm.slane %v2488, %v309
    %v2541 = vperm.slane %v2491, %v309
    %v2542 = vperm.slane %v2494, %v309
    %v2543 = vperm.slane %v2497, %v309
    %v2544 = vperm.slane %v2500, %v309
    %v2545 = vsel %vm318, %v2538, %v2537
    %v2546 = vsel %vm320, %v2539, %v2545
    %v2547 = vsel %vm322, %v2540, %v2546
    %v2548 = vsel %vm324, %v2541, %v2547
    %v2549 = vsel %vm326, %v2542, %v2548
    %v2550 = vsel %vm328, %v2543, %v2549
    %v2551 = vsel %vm330, %v2544, %v2550
    %v2553 = vsel %vm249, %v2526, 0
    %v2555 = vsel %vm249, %v2528, 0
    %2557 = vmatpush.xpose.msra.mxu0 0.0
    %2558 = vmatpush.xpose.msra.mxu0 0.0
    %2559 = vmatpush.xpose.msra.mxu0 0.0
    %2560 = vmatpush.xpose.msra.mxu0 0.0
    %2561 = vmatpush.xpose.msra.mxu0 0.0
    %2562 = vmatpush.xpose.msra.mxu0 0.0
    %2563 = vmatpush.xpose.msra.mxu0 0.0
    %2564 = vmatpush.xpose.msra.mxu0 0.0
    %2565 = vmatpush.xpose.msra.mxu0 0.0
    %2566 = vmatpush.xpose.msra.mxu0 0.0
    %2567 = vmatpush.xpose.msra.mxu0 0.0
    %2568 = vmatpush.xpose.msra.mxu0 0.0
    %2569 = vmatpush.xpose.msra.mxu0 0.0
    %2570 = vmatpush.xpose.msra.mxu0 0.0
    %2571 = vmatpush.xpose.msra.mxu0 0.0
    %2572 = vmatpush.xpose.msra.mxu0 %v2555
    %2573 = vmatmul.f32.gmra.mxu0 %v2553
    %v2574 = vpop.f32.mrf.mxu0
    %v2575 = vadd.f32 %v2551, %v2574
    %2576 = vdwg.mxu0
    %2577 = vrot.lane.b32.xlu0 %v1803, 112
    %v2578 = vpop.permute.xlu0 %2577
    %2579 = vrot.lane.b32.xlu0 %v1803, 80
    %v2580 = vpop.permute.xlu0 %2579
    %v2589 = vperm.slane %v2503, %v309
    %v2590 = vperm.slane %v2506, %v309
    %v2591 = vperm.slane %v2509, %v309
    %v2592 = vperm.slane %v2512, %v309
    %v2593 = vperm.slane %v2515, %v309
    %v2594 = vperm.slane %v2518, %v309
    %v2595 = vperm.slane %v2521, %v309
    %v2596 = vperm.slane %v2524, %v309
    %v2597 = vsel %vm318, %v2590, %v2589
    %v2598 = vsel %vm320, %v2591, %v2597
    %v2599 = vsel %vm322, %v2592, %v2598
    %v2600 = vsel %vm324, %v2593, %v2599
    %v2601 = vsel %vm326, %v2594, %v2600
    %v2602 = vsel %vm328, %v2595, %v2601
    %v2603 = vsel %vm330, %v2596, %v2602
    %v2605 = vsel %vm249, %v2578, 0
    %v2607 = vsel %vm249, %v2580, 0
    %2609 = vmatpush.xpose.msra.mxu0 0.0
    %2610 = vmatpush.xpose.msra.mxu0 0.0
    %2611 = vmatpush.xpose.msra.mxu0 0.0
    %2612 = vmatpush.xpose.msra.mxu0 0.0
    %2613 = vmatpush.xpose.msra.mxu0 0.0
    %2614 = vmatpush.xpose.msra.mxu0 0.0
    %2615 = vmatpush.xpose.msra.mxu0 0.0
    %2616 = vmatpush.xpose.msra.mxu0 0.0
    %2617 = vmatpush.xpose.msra.mxu0 0.0
    %2618 = vmatpush.xpose.msra.mxu0 0.0
    %2619 = vmatpush.xpose.msra.mxu0 0.0
    %2620 = vmatpush.xpose.msra.mxu0 0.0
    %2621 = vmatpush.xpose.msra.mxu0 0.0
    %2622 = vmatpush.xpose.msra.mxu0 0.0
    %2623 = vmatpush.xpose.msra.mxu0 0.0
    %2624 = vmatpush.xpose.msra.mxu0 %v2607
    %2625 = vmatmul.f32.gmra.mxu0 %v2605
    %v2626 = vpop.f32.mrf.mxu0
    %v2627 = vadd.f32 %v2603, %v2626
    %2628 = vdwg.mxu0
    %v2629 = vsel %vm249, %v2575, -inf
    %2630 = vmax.xlane.f32.xlu0 %v2629
    %v2631 = vpop.xlane.xlu0 %2630
    %v2632 = vsel %vm249, %v2627, -inf
    %2633 = vmax.xlane.f32.xlu0 %v2632
    %v2634 = vpop.xlane.xlu0 %2633
    %v2635 = vsub.f32 %v2575, %v2631
    %v2636 = vsub.f32 %v2627, %v2634
    %v2637 = vmul.f32 %v2635, 1.442695
    %v2638 = vpow.pop %v2637
    %v2639 = vmul.f32 %v2636, 1.442695
    %v2640 = vpow.pop %v2639
    %v2641 = vsel %vm249, %v2638, 0.0
    %2642 = vadd.xlane.f32.xlu0 %v2641
    %v2643 = vpop.xlane.xlu0 %2642
    %v2644 = vsel %vm249, %v2640, 0.0
    %2645 = vadd.xlane.f32.xlu0 %v2644
    %v2646 = vpop.xlane.xlu0 %2645
    %v2647 = vrcp.pop %v2643
    %v2648 = vrcp.pop %v2646
    %v2649 = vmul.f32 %v2638, %v2647
    %v2650 = vmul.f32 %v2640, %v2648
    %2651 = vrot.lane.b32.xlu0 %v1800, 48
    %v2652 = vpop.permute.xlu0 %2651
    %v2655 = vsel %vm249, %v2649, 0
    %2657 = vmatpush.msra.mxu0 0.0
    %2658 = vmatpush.msra.mxu0 0.0
    %2659 = vmatpush.msra.mxu0 0.0
    %2660 = vmatpush.msra.mxu0 0.0
    %2661 = vmatpush.msra.mxu0 0.0
    %2662 = vmatpush.msra.mxu0 0.0
    %2663 = vmatpush.msra.mxu0 0.0
    %2664 = vmatpush.msra.mxu0 0.0
    %2665 = vmatpush.msra.mxu0 0.0
    %2666 = vmatpush.msra.mxu0 0.0
    %2667 = vmatpush.msra.mxu0 0.0
    %2668 = vmatpush.msra.mxu0 0.0
    %2669 = vmatpush.msra.mxu0 0.0
    %2670 = vmatpush.msra.mxu0 0.0
    %2671 = vmatpush.msra.mxu0 0.0
    %2672 = vmatpush.msra.mxu0 %v2652
    %2673 = vmatmul.f32.gmra.mxu0 %v2655
    %v2674 = vpop.f32.mrf.mxu0
    %v2675 = vadd.f32 0.0, %v2674
    %2676 = vdwg.mxu0
    %2677 = vrot.lane.b32.xlu0 %v1803, 48
    %v2678 = vpop.permute.xlu0 %2677
    %v2681 = vsel %vm249, %v2650, 0
    %2683 = vmatpush.msra.mxu0 0.0
    %2684 = vmatpush.msra.mxu0 0.0
    %2685 = vmatpush.msra.mxu0 0.0
    %2686 = vmatpush.msra.mxu0 0.0
    %2687 = vmatpush.msra.mxu0 0.0
    %2688 = vmatpush.msra.mxu0 0.0
    %2689 = vmatpush.msra.mxu0 0.0
    %2690 = vmatpush.msra.mxu0 0.0
    %2691 = vmatpush.msra.mxu0 0.0
    %2692 = vmatpush.msra.mxu0 0.0
    %2693 = vmatpush.msra.mxu0 0.0
    %2694 = vmatpush.msra.mxu0 0.0
    %2695 = vmatpush.msra.mxu0 0.0
    %2696 = vmatpush.msra.mxu0 0.0
    %2697 = vmatpush.msra.mxu0 0.0
    %2698 = vmatpush.msra.mxu0 %v2678
    %2699 = vmatmul.f32.gmra.mxu0 %v2681
    %v2700 = vpop.f32.mrf.mxu0
    %v2701 = vadd.f32 0.0, %v2700
    %2702 = vdwg.mxu0
    %v2703 = vmul.f32 %v1821, %v1166
    %v2704 = vmul.f32 %v1822, %v1168
    %v2705 = vmul.f32 %v1823, %v1170
    %v2706 = vmul.f32 %v1824, %v1172
    %v2707 = vmul.f32 %v1825, %v1174
    %v2708 = vmul.f32 %v1826, %v1176
    %v2709 = vmul.f32 %v1827, %v1178
    %v2710 = vmul.f32 %v1828, %v1180
    %v2711 = vmul.f32 %v1829, %v1166
    %v2712 = vmul.f32 %v1830, %v1168
    %v2713 = vmul.f32 %v1831, %v1170
    %v2714 = vmul.f32 %v1832, %v1172
    %v2715 = vmul.f32 %v1833, %v1174
    %v2716 = vmul.f32 %v1834, %v1176
    %v2717 = vmul.f32 %v1835, %v1178
    %v2718 = vmul.f32 %v1836, %v1180
    %2735 = vrot.lane.b32.xlu0 %v2703, 104
    %v2736 = vpop.permute.xlu0 %2735
    %2737 = vrot.lane.b32.xlu0 %v2704, 104
    %v2738 = vpop.permute.xlu0 %2737
    %2739 = vrot.lane.b32.xlu0 %v2705, 104
    %v2740 = vpop.permute.xlu0 %2739
    %2741 = vrot.lane.b32.xlu0 %v2706, 104
    %v2742 = vpop.permute.xlu0 %2741
    %2743 = vrot.lane.b32.xlu0 %v2707, 104
    %v2744 = vpop.permute.xlu0 %2743
    %2745 = vrot.lane.b32.xlu0 %v2708, 104
    %v2746 = vpop.permute.xlu0 %2745
    %2747 = vrot.lane.b32.xlu0 %v2709, 104
    %v2748 = vpop.permute.xlu0 %2747
    %2749 = vrot.lane.b32.xlu0 %v2710, 104
    %v2750 = vpop.permute.xlu0 %2749
    %2751 = vrot.lane.b32.xlu0 %v2711, 104
    %v2752 = vpop.permute.xlu0 %2751
    %2753 = vrot.lane.b32.xlu0 %v2712, 104
    %v2754 = vpop.permute.xlu0 %2753
    %2755 = vrot.lane.b32.xlu0 %v2713, 104
    %v2756 = vpop.permute.xlu0 %2755
    %2757 = vrot.lane.b32.xlu0 %v2714, 104
    %v2758 = vpop.permute.xlu0 %2757
    %2759 = vrot.lane.b32.xlu0 %v2715, 104
    %v2760 = vpop.permute.xlu0 %2759
    %2761 = vrot.lane.b32.xlu0 %v2716, 104
    %v2762 = vpop.permute.xlu0 %2761
    %2763 = vrot.lane.b32.xlu0 %v2717, 104
    %v2764 = vpop.permute.xlu0 %2763
    %2765 = vrot.lane.b32.xlu0 %v2718, 104
    %v2766 = vpop.permute.xlu0 %2765
    %v2783 = vsel %vm249, %v2736, 0.0
    %2784 = vadd.xlane.f32.xlu0 %v2783
    %v2785 = vpop.xlane.xlu0 %2784
    %v2786 = vsel %vm249, %v2738, 0.0
    %2787 = vadd.xlane.f32.xlu0 %v2786
    %v2788 = vpop.xlane.xlu0 %2787
    %v2789 = vsel %vm249, %v2740, 0.0
    %2790 = vadd.xlane.f32.xlu0 %v2789
    %v2791 = vpop.xlane.xlu0 %2790
    %v2792 = vsel %vm249, %v2742, 0.0
    %2793 = vadd.xlane.f32.xlu0 %v2792
    %v2794 = vpop.xlane.xlu0 %2793
    %v2795 = vsel %vm249, %v2744, 0.0
    %2796 = vadd.xlane.f32.xlu0 %v2795
    %v2797 = vpop.xlane.xlu0 %2796
    %v2798 = vsel %vm249, %v2746, 0.0
    %2799 = vadd.xlane.f32.xlu0 %v2798
    %v2800 = vpop.xlane.xlu0 %2799
    %v2801 = vsel %vm249, %v2748, 0.0
    %2802 = vadd.xlane.f32.xlu0 %v2801
    %v2803 = vpop.xlane.xlu0 %2802
    %v2804 = vsel %vm249, %v2750, 0.0
    %2805 = vadd.xlane.f32.xlu0 %v2804
    %v2806 = vpop.xlane.xlu0 %2805
    %v2807 = vsel %vm249, %v2752, 0.0
    %2808 = vadd.xlane.f32.xlu0 %v2807
    %v2809 = vpop.xlane.xlu0 %2808
    %v2810 = vsel %vm249, %v2754, 0.0
    %2811 = vadd.xlane.f32.xlu0 %v2810
    %v2812 = vpop.xlane.xlu0 %2811
    %v2813 = vsel %vm249, %v2756, 0.0
    %2814 = vadd.xlane.f32.xlu0 %v2813
    %v2815 = vpop.xlane.xlu0 %2814
    %v2816 = vsel %vm249, %v2758, 0.0
    %2817 = vadd.xlane.f32.xlu0 %v2816
    %v2818 = vpop.xlane.xlu0 %2817
    %v2819 = vsel %vm249, %v2760, 0.0
    %2820 = vadd.xlane.f32.xlu0 %v2819
    %v2821 = vpop.xlane.xlu0 %2820
    %v2822 = vsel %vm249, %v2762, 0.0
    %2823 = vadd.xlane.f32.xlu0 %v2822
    %v2824 = vpop.xlane.xlu0 %2823
    %v2825 = vsel %vm249, %v2764, 0.0
    %2826 = vadd.xlane.f32.xlu0 %v2825
    %v2827 = vpop.xlane.xlu0 %2826
    %v2828 = vsel %vm249, %v2766, 0.0
    %2829 = vadd.xlane.f32.xlu0 %v2828
    %v2830 = vpop.xlane.xlu0 %2829
    %2831 = vrot.lane.b32.xlu0 %v1800, 104
    %v2832 = vpop.permute.xlu0 %2831
    %2833 = vrot.lane.b32.xlu0 %v1800, 72
    %v2834 = vpop.permute.xlu0 %2833
    %v2843 = vperm.slane %v2785, %v309
    %v2844 = vperm.slane %v2788, %v309
    %v2845 = vperm.slane %v2791, %v309
    %v2846 = vperm.slane %v2794, %v309
    %v2847 = vperm.slane %v2797, %v309
    %v2848 = vperm.slane %v2800, %v309
    %v2849 = vperm.slane %v2803, %v309
    %v2850 = vperm.slane %v2806, %v309
    %v2851 = vsel %vm318, %v2844, %v2843
    %v2852 = vsel %vm320, %v2845, %v2851
    %v2853 = vsel %vm322, %v2846, %v2852
    %v2854 = vsel %vm324, %v2847, %v2853
    %v2855 = vsel %vm326, %v2848, %v2854
    %v2856 = vsel %vm328, %v2849, %v2855
    %v2857 = vsel %vm330, %v2850, %v2856
    %v2859 = vsel %vm249, %v2832, 0
    %v2861 = vsel %vm249, %v2834, 0
    %2863 = vmatpush.xpose.msra.mxu0 0.0
    %2864 = vmatpush.xpose.msra.mxu0 0.0
    %2865 = vmatpush.xpose.msra.mxu0 0.0
    %2866 = vmatpush.xpose.msra.mxu0 0.0
    %2867 = vmatpush.xpose.msra.mxu0 0.0
    %2868 = vmatpush.xpose.msra.mxu0 0.0
    %2869 = vmatpush.xpose.msra.mxu0 0.0
    %2870 = vmatpush.xpose.msra.mxu0 0.0
    %2871 = vmatpush.xpose.msra.mxu0 0.0
    %2872 = vmatpush.xpose.msra.mxu0 0.0
    %2873 = vmatpush.xpose.msra.mxu0 0.0
    %2874 = vmatpush.xpose.msra.mxu0 0.0
    %2875 = vmatpush.xpose.msra.mxu0 0.0
    %2876 = vmatpush.xpose.msra.mxu0 0.0
    %2877 = vmatpush.xpose.msra.mxu0 0.0
    %2878 = vmatpush.xpose.msra.mxu0 %v2861
    %2879 = vmatmul.f32.gmra.mxu0 %v2859
    %v2880 = vpop.f32.mrf.mxu0
    %v2881 = vadd.f32 %v2857, %v2880
    %2882 = vdwg.mxu0
    %2883 = vrot.lane.b32.xlu0 %v1803, 104
    %v2884 = vpop.permute.xlu0 %2883
    %2885 = vrot.lane.b32.xlu0 %v1803, 72
    %v2886 = vpop.permute.xlu0 %2885
    %v2895 = vperm.slane %v2809, %v309
    %v2896 = vperm.slane %v2812, %v309
    %v2897 = vperm.slane %v2815, %v309
    %v2898 = vperm.slane %v2818, %v309
    %v2899 = vperm.slane %v2821, %v309
    %v2900 = vperm.slane %v2824, %v309
    %v2901 = vperm.slane %v2827, %v309
    %v2902 = vperm.slane %v2830, %v309
    %v2903 = vsel %vm318, %v2896, %v2895
    %v2904 = vsel %vm320, %v2897, %v2903
    %v2905 = vsel %vm322, %v2898, %v2904
    %v2906 = vsel %vm324, %v2899, %v2905
    %v2907 = vsel %vm326, %v2900, %v2906
    %v2908 = vsel %vm328, %v2901, %v2907
    %v2909 = vsel %vm330, %v2902, %v2908
    %v2911 = vsel %vm249, %v2884, 0
    %v2913 = vsel %vm249, %v2886, 0
    %2915 = vmatpush.xpose.msra.mxu0 0.0
    %2916 = vmatpush.xpose.msra.mxu0 0.0
    %2917 = vmatpush.xpose.msra.mxu0 0.0
    %2918 = vmatpush.xpose.msra.mxu0 0.0
    %2919 = vmatpush.xpose.msra.mxu0 0.0
    %2920 = vmatpush.xpose.msra.mxu0 0.0
    %2921 = vmatpush.xpose.msra.mxu0 0.0
    %2922 = vmatpush.xpose.msra.mxu0 0.0
    %2923 = vmatpush.xpose.msra.mxu0 0.0
    %2924 = vmatpush.xpose.msra.mxu0 0.0
    %2925 = vmatpush.xpose.msra.mxu0 0.0
    %2926 = vmatpush.xpose.msra.mxu0 0.0
    %2927 = vmatpush.xpose.msra.mxu0 0.0
    %2928 = vmatpush.xpose.msra.mxu0 0.0
    %2929 = vmatpush.xpose.msra.mxu0 0.0
    %2930 = vmatpush.xpose.msra.mxu0 %v2913
    %2931 = vmatmul.f32.gmra.mxu0 %v2911
    %v2932 = vpop.f32.mrf.mxu0
    %v2933 = vadd.f32 %v2909, %v2932
    %2934 = vdwg.mxu0
    %v2935 = vsel %vm249, %v2881, -inf
    %2936 = vmax.xlane.f32.xlu0 %v2935
    %v2937 = vpop.xlane.xlu0 %2936
    %v2938 = vsel %vm249, %v2933, -inf
    %2939 = vmax.xlane.f32.xlu0 %v2938
    %v2940 = vpop.xlane.xlu0 %2939
    %v2941 = vsub.f32 %v2881, %v2937
    %v2942 = vsub.f32 %v2933, %v2940
    %v2943 = vmul.f32 %v2941, 1.442695
    %v2944 = vpow.pop %v2943
    %v2945 = vmul.f32 %v2942, 1.442695
    %v2946 = vpow.pop %v2945
    %v2947 = vsel %vm249, %v2944, 0.0
    %2948 = vadd.xlane.f32.xlu0 %v2947
    %v2949 = vpop.xlane.xlu0 %2948
    %v2950 = vsel %vm249, %v2946, 0.0
    %2951 = vadd.xlane.f32.xlu0 %v2950
    %v2952 = vpop.xlane.xlu0 %2951
    %v2953 = vrcp.pop %v2949
    %v2954 = vrcp.pop %v2952
    %v2955 = vmul.f32 %v2944, %v2953
    %v2956 = vmul.f32 %v2946, %v2954
    %2957 = vrot.lane.b32.xlu0 %v1800, 40
    %v2958 = vpop.permute.xlu0 %2957
    %v2961 = vsel %vm249, %v2955, 0
    %2963 = vmatpush.msra.mxu0 0.0
    %2964 = vmatpush.msra.mxu0 0.0
    %2965 = vmatpush.msra.mxu0 0.0
    %2966 = vmatpush.msra.mxu0 0.0
    %2967 = vmatpush.msra.mxu0 0.0
    %2968 = vmatpush.msra.mxu0 0.0
    %2969 = vmatpush.msra.mxu0 0.0
    %2970 = vmatpush.msra.mxu0 0.0
    %2971 = vmatpush.msra.mxu0 0.0
    %2972 = vmatpush.msra.mxu0 0.0
    %2973 = vmatpush.msra.mxu0 0.0
    %2974 = vmatpush.msra.mxu0 0.0
    %2975 = vmatpush.msra.mxu0 0.0
    %2976 = vmatpush.msra.mxu0 0.0
    %2977 = vmatpush.msra.mxu0 0.0
    %2978 = vmatpush.msra.mxu0 %v2958
    %2979 = vmatmul.f32.gmra.mxu0 %v2961
    %v2980 = vpop.f32.mrf.mxu0
    %v2981 = vadd.f32 0.0, %v2980
    %2982 = vdwg.mxu0
    %2983 = vrot.lane.b32.xlu0 %v1803, 40
    %v2984 = vpop.permute.xlu0 %2983
    %v2987 = vsel %vm249, %v2956, 0
    %2989 = vmatpush.msra.mxu0 0.0
    %2990 = vmatpush.msra.mxu0 0.0
    %2991 = vmatpush.msra.mxu0 0.0
    %2992 = vmatpush.msra.mxu0 0.0
    %2993 = vmatpush.msra.mxu0 0.0
    %2994 = vmatpush.msra.mxu0 0.0
    %2995 = vmatpush.msra.mxu0 0.0
    %2996 = vmatpush.msra.mxu0 0.0
    %2997 = vmatpush.msra.mxu0 0.0
    %2998 = vmatpush.msra.mxu0 0.0
    %2999 = vmatpush.msra.mxu0 0.0
    %3000 = vmatpush.msra.mxu0 0.0
    %3001 = vmatpush.msra.mxu0 0.0
    %3002 = vmatpush.msra.mxu0 0.0
    %3003 = vmatpush.msra.mxu0 0.0
    %3004 = vmatpush.msra.mxu0 %v2984
    %3005 = vmatmul.f32.gmra.mxu0 %v2987
    %v3006 = vpop.f32.mrf.mxu0
    %v3007 = vadd.f32 0.0, %v3006
    %3008 = vdwg.mxu0
    %3011 = vrot.lane.b32.xlu0 %v2369, 8
    %v3012 = vpop.permute.xlu0 %3011
    %3013 = vrot.lane.b32.xlu0 %v2395, 8
    %v3014 = vpop.permute.xlu0 %3013
    %3019 = vrot.lane.b32.xlu0 %v2675, 16
    %v3020 = vpop.permute.xlu0 %3019
    %3021 = vrot.lane.b32.xlu0 %v2701, 16
    %v3022 = vpop.permute.xlu0 %3021
    %3027 = vrot.lane.b32.xlu0 %v2981, 24
    %v3028 = vpop.permute.xlu0 %3027
    %3029 = vrot.lane.b32.xlu0 %v3007, 24
    %v3030 = vpop.permute.xlu0 %3029
    %v3033 = vsel %vm249, %v2063, %v3012
    %v3034 = vsel %vm249, %v2089, %v3014
    %v3035 = vsel %vm1521, %v3033, %v3020
    %v3036 = vsel %vm1521, %v3034, %v3022
    %v3037 = vsel %vm1524, %v3035, %v3028
    %v3038 = vsel %vm1524, %v3036, %v3030
    %v3040 = vperm.slane %v1754, 0
    %v3043 = vsel %vm155, %v3037, 0
    %v3046 = vsel %vm155, %v3038, 0
    %3048 = vmatpush.msra.mxu0 0.0
    %3049 = vmatpush.msra.mxu0 0.0
    %3050 = vmatpush.msra.mxu0 0.0
    %3051 = vmatpush.msra.mxu0 0.0
    %3052 = vmatpush.msra.mxu0 0.0
    %3053 = vmatpush.msra.mxu0 0.0
    %3054 = vmatpush.msra.mxu0 0.0
    %3055 = vmatpush.msra.mxu0 0.0
    %3056 = vmatpush.msra.mxu0 0.0
    %3057 = vmatpush.msra.mxu0 0.0
    %3058 = vmatpush.msra.mxu0 0.0
    %3059 = vmatpush.msra.mxu0 0.0
    %3060 = vmatpush.msra.mxu0 %v1753
    %3061 = vmatpush.msra.mxu0 %v1752
    %3062 = vmatpush.msra.mxu0 %v1751
    %3063 = vmatpush.msra.mxu0 %v1750
    %3064 = vmatmul.f32.gmra.mxu0 %v3043
    %v3065 = vpop.f32.mrf.mxu0
    %v3066 = vadd.f32 %v3040, %v3065
    %3067 = vmatmul.f32.gmra.mxu0 %v3046
    %v3068 = vpop.f32.mrf.mxu0
    %v3069 = vadd.f32 %v3040, %v3068
    %3070 = vdwg.mxu0
    %v3071 = vadd.f32 %v3066, %v1743
    %v3072 = vadd.f32 %v3069, %v1744
    %v3073 = vsel %vm155, %v3071, 0.0
    %3074 = vadd.xlane.f32.xlu0 %v3073
    %v3075 = vpop.xlane.xlu0 %3074
    %v3076 = vsel %vm155, %v3072, 0.0
    %3077 = vadd.xlane.f32.xlu0 %v3076
    %v3078 = vpop.xlane.xlu0 %3077
    %v3079 = vmul.f32 %v3075, %v1573
    %v3080 = vmul.f32 %v3078, %v1573
    %v3081 = vsub.f32 %v3071, %v3079
    %v3082 = vsub.f32 %v3072, %v3080
    %v3083 = vmul.f32 %v3081, %v3081
    %v3084 = vmul.f32 %v3082, %v3082
    %v3085 = vsel %vm155, %v3083, 0.0
    %3086 = vadd.xlane.f32.xlu0 %v3085
    %v3087 = vpop.xlane.xlu0 %3086
    %v3088 = vsel %vm155, %v3084, 0.0
    %3089 = vadd.xlane.f32.xlu0 %v3088
    %v3090 = vpop.xlane.xlu0 %3089
    %v3091 = vmul.f32 %v3087, %v1573
    %v3092 = vmul.f32 %v3090, %v1573
    %v3093 = vadd.f32 %v3091, 1e-05
    %v3094 = vadd.f32 %v3092, 1e-05
    %v3095 = vrsqrt.pop %v3093
    %v3096 = vmul.f32 %v3095, %v3093
    %v3097 = vmul.f32 %v3096, %v3095
    %v3098 = vmul.f32 0.5, %v3097
    %v3099 = vsub.f32 1.5, %v3098
    %v3100 = vmul.f32 %v3095, %v3099
    %vm3101 = vweird.f32 %v3093
    %vm3102 = vweird.f32 %v3095
    %vm3103 = vmor %vm3101, %vm3102
    %v3104 = vsel %vm3103, %v3095, %v3100
    %v3105 = vrsqrt.pop %v3094
    %v3106 = vmul.f32 %v3105, %v3094
    %v3107 = vmul.f32 %v3106, %v3105
    %v3108 = vmul.f32 0.5, %v3107
    %v3109 = vsub.f32 1.5, %v3108
    %v3110 = vmul.f32 %v3105, %v3109
    %vm3111 = vweird.f32 %v3094
    %vm3112 = vweird.f32 %v3105
    %vm3113 = vmor %vm3111, %vm3112
    %v3114 = vsel %vm3113, %v3105, %v3110
    %v3115 = vmul.f32 %v3081, %v3104
    %v3116 = vmul.f32 %v3082, %v3114
    %v3118 = vperm.slane %v1755, 0
    %v3120 = vmul.f32 %v3115, %v3118
    %v3121 = vmul.f32 %v3116, %v3118
    %v3123 = vperm.slane %v1756, 0
    %v3125 = vadd.f32 %v3120, %v3123
    %v3126 = vadd.f32 %v3121, %v3123
    %v3128 = vperm.slane %v1761, 0
    %v3131 = vsel %vm155, %v3125, 0
    %v3134 = vsel %vm155, %v3126, 0
    %3136 = vmatpush.msra.mxu0 0.0
    %3137 = vmatpush.msra.mxu0 0.0
    %3138 = vmatpush.msra.mxu0 0.0
    %3139 = vmatpush.msra.mxu0 0.0
    %3140 = vmatpush.msra.mxu0 0.0
    %3141 = vmatpush.msra.mxu0 0.0
    %3142 = vmatpush.msra.mxu0 0.0
    %3143 = vmatpush.msra.mxu0 0.0
    %3144 = vmatpush.msra.mxu0 0.0
    %3145 = vmatpush.msra.mxu0 0.0
    %3146 = vmatpush.msra.mxu0 0.0
    %3147 = vmatpush.msra.mxu0 0.0
    %3148 = vmatpush.msra.mxu0 %v1760
    %3149 = vmatpush.msra.mxu0 %v1759
    %3150 = vmatpush.msra.mxu0 %v1758
    %3151 = vmatpush.msra.mxu0 %v1757
    %3152 = vmatmul.f32.gmra.mxu0 %v3131
    %v3153 = vpop.f32.mrf.mxu0
    %v3154 = vadd.f32 %v3128, %v3153
    %3155 = vmatmul.f32.gmra.mxu0 %v3134
    %v3156 = vpop.f32.mrf.mxu0
    %v3157 = vadd.f32 %v3128, %v3156
    %3158 = vdwg.mxu0
    %v3159 = vmax.f32 %v3154, 0.0
    %v3160 = vmax.f32 %v3157, 0.0
    %v3162 = vperm.slane %v1770, 0
    %v3165 = vsel %vm1659, %v3159, 0
    %v3168 = vsel %vm1659, %v3160, 0
    %3170 = vmatpush.msra.mxu0 0.0
    %3171 = vmatpush.msra.mxu0 0.0
    %3172 = vmatpush.msra.mxu0 0.0
    %3173 = vmatpush.msra.mxu0 0.0
    %3174 = vmatpush.msra.mxu0 0.0
    %3175 = vmatpush.msra.mxu0 0.0
    %3176 = vmatpush.msra.mxu0 0.0
    %3177 = vmatpush.msra.mxu0 0.0
    %3178 = vmatpush.msra.mxu0 %v1769
    %3179 = vmatpush.msra.mxu0 %v1768
    %3180 = vmatpush.msra.mxu0 %v1767
    %3181 = vmatpush.msra.mxu0 %v1766
    %3182 = vmatpush.msra.mxu0 %v1765
    %3183 = vmatpush.msra.mxu0 %v1764
    %3184 = vmatpush.msra.mxu0 %v1763
    %3185 = vmatpush.msra.mxu0 %v1762
    %3186 = vmatmul.f32.gmra.mxu0 %v3165
    %v3187 = vpop.f32.mrf.mxu0
    %v3188 = vadd.f32 %v3162, %v3187
    %3189 = vmatmul.f32.gmra.mxu0 %v3168
    %v3190 = vpop.f32.mrf.mxu0
    %v3191 = vadd.f32 %v3162, %v3190
    %3192 = vdwg.mxu0
    %v3193 = vadd.f32 %v3188, %v3125
    %v3194 = vadd.f32 %v3191, %v3126
    %v3195 = vsel %vm155, %v3193, 0.0
    %3196 = vadd.xlane.f32.xlu0 %v3195
    %v3197 = vpop.xlane.xlu0 %3196
    %v3198 = vsel %vm155, %v3194, 0.0
    %3199 = vadd.xlane.f32.xlu0 %v3198
    %v3200 = vpop.xlane.xlu0 %3199
    %v3201 = vmul.f32 %v3197, %v1573
    %v3202 = vmul.f32 %v3200, %v1573
    %v3203 = vsub.f32 %v3193, %v3201
    %v3204 = vsub.f32 %v3194, %v3202
    %v3205 = vmul.f32 %v3203, %v3203
    %v3206 = vmul.f32 %v3204, %v3204
    %v3207 = vsel %vm155, %v3205, 0.0
    %3208 = vadd.xlane.f32.xlu0 %v3207
    %v3209 = vpop.xlane.xlu0 %3208
    %v3210 = vsel %vm155, %v3206, 0.0
    %3211 = vadd.xlane.f32.xlu0 %v3210
    %v3212 = vpop.xlane.xlu0 %3211
    %v3213 = vmul.f32 %v3209, %v1573
    %v3214 = vmul.f32 %v3212, %v1573
    %v3215 = vadd.f32 %v3213, 1e-05
    %v3216 = vadd.f32 %v3214, 1e-05
    %v3217 = vrsqrt.pop %v3215
    %v3218 = vmul.f32 %v3217, %v3215
    %v3219 = vmul.f32 %v3218, %v3217
    %v3220 = vmul.f32 0.5, %v3219
    %v3221 = vsub.f32 1.5, %v3220
    %v3222 = vmul.f32 %v3217, %v3221
    %vm3223 = vweird.f32 %v3215
    %vm3224 = vweird.f32 %v3217
    %vm3225 = vmor %vm3223, %vm3224
    %v3226 = vsel %vm3225, %v3217, %v3222
    %v3227 = vrsqrt.pop %v3216
    %v3228 = vmul.f32 %v3227, %v3216
    %v3229 = vmul.f32 %v3228, %v3227
    %v3230 = vmul.f32 0.5, %v3229
    %v3231 = vsub.f32 1.5, %v3230
    %v3232 = vmul.f32 %v3227, %v3231
    %vm3233 = vweird.f32 %v3216
    %vm3234 = vweird.f32 %v3227
    %vm3235 = vmor %vm3233, %vm3234
    %v3236 = vsel %vm3235, %v3227, %v3232
    %v3237 = vmul.f32 %v3203, %v3226
    %v3238 = vmul.f32 %v3204, %v3236
    %v3240 = vperm.slane %v1771, 0
    %v3242 = vmul.f32 %v3237, %v3240
    %v3243 = vmul.f32 %v3238, %v3240
    %v3245 = vperm.slane %v1772, 0
    %v3247 = vadd.f32 %v3242, %v3245
    %v3248 = vadd.f32 %v3243, %v3245
    %v3249 = vld [vmem:[%s26] sm:$0xff]
    %v3250 = vld [vmem:[%s26 + $0x8] sm:$0xff]
    %v3251 = vld [vmem:[%s26 + $0x10] sm:$0xff]
    %v3252 = vld [vmem:[%s26 + $0x18] sm:$0xff]
    %v3253 = vld [vmem:[%s27] sm:$0x1]
    %v3255 = vperm.slane %v3253, 0
    %v3258 = vsel %vm155, %v3247, 0
    %v3261 = vsel %vm155, %v3248, 0
    %3263 = vmatpush.msra.mxu0 0.0
    %3264 = vmatpush.msra.mxu0 0.0
    %3265 = vmatpush.msra.mxu0 0.0
    %3266 = vmatpush.msra.mxu0 0.0
    %3267 = vmatpush.msra.mxu0 0.0
    %3268 = vmatpush.msra.mxu0 0.0
    %3269 = vmatpush.msra.mxu0 0.0
    %3270 = vmatpush.msra.mxu0 0.0
    %3271 = vmatpush.msra.mxu0 0.0
    %3272 = vmatpush.msra.mxu0 0.0
    %3273 = vmatpush.msra.mxu0 0.0
    %3274 = vmatpush.msra.mxu0 0.0
    %3275 = vmatpush.msra.mxu0 %v3252
    %3276 = vmatpush.msra.mxu0 %v3251
    %3277 = vmatpush.msra.mxu0 %v3250
    %3278 = vmatpush.msra.mxu0 %v3249
    %3279 = vmatmul.f32.gmra.mxu0 %v3258
    %v3280 = vpop.f32.mrf.mxu0
    %v3281 = vadd.f32 %v3255, %v3280
    %3282 = vmatmul.f32.gmra.mxu0 %v3261
    %v3283 = vpop.f32.mrf.mxu0
    %v3284 = vadd.f32 %v3255, %v3283
    %3285 = vdwg.mxu0
    %3286 = vst.msk [vmem:[#allocation2] sm:$0xff] %vm1659, %v3281
    %3287 = vst.msk [vmem:[#allocation2 + $0x8] sm:$0xff] %vm1659, %v3284
    // Predicated region
    $region114: #{transformer_xl_forward.1} parent=1 // pred_check
      _
    $region115: #{transformer_xl_forward.1} parent=1 // pred_check_branch
      %3289 = sbr.rel (0) target = $region117
    $region116: #{transformer_xl_forward.1} parent=1 // pred_region
      %3291 = vsyncadd [#allocation3], 0
      %s3292 = sshll.u32 [#allocation2], 4
      %s3293 = int_to_ptr.vmem [resolvable:$true] %s3292
      %s3294 = sshll.u32 %s28, 4
      %s3295 = int_to_ptr.hbm [resolvable:$true] %s3294
      %3300 = dma.vmem_to_hbm [thread:$0]  %s3293, 256, %s3295, [#allocation3], 128, 128, 8
    $region117: #{transformer_xl_forward.1} parent=1 // pred_fallthru
      _
    // Predicated region
    $region118: #{transformer_xl_forward.1} parent=1 // pred_check
      _
    $region119: #{transformer_xl_forward.1} parent=1 // pred_check_branch
      %3302 = sbr.rel (0) target = $region121
    $region120: #{transformer_xl_forward.1} parent=1 // pred_region
      %3304 = dma.done [#allocation3], 256
    $region121: #{transformer_xl_forward.1} parent=1 // pred_fallthru
      _
    %3305 = vsyncpa [#allocation3], 1

</llo_original>
